<compile_context>
chip_gen: v7x
topology: tpu7x:2x2x1
jax: 0.10.0
libtpu: 0.0.40
codegen_flags: <defaults>
</compile_context>

<pallas_src>
import jax
import jax.numpy as jnp
from jax.experimental import pallas as pl
from jax.experimental.pallas import tpu as pltpu

IN_FEATURES = 1024          # K
OUT_FEATURES = 600          # N (logical)
N_PAD = 640                 # N padded to a multiple of 128 for the resident weight / MXU


def _round_up(x, m):
    return ((x + m - 1) // m) * m


def _default_block_m():
    """Per-generation row-tile default (amortize ~0.35us/grid-step vs HBM BW)."""
    try:
        kind = jax.devices()[0].device_kind.lower()
    except Exception:
        return 512
    if "v7" in kind:
        return 2048   # 3.2 TB/s HBM: big tiles amortize per-step overhead
    if "v6" in kind:
        return 1024   # measured ~85% -> ~86% of HBM roofline going 512 -> 1024
    return 512        # v5e: MXU-bound; 512 is plenty


def _linear_kernel(x_ref, w_ref, b_ref, o_ref):
    # x_ref: (TM, K) in the caller's dtype (often f32). Cast to the compute dtype
    # (usually bf16) right before the dot: the cast is a cheap VPU op hidden under
    # the MXU, instead of a separate wrapper-side XLA pass over x in HBM.
    x = x_ref[...].astype(w_ref.dtype)
    acc = jnp.dot(x, w_ref[...], preferred_element_type=jnp.float32)   # (TM, N_PAD) f32
    y = acc + b_ref[...]                                               # f32 bias add
    # o_ref is either the exact 600 columns (4 full lane groups + 1 masked store)
    # or the lane-dense padded 640; the slice is a no-op when widths match.
    o_ref[...] = y[:, : o_ref.shape[1]].astype(o_ref.dtype)


def prepare_params(weight, bias, compute_dtype=jnp.bfloat16):
    """One-time parameter prep (do NOT call per forward step).

    weight: (OUT_FEATURES, IN_FEATURES)  -- PyTorch nn.Linear layout
    bias:   (OUT_FEATURES,)
    Returns (w_kn, b2d): weight transposed/zero-padded to (K, N_PAD) in the compute
    dtype (default bf16 -> MXU fast path), bias as (1, N_PAD) float32 (added to the
    f32 accumulator in-kernel). Pass compute_dtype=None to keep full f32 compute.
    """
    assert weight.shape == (OUT_FEATURES, IN_FEATURES)
    w_kn = jnp.pad(weight.T, ((0, 0), (0, N_PAD - OUT_FEATURES)))
    if compute_dtype is not None:
        w_kn = w_kn.astype(compute_dtype)
    b2d = jnp.pad(bias.astype(jnp.float32), (0, N_PAD - OUT_FEATURES)).reshape(1, N_PAD)
    return w_kn, b2d


# Flipped to False on first failure if this Pallas build rejects Buffered(1) specs.
_SINGLE_BUFFER_RESIDENT_OK = True


def _build_and_run(x2d, w_kn, b2d, *, tm, n_out, out_dtype, single_buffer_resident):
    m_pad = x2d.shape[0]

    resident_kwargs = {}
    if single_buffer_resident:
        # Constant index_map -> weight/bias are VMEM-resident; a second (double)
        # buffer would be pure waste, so request a single buffer.
        resident_kwargs = dict(pipeline_mode=pl.Buffered(1))

    in_specs = [
        pl.BlockSpec((tm, IN_FEATURES), lambda i: (i, 0)),                         # x tile (pipelined)
        pl.BlockSpec((IN_FEATURES, N_PAD), lambda i: (0, 0), **resident_kwargs),   # W resident
        pl.BlockSpec((1, N_PAD), lambda i: (0, 0), **resident_kwargs),             # bias resident
    ]
    out_specs = pl.BlockSpec((tm, n_out), lambda i: (i, 0))

    cost = pl.CostEstimate(
        flops=2 * m_pad * IN_FEATURES * N_PAD,
        transcendentals=0,
        bytes_accessed=(
            x2d.size * x2d.dtype.itemsize
            + w_kn.size * w_kn.dtype.itemsize
            + b2d.size * b2d.dtype.itemsize
            + m_pad * n_out * jnp.dtype(out_dtype).itemsize
        ),
    )

    return pl.pallas_call(
        _linear_kernel,
        out_shape=jax.ShapeDtypeStruct((m_pad, n_out), out_dtype),
        grid_spec=pltpu.PrefetchScalarGridSpec(
            num_scalar_prefetch=0,
            grid=(m_pad // tm,),
            in_specs=in_specs,
            out_specs=out_specs,
        ),
        compiler_params=pltpu.CompilerParams(
            # Independent row tiles -> shard across the 2 TCs on v7x; neutral elsewhere.
            dimension_semantics=("parallel",),
            vmem_limit_bytes=48 * 1024 * 1024,   # explicit budget; fits v7x's 64 MiB VMEM
        ),
        cost_estimate=cost,
    )(x2d, w_kn, b2d)


def linear_pallas(x, w_kn, b2d, *, block_m=None, out_dtype=None, pad_output=False):
    """y = x @ W.T + b over the last dim of x, using params from prepare_params().

    pad_output=True returns the (..., N_PAD) lane-dense output (columns 600..639
    are exactly zero) so a downstream consumer can fuse/slice lazily instead of
    this wrapper materializing a slice copy.
    """
    global _SINGLE_BUFFER_RESIDENT_OK

    orig_shape = x.shape
    assert orig_shape[-1] == IN_FEATURES
    assert w_kn.shape == (IN_FEATURES, N_PAD)

    m = 1
    for d in orig_shape[:-1]:
        m *= d
    x2d = x.reshape(m, IN_FEATURES)
    # NOTE: no wrapper-side dtype cast of x; the kernel casts to w_kn.dtype in-VMEM.

    if block_m is None:
        block_m = _default_block_m()
    if out_dtype is None:
        out_dtype = x.dtype

    # Balanced row tiles: avoid an almost-all-padding tail tile; for large m keep
    # >= 4 tiles (of >= ~256 rows) so each of (up to) 2 TensorCores gets >= 2
    # pipelined grid steps. bf16 compute aligns rows to the (16,128) packed tile.
    row_align = max(8, 32 // jnp.dtype(w_kn.dtype).itemsize)
    n_tiles = pl.cdiv(m, block_m)
    n_tiles = max(n_tiles, min(4, pl.cdiv(m, 256)))
    tm = _round_up(pl.cdiv(m, n_tiles), row_align)
    grid = pl.cdiv(m, tm)
    m_pad = grid * tm
    if m_pad != m:
        x2d = jnp.pad(x2d, ((0, m_pad - m), (0, 0)))

    n_out = N_PAD if pad_output else OUT_FEATURES

    try_single = _SINGLE_BUFFER_RESIDENT_OK
    try:
        out = _build_and_run(x2d, w_kn, b2d, tm=tm, n_out=n_out,
                             out_dtype=out_dtype,
                             single_buffer_resident=try_single)
    except Exception:
        if not try_single:
            raise
        # This Pallas build rejected single-buffered resident specs; fall back to
        # default double buffering (costs ~1.3 MB extra VMEM for the weight copy).
        _SINGLE_BUFFER_RESIDENT_OK = False
        out = _build_and_run(x2d, w_kn, b2d, tm=tm, n_out=n_out,
                             out_dtype=out_dtype,
                             single_buffer_resident=False)

    if m_pad != m:
        out = out[:m]
    return out.reshape(*orig_shape[:-1], n_out)


def init_params(key):
    """Deterministic init mimicking nn.Linear's default (uniform +- 1/sqrt(fan_in))."""
    k_w, k_b = jax.random.split(key)
    bound = 1.0 / jnp.sqrt(jnp.float32(IN_FEATURES))
    weight = jax.random.uniform(
        k_w, (OUT_FEATURES, IN_FEATURES), dtype=jnp.float32, minval=-bound, maxval=bound
    )
    bias = jax.random.uniform(
        k_b, (OUT_FEATURES,), dtype=jnp.float32, minval=-bound, maxval=bound
    )
    return weight, bias


if __name__ == "__main__":
    key = jax.random.PRNGKey(0)
    k_x, k_p = jax.random.split(key)

    batch, seq = 2, 8
    x = jax.random.normal(k_x, (batch, seq, IN_FEATURES), dtype=jnp.float32)
    weight, bias = init_params(k_p)

    y_ref = x @ weight.T + bias                      # fp32 reference (PyTorch semantics)
    ref_scale = float(jnp.max(jnp.abs(y_ref))) + 1e-6

    # --- default fast path: bf16 MXU inputs, f32 accumulation --------------------
    w_bf16, b2d = prepare_params(weight, bias)       # compute_dtype=bf16 (default)
    y = jax.block_until_ready(linear_pallas(x, w_bf16, b2d))
    assert y.shape == (batch, seq, OUT_FEATURES), y.shape
    max_err = float(jnp.max(jnp.abs(y - y_ref)))
    assert max_err <= 5e-2 * ref_scale, max_err      # bf16-compute tolerance

    # padded-output path (lane-dense 640-wide slab for downstream fusion)
    y_pad = jax.block_until_ready(linear_pallas(x, w_bf16, b2d, pad_output=True))
    assert y_pad.shape == (batch, seq, N_PAD), y_pad.shape
    assert float(jnp.max(jnp.abs(y_pad[..., :OUT_FEATURES] - y))) == 0.0
    assert float(jnp.max(jnp.abs(y_pad[..., OUT_FEATURES:]))) == 0.0

    # --- exact fp32 path matches the PyTorch module's fp32 forward ---------------
    w_f32, b2d_f32 = prepare_params(weight, bias, compute_dtype=None)
    y32 = jax.block_until_ready(linear_pallas(x, w_f32, b2d_f32))
    assert y32.shape == (batch, seq, OUT_FEATURES), y32.shape
    assert jnp.allclose(y32, y_ref, atol=1e-4, rtol=1e-4), float(jnp.max(jnp.abs(y32 - y_ref)))

    print("KERNEL_OK")
</pallas_src>

<mosaic_0001>
module attributes {stable_mosaic.version = 11 : i64} {
  func.func @_linear_kernel(%arg0: i32, %arg1: memref<16x1024xf32, #tpu.memory_space<vmem>>, %arg2: memref<1024x640xbf16, #tpu.memory_space<vmem>>, %arg3: memref<1x640xf32, #tpu.memory_space<vmem>>, %arg4: memref<16x600xf32, #tpu.memory_space<vmem>>) attributes {dimension_semantics = [#tpu.dimension_semantics<parallel>], iteration_bounds = array<i64: 1>, scalar_prefetch = 0 : i64, scratch_operands = 0 : i64, tpu.core_type = #tpu.core_type<tc>, window_params = [{transform_indices = @transform_0, window_bounds = array<i64: 16, 1024>}, {pipeline_mode = #tpu.pipeline_mode<synchronous>, transform_indices = @transform_1, window_bounds = array<i64: 1024, 640>}, {pipeline_mode = #tpu.pipeline_mode<synchronous>, transform_indices = @transform_2, window_bounds = array<i64: 1, 640>}, {transform_indices = @transform_3, window_bounds = array<i64: 16, 600>}]} {
    %c0 = arith.constant 0 : index
    %c0_0 = arith.constant 0 : index
    %0 = vector.load %arg1[%c0, %c0_0] : memref<16x1024xf32, #tpu.memory_space<vmem>>, vector<16x1024xf32>
    %1 = arith.truncf %0 : vector<16x1024xf32> to vector<16x1024xbf16>
    %c0_1 = arith.constant 0 : index
    %c0_2 = arith.constant 0 : index
    %2 = vector.load %arg2[%c0_1, %c0_2] : memref<1024x640xbf16, #tpu.memory_space<vmem>>, vector<1024x640xbf16>
    %cst = arith.constant dense<0.000000e+00> : vector<16x640xf32>
    %3 = tpu.matmul %1, %2, %cst {dimension_numbers = #tpu.dot_dimension_numbers<[1], [0], [0], [1], [0, 0, 1, 1], [], []>} : vector<16x1024xbf16>, vector<1024x640xbf16>, vector<16x640xf32> -> vector<16x640xf32>
    %c0_3 = arith.constant 0 : index
    %c0_4 = arith.constant 0 : index
    %4 = vector.load %arg3[%c0_3, %c0_4] : memref<1x640xf32, #tpu.memory_space<vmem>>, vector<1x640xf32>
    %5 = vector.broadcast %4 : vector<1x640xf32> to vector<16x640xf32>
    %6 = arith.addf %3, %5 : vector<16x640xf32>
    %7 = vector.extract_strided_slice %6 {offsets = [0, 0], sizes = [16, 600], strides = [1, 1]} : vector<16x640xf32> to vector<16x600xf32>
    %c0_5 = arith.constant 0 : index
    %c0_6 = arith.constant 0 : index
    %8 = vector.load %arg4[%c0_5, %c0_6] : memref<16x600xf32, #tpu.memory_space<vmem>>, vector<16x600xf32>
    tpu.vector_store %arg4[%c0_5, %c0_6], %7 {strides = array<i32>} : memref<16x600xf32, #tpu.memory_space<vmem>>, vector<16x600xf32>,
    return
  }
  func.func @transform_0(%arg0: i32) -> (i32, i32) {
    %c0_i32 = arith.constant 0 : i32
    %c0_i32_0 = arith.constant 0 : i32
    return %arg0, %c0_i32 : i32, i32
  }
  func.func @transform_1(%arg0: i32) -> (i32, i32) {
    %c0_i32 = arith.constant 0 : i32
    %c0_i32_0 = arith.constant 0 : i32
    %c0_i32_1 = arith.constant 0 : i32
    return %c0_i32, %c0_i32_0 : i32, i32
  }
  func.func @transform_2(%arg0: i32) -> (i32, i32) {
    %c0_i32 = arith.constant 0 : i32
    %c0_i32_0 = arith.constant 0 : i32
    %c0_i32_1 = arith.constant 0 : i32
    return %c0_i32, %c0_i32_0 : i32, i32
  }
  func.func @transform_3(%arg0: i32) -> (i32, i32) {
    %c0_i32 = arith.constant 0 : i32
    %c0_i32_0 = arith.constant 0 : i32
    return %arg0, %c0_i32 : i32, i32
  }
}

module attributes {stable_mosaic.version = 11 : i64} {
  func.func @_linear_kernel(%arg0: i32, %arg1: memref<16x1024xf32, #tpu.memory_space<vmem>>, %arg2: memref<1024x640xbf16, #tpu.memory_space<vmem>>, %arg3: memref<1x640xf32, #tpu.memory_space<vmem>>, %arg4: memref<16x600xf32, #tpu.memory_space<vmem>>) attributes {dimension_semantics = [#tpu.dimension_semantics<parallel>], iteration_bounds = array<i64: 1>, scalar_prefetch = 0 : i64, scratch_operands = 0 : i64, tpu.core_type = #tpu.core_type<tc>, window_params = [{transform_indices = @transform_0, window_bounds = array<i64: 16, 1024>}, {pipeline_mode = #tpu.pipeline_mode<synchronous>, transform_indices = @transform_1, window_bounds = array<i64: 1024, 640>}, {pipeline_mode = #tpu.pipeline_mode<synchronous>, transform_indices = @transform_2, window_bounds = array<i64: 1, 640>}, {transform_indices = @transform_3, window_bounds = array<i64: 16, 600>}]} {
    %c0 = arith.constant 0 : index
    %c0_0 = arith.constant 0 : index
    %0 = vector.load %arg1[%c0, %c0_0] : memref<16x1024xf32, #tpu.memory_space<vmem>>, vector<16x1024xf32>
    %1 = arith.truncf %0 : vector<16x1024xf32> to vector<16x1024xbf16>
    %c0_1 = arith.constant 0 : index
    %c0_2 = arith.constant 0 : index
    %2 = vector.load %arg2[%c0_1, %c0_2] : memref<1024x640xbf16, #tpu.memory_space<vmem>>, vector<1024x640xbf16>
    %cst = arith.constant dense<0.000000e+00> : vector<16x640xf32>
    %3 = tpu.matmul %1, %2, %cst {dimension_numbers = #tpu.dot_dimension_numbers<[1], [0], [0], [1], [0, 0, 1, 1], [], []>} : vector<16x1024xbf16>, vector<1024x640xbf16>, vector<16x640xf32> -> vector<16x640xf32>
    %c0_3 = arith.constant 0 : index
    %c0_4 = arith.constant 0 : index
    %4 = vector.load %arg3[%c0_3, %c0_4] : memref<1x640xf32, #tpu.memory_space<vmem>>, vector<1x640xf32>
    %5 = vector.broadcast %4 : vector<1x640xf32> to vector<16x640xf32>
    %6 = arith.addf %3, %5 : vector<16x640xf32>
    %7 = vector.extract_strided_slice %6 {offsets = [0, 0], sizes = [16, 600], strides = [1, 1]} : vector<16x640xf32> to vector<16x600xf32>
    %c0_5 = arith.constant 0 : index
    %c0_6 = arith.constant 0 : index
    %8 = vector.load %arg4[%c0_5, %c0_6] : memref<16x600xf32, #tpu.memory_space<vmem>>, vector<16x600xf32>
    tpu.vector_store %arg4[%c0_5, %c0_6], %7 {strides = array<i32>} : memref<16x600xf32, #tpu.memory_space<vmem>>, vector<16x600xf32>,
    return
  }
  func.func @transform_0(%arg0: i32) -> (i32, i32) {
    %c0_i32 = arith.constant 0 : i32
    %c0_i32_0 = arith.constant 0 : i32
    return %arg0, %c0_i32 : i32, i32
  }
  func.func @transform_1(%arg0: i32) -> (i32, i32) {
    %c0_i32 = arith.constant 0 : i32
    %c0_i32_0 = arith.constant 0 : i32
    %c0_i32_1 = arith.constant 0 : i32
    return %c0_i32, %c0_i32_0 : i32, i32
  }
  func.func @transform_2(%arg0: i32) -> (i32, i32) {
    %c0_i32 = arith.constant 0 : i32
    %c0_i32_0 = arith.constant 0 : i32
    %c0_i32_1 = arith.constant 0 : i32
    return %c0_i32, %c0_i32_0 : i32, i32
  }
  func.func @transform_3(%arg0: i32) -> (i32, i32) {
    %c0_i32 = arith.constant 0 : i32
    %c0_i32_0 = arith.constant 0 : i32
    return %arg0, %c0_i32 : i32, i32
  }
}

</mosaic_0001>

<llo_original>
// kernel: tpu_custom_call.1
$region0: #{tpu_custom_call.1}
  #allocation0 [shape = 'u32[]', space=smem, size = 0x4, offset = 0x4, fixed_abs, tag = 'smem constant byte address 0x4 - core index']
  #allocation1 [shape = 'u32[144,128]{1,0:T(1,128)}', space=vmem, size = 0x12000, scoped, tag = 'internal scratch']
  %s0 = inlined_call_operand.hbm [shape: f32[16,1024], index: 0, kind: input, shape index: {}]
  %s1 = inlined_call_operand.hbm [shape: bf16[1024,640], index: 1, kind: input, shape index: {}]
  %s2 = inlined_call_operand.hbm [shape: f32[1,640], index: 2, kind: input, shape index: {}]
  %s3 = inlined_call_operand.hbm [shape: f32[16,600], index: 3, kind: output, shape index: {}]
  %s4 = sld [smem:[#allocation0]]
  $region34: #{tpu_custom_call.1} parent=0
    _
  %s6 = ssub.s32 1, %s4
  %s7 = scalar_select 0, %s6, %s4
  $region1: #{tpu_custom_call.1} parent=0
    #allocation2 [shape = 'u8[65536]{0}', space=vmem, size = 0x10000, scoped, tag = 'input window, operand 0, single buffered']
    #allocation3 [shape = 's32[1]{0}', space=sflag, size = 0x4, scoped, tag = 'scoped memory for tpu_custom_call.1']
    #allocation4 [shape = 's32[1]{0}', space=sflag, size = 0x4, scoped, tag = 'scoped memory for tpu_custom_call.1']
    #allocation5 [shape = 'u8[1310720]{0}', space=vmem, size = 0x140000, scoped, tag = 'input window, operand 1, single buffered']
    #allocation6 [shape = 's32[1]{0}', space=sflag, size = 0x4, scoped, tag = 'scoped memory for tpu_custom_call.1']
    #allocation7 [shape = 'u8[2560]{0}', space=vmem, size = 0xc00, scoped, tag = 'input window, operand 2, single buffered']
    #allocation8 [shape = 'u8[40960]{0}', space=vmem, size = 0xa000, scoped, tag = 'output window, operand 0, single buffered']
    %8 = vsyncpa [#allocation3], 0
    %9 = vsyncpa [#allocation6], 0
    %10 = vsyncpa [#allocation4], 0
    // Predicated region
    $region2: #{tpu_custom_call.1} parent=1 // pred_check
      _
    $region3: #{tpu_custom_call.1} parent=1 // pred_check_branch
      %12 = sbr.rel (0) target = $region5
    $region4: #{tpu_custom_call.1} parent=1 // pred_region
      %s14 = ssub.s32 2048, 2048
      %15 = vsyncadd [#allocation3], %s14
      %s16 = sshll.u32 [#allocation2], 4
      %s17 = int_to_ptr.vmem [resolvable:$true] %s16
      %22 = dma.hbm_to_vmem [thread:$0]  %s0, 2048, %s17, [#allocation3], 1024, 1024, 64
    $region5: #{tpu_custom_call.1} parent=1 // pred_fallthru
      _
    // Predicated region
    $region6: #{tpu_custom_call.1} parent=1 // pred_check
      _
    $region7: #{tpu_custom_call.1} parent=1 // pred_check_branch
      %24 = sbr.rel (0) target = $region9
    $region8: #{tpu_custom_call.1} parent=1 // pred_region
      %s26 = ssub.s32 40960, 40960
      %27 = vsyncadd [#allocation6], %s26
      %s28 = sshll.u32 [#allocation5], 4
      %s29 = int_to_ptr.vmem [resolvable:$true] %s28
      %34 = dma.hbm_to_vmem [thread:$0]  %s1, 40960, %s29, [#allocation6], 320, 320, 20
    $region9: #{tpu_custom_call.1} parent=1 // pred_fallthru
      _
    // Predicated region
    $region10: #{tpu_custom_call.1} parent=1 // pred_check
      _
    $region11: #{tpu_custom_call.1} parent=1 // pred_check_branch
      %36 = sbr.rel (0) target = $region13
    $region12: #{tpu_custom_call.1} parent=1 // pred_region
      %s38 = ssub.s32 80, 80
      %39 = vsyncadd [#allocation6], %s38
      %s41 = sshll.u32 [#allocation7], 4
      %s42 = int_to_ptr.vmem [resolvable:$true] %s41
      %44 = dma.hbm_to_vmem [thread:$0]  %s2, 80, %s42, [#allocation6]
    $region13: #{tpu_custom_call.1} parent=1 // pred_fallthru
      _
    // Predicated region
    $region14: #{tpu_custom_call.1} parent=1 // pred_check
      _
    $region15: #{tpu_custom_call.1} parent=1 // pred_check_branch
      %46 = sbr.rel (0) target = $region17
    $region16: #{tpu_custom_call.1} parent=1 // pred_region
      %47 = dma.done [#allocation3], 2048
    $region17: #{tpu_custom_call.1} parent=1 // pred_fallthru
      _
    // Predicated region
    $region18: #{tpu_custom_call.1} parent=1 // pred_check
      _
    $region19: #{tpu_custom_call.1} parent=1 // pred_check_branch
      %49 = sbr.rel (0) target = $region21
    $region20: #{tpu_custom_call.1} parent=1 // pred_region
      %50 = dma.done [#allocation6], 40960
    $region21: #{tpu_custom_call.1} parent=1 // pred_fallthru
      _
    // Predicated region
    $region22: #{tpu_custom_call.1} parent=1 // pred_check
      _
    $region23: #{tpu_custom_call.1} parent=1 // pred_check_branch
      %52 = sbr.rel (0) target = $region25
    $region24: #{tpu_custom_call.1} parent=1 // pred_region
      %53 = dma.done [#allocation6], 80
    $region25: #{tpu_custom_call.1} parent=1 // pred_fallthru
      _
    %v55 = vld [vmem:[#allocation2] sm:$0xff]
    %v56 = vld [vmem:[#allocation2 + $0x8] sm:$0xff]
    %v57 = vld [vmem:[#allocation2 + $0x10] sm:$0xff]
    %v58 = vld [vmem:[#allocation2 + $0x18] sm:$0xff]
    %v59 = vld [vmem:[#allocation2 + $0x20] sm:$0xff]
    %v60 = vld [vmem:[#allocation2 + $0x28] sm:$0xff]
    %v61 = vld [vmem:[#allocation2 + $0x30] sm:$0xff]
    %v62 = vld [vmem:[#allocation2 + $0x38] sm:$0xff]
    %v63 = vld [vmem:[#allocation2 + $0x40] sm:$0xff]
    %v64 = vld [vmem:[#allocation2 + $0x48] sm:$0xff]
    %v65 = vld [vmem:[#allocation2 + $0x50] sm:$0xff]
    %v66 = vld [vmem:[#allocation2 + $0x58] sm:$0xff]
    %v67 = vld [vmem:[#allocation2 + $0x60] sm:$0xff]
    %v68 = vld [vmem:[#allocation2 + $0x68] sm:$0xff]
    %v69 = vld [vmem:[#allocation2 + $0x70] sm:$0xff]
    %v70 = vld [vmem:[#allocation2 + $0x78] sm:$0xff]
    %v71 = vpack.c.bf16 %v63, %v55
    %v72 = vpack.c.bf16 %v64, %v56
    %v73 = vpack.c.bf16 %v65, %v57
    %v74 = vpack.c.bf16 %v66, %v58
    %v75 = vpack.c.bf16 %v67, %v59
    %v76 = vpack.c.bf16 %v68, %v60
    %v77 = vpack.c.bf16 %v69, %v61
    %v78 = vpack.c.bf16 %v70, %v62
    %v79 = vld [vmem:[#allocation5] sm:$0xff]
    %v80 = vld [vmem:[#allocation5 + $0x8] sm:$0xff]
    %v81 = vld [vmem:[#allocation5 + $0x10] sm:$0xf]
    %v82 = vld [vmem:[#allocation5 + $0x14] sm:$0xff]
    %v83 = vld [vmem:[#allocation5 + $0x1c] sm:$0xff]
    %v84 = vld [vmem:[#allocation5 + $0x24] sm:$0xf]
    %v85 = vld [vmem:[#allocation5 + $0x28] sm:$0xff]
    %v86 = vld [vmem:[#allocation5 + $0x30] sm:$0xff]
    %v87 = vld [vmem:[#allocation5 + $0x38] sm:$0xf]
    %v88 = vld [vmem:[#allocation5 + $0x3c] sm:$0xff]
    %v89 = vld [vmem:[#allocation5 + $0x44] sm:$0xff]
    %v90 = vld [vmem:[#allocation5 + $0x4c] sm:$0xf]
    %v91 = vld [vmem:[#allocation5 + $0x50] sm:$0xff]
    %v92 = vld [vmem:[#allocation5 + $0x58] sm:$0xff]
    %v93 = vld [vmem:[#allocation5 + $0x60] sm:$0xf]
    %v94 = vld [vmem:[#allocation5 + $0x64] sm:$0xff]
    %v95 = vld [vmem:[#allocation5 + $0x6c] sm:$0xff]
    %v96 = vld [vmem:[#allocation5 + $0x74] sm:$0xf]
    %v97 = vld [vmem:[#allocation5 + $0x78] sm:$0xff]
    %v98 = vld [vmem:[#allocation5 + $0x80] sm:$0xff]
    %v99 = vld [vmem:[#allocation5 + $0x88] sm:$0xf]
    %v100 = vld [vmem:[#allocation5 + $0x8c] sm:$0xff]
    %v101 = vld [vmem:[#allocation5 + $0x94] sm:$0xff]
    %v102 = vld [vmem:[#allocation5 + $0x9c] sm:$0xf]
    %v103 = vld [vmem:[#allocation5 + $0xa0] sm:$0xff]
    %v104 = vld [vmem:[#allocation5 + $0xa8] sm:$0xff]
    %v105 = vld [vmem:[#allocation5 + $0xb0] sm:$0xf]
    %v106 = vld [vmem:[#allocation5 + $0xb4] sm:$0xff]
    %v107 = vld [vmem:[#allocation5 + $0xbc] sm:$0xff]
    %v108 = vld [vmem:[#allocation5 + $0xc4] sm:$0xf]
    %v109 = vld [vmem:[#allocation5 + $0xc8] sm:$0xff]
    %v110 = vld [vmem:[#allocation5 + $0xd0] sm:$0xff]
    %v111 = vld [vmem:[#allocation5 + $0xd8] sm:$0xf]
    %v112 = vld [vmem:[#allocation5 + $0xdc] sm:$0xff]
    %v113 = vld [vmem:[#allocation5 + $0xe4] sm:$0xff]
    %v114 = vld [vmem:[#allocation5 + $0xec] sm:$0xf]
    %v115 = vld [vmem:[#allocation5 + $0xf0] sm:$0xff]
    %v116 = vld [vmem:[#allocation5 + $0xf8] sm:$0xff]
    %v117 = vld [vmem:[#allocation5 + $0x100] sm:$0xf]
    %v118 = vld [vmem:[#allocation5 + $0x104] sm:$0xff]
    %v119 = vld [vmem:[#allocation5 + $0x10c] sm:$0xff]
    %v120 = vld [vmem:[#allocation5 + $0x114] sm:$0xf]
    %v121 = vld [vmem:[#allocation5 + $0x118] sm:$0xff]
    %v122 = vld [vmem:[#allocation5 + $0x120] sm:$0xff]
    %v123 = vld [vmem:[#allocation5 + $0x128] sm:$0xf]
    %v124 = vld [vmem:[#allocation5 + $0x12c] sm:$0xff]
    %v125 = vld [vmem:[#allocation5 + $0x134] sm:$0xff]
    %v126 = vld [vmem:[#allocation5 + $0x13c] sm:$0xf]
    %v127 = vld [vmem:[#allocation5 + $0x140] sm:$0xff]
    %v128 = vld [vmem:[#allocation5 + $0x148] sm:$0xff]
    %v129 = vld [vmem:[#allocation5 + $0x150] sm:$0xf]
    %v130 = vld [vmem:[#allocation5 + $0x154] sm:$0xff]
    %v131 = vld [vmem:[#allocation5 + $0x15c] sm:$0xff]
    %v132 = vld [vmem:[#allocation5 + $0x164] sm:$0xf]
    %v133 = vld [vmem:[#allocation5 + $0x168] sm:$0xff]
    %v134 = vld [vmem:[#allocation5 + $0x170] sm:$0xff]
    %v135 = vld [vmem:[#allocation5 + $0x178] sm:$0xf]
    %v136 = vld [vmem:[#allocation5 + $0x17c] sm:$0xff]
    %v137 = vld [vmem:[#allocation5 + $0x184] sm:$0xff]
    %v138 = vld [vmem:[#allocation5 + $0x18c] sm:$0xf]
    %v139 = vld [vmem:[#allocation5 + $0x190] sm:$0xff]
    %v140 = vld [vmem:[#allocation5 + $0x198] sm:$0xff]
    %v141 = vld [vmem:[#allocation5 + $0x1a0] sm:$0xf]
    %v142 = vld [vmem:[#allocation5 + $0x1a4] sm:$0xff]
    %v143 = vld [vmem:[#allocation5 + $0x1ac] sm:$0xff]
    %v144 = vld [vmem:[#allocation5 + $0x1b4] sm:$0xf]
    %v145 = vld [vmem:[#allocation5 + $0x1b8] sm:$0xff]
    %v146 = vld [vmem:[#allocation5 + $0x1c0] sm:$0xff]
    %v147 = vld [vmem:[#allocation5 + $0x1c8] sm:$0xf]
    %v148 = vld [vmem:[#allocation5 + $0x1cc] sm:$0xff]
    %v149 = vld [vmem:[#allocation5 + $0x1d4] sm:$0xff]
    %v150 = vld [vmem:[#allocation5 + $0x1dc] sm:$0xf]
    %v151 = vld [vmem:[#allocation5 + $0x1e0] sm:$0xff]
    %v152 = vld [vmem:[#allocation5 + $0x1e8] sm:$0xff]
    %v153 = vld [vmem:[#allocation5 + $0x1f0] sm:$0xf]
    %v154 = vld [vmem:[#allocation5 + $0x1f4] sm:$0xff]
    %v155 = vld [vmem:[#allocation5 + $0x1fc] sm:$0xff]
    %v156 = vld [vmem:[#allocation5 + $0x204] sm:$0xf]
    %v157 = vld [vmem:[#allocation5 + $0x208] sm:$0xff]
    %v158 = vld [vmem:[#allocation5 + $0x210] sm:$0xff]
    %v159 = vld [vmem:[#allocation5 + $0x218] sm:$0xf]
    %v160 = vld [vmem:[#allocation5 + $0x21c] sm:$0xff]
    %v161 = vld [vmem:[#allocation5 + $0x224] sm:$0xff]
    %v162 = vld [vmem:[#allocation5 + $0x22c] sm:$0xf]
    %v163 = vld [vmem:[#allocation5 + $0x230] sm:$0xff]
    %v164 = vld [vmem:[#allocation5 + $0x238] sm:$0xff]
    %v165 = vld [vmem:[#allocation5 + $0x240] sm:$0xf]
    %v166 = vld [vmem:[#allocation5 + $0x244] sm:$0xff]
    %v167 = vld [vmem:[#allocation5 + $0x24c] sm:$0xff]
    %v168 = vld [vmem:[#allocation5 + $0x254] sm:$0xf]
    %v169 = vld [vmem:[#allocation5 + $0x258] sm:$0xff]
    %v170 = vld [vmem:[#allocation5 + $0x260] sm:$0xff]
    %v171 = vld [vmem:[#allocation5 + $0x268] sm:$0xf]
    %v172 = vld [vmem:[#allocation5 + $0x26c] sm:$0xff]
    %v173 = vld [vmem:[#allocation5 + $0x274] sm:$0xff]
    %v174 = vld [vmem:[#allocation5 + $0x27c] sm:$0xf]
    %v175 = vld [vmem:[#allocation5 + $0x280] sm:$0xff]
    %v176 = vld [vmem:[#allocation5 + $0x288] sm:$0xff]
    %v177 = vld [vmem:[#allocation5 + $0x290] sm:$0xf]
    %v178 = vld [vmem:[#allocation5 + $0x294] sm:$0xff]
    %v179 = vld [vmem:[#allocation5 + $0x29c] sm:$0xff]
    %v180 = vld [vmem:[#allocation5 + $0x2a4] sm:$0xf]
    %v181 = vld [vmem:[#allocation5 + $0x2a8] sm:$0xff]
    %v182 = vld [vmem:[#allocation5 + $0x2b0] sm:$0xff]
    %v183 = vld [vmem:[#allocation5 + $0x2b8] sm:$0xf]
    %v184 = vld [vmem:[#allocation5 + $0x2bc] sm:$0xff]
    %v185 = vld [vmem:[#allocation5 + $0x2c4] sm:$0xff]
    %v186 = vld [vmem:[#allocation5 + $0x2cc] sm:$0xf]
    %v187 = vld [vmem:[#allocation5 + $0x2d0] sm:$0xff]
    %v188 = vld [vmem:[#allocation5 + $0x2d8] sm:$0xff]
    %v189 = vld [vmem:[#allocation5 + $0x2e0] sm:$0xf]
    %v190 = vld [vmem:[#allocation5 + $0x2e4] sm:$0xff]
    %v191 = vld [vmem:[#allocation5 + $0x2ec] sm:$0xff]
    %v192 = vld [vmem:[#allocation5 + $0x2f4] sm:$0xf]
    %v193 = vld [vmem:[#allocation5 + $0x2f8] sm:$0xff]
    %v194 = vld [vmem:[#allocation5 + $0x300] sm:$0xff]
    %v195 = vld [vmem:[#allocation5 + $0x308] sm:$0xf]
    %v196 = vld [vmem:[#allocation5 + $0x30c] sm:$0xff]
    %v197 = vld [vmem:[#allocation5 + $0x314] sm:$0xff]
    %v198 = vld [vmem:[#allocation5 + $0x31c] sm:$0xf]
    %v199 = vld [vmem:[#allocation5 + $0x320] sm:$0xff]
    %v200 = vld [vmem:[#allocation5 + $0x328] sm:$0xff]
    %v201 = vld [vmem:[#allocation5 + $0x330] sm:$0xf]
    %v202 = vld [vmem:[#allocation5 + $0x334] sm:$0xff]
    %v203 = vld [vmem:[#allocation5 + $0x33c] sm:$0xff]
    %v204 = vld [vmem:[#allocation5 + $0x344] sm:$0xf]
    %v205 = vld [vmem:[#allocation5 + $0x348] sm:$0xff]
    %v206 = vld [vmem:[#allocation5 + $0x350] sm:$0xff]
    %v207 = vld [vmem:[#allocation5 + $0x358] sm:$0xf]
    %v208 = vld [vmem:[#allocation5 + $0x35c] sm:$0xff]
    %v209 = vld [vmem:[#allocation5 + $0x364] sm:$0xff]
    %v210 = vld [vmem:[#allocation5 + $0x36c] sm:$0xf]
    %v211 = vld [vmem:[#allocation5 + $0x370] sm:$0xff]
    %v212 = vld [vmem:[#allocation5 + $0x378] sm:$0xff]
    %v213 = vld [vmem:[#allocation5 + $0x380] sm:$0xf]
    %v214 = vld [vmem:[#allocation5 + $0x384] sm:$0xff]
    %v215 = vld [vmem:[#allocation5 + $0x38c] sm:$0xff]
    %v216 = vld [vmem:[#allocation5 + $0x394] sm:$0xf]
    %v217 = vld [vmem:[#allocation5 + $0x398] sm:$0xff]
    %v218 = vld [vmem:[#allocation5 + $0x3a0] sm:$0xff]
    %v219 = vld [vmem:[#allocation5 + $0x3a8] sm:$0xf]
    %v220 = vld [vmem:[#allocation5 + $0x3ac] sm:$0xff]
    %v221 = vld [vmem:[#allocation5 + $0x3b4] sm:$0xff]
    %v222 = vld [vmem:[#allocation5 + $0x3bc] sm:$0xf]
    %v223 = vld [vmem:[#allocation5 + $0x3c0] sm:$0xff]
    %v224 = vld [vmem:[#allocation5 + $0x3c8] sm:$0xff]
    %v225 = vld [vmem:[#allocation5 + $0x3d0] sm:$0xf]
    %v226 = vld [vmem:[#allocation5 + $0x3d4] sm:$0xff]
    %v227 = vld [vmem:[#allocation5 + $0x3dc] sm:$0xff]
    %v228 = vld [vmem:[#allocation5 + $0x3e4] sm:$0xf]
    %v229 = vld [vmem:[#allocation5 + $0x3e8] sm:$0xff]
    %v230 = vld [vmem:[#allocation5 + $0x3f0] sm:$0xff]
    %v231 = vld [vmem:[#allocation5 + $0x3f8] sm:$0xf]
    %v232 = vld [vmem:[#allocation5 + $0x3fc] sm:$0xff]
    %v233 = vld [vmem:[#allocation5 + $0x404] sm:$0xff]
    %v234 = vld [vmem:[#allocation5 + $0x40c] sm:$0xf]
    %v235 = vld [vmem:[#allocation5 + $0x410] sm:$0xff]
    %v236 = vld [vmem:[#allocation5 + $0x418] sm:$0xff]
    %v237 = vld [vmem:[#allocation5 + $0x420] sm:$0xf]
    %v238 = vld [vmem:[#allocation5 + $0x424] sm:$0xff]
    %v239 = vld [vmem:[#allocation5 + $0x42c] sm:$0xff]
    %v240 = vld [vmem:[#allocation5 + $0x434] sm:$0xf]
    %v241 = vld [vmem:[#allocation5 + $0x438] sm:$0xff]
    %v242 = vld [vmem:[#allocation5 + $0x440] sm:$0xff]
    %v243 = vld [vmem:[#allocation5 + $0x448] sm:$0xf]
    %v244 = vld [vmem:[#allocation5 + $0x44c] sm:$0xff]
    %v245 = vld [vmem:[#allocation5 + $0x454] sm:$0xff]
    %v246 = vld [vmem:[#allocation5 + $0x45c] sm:$0xf]
    %v247 = vld [vmem:[#allocation5 + $0x460] sm:$0xff]
    %v248 = vld [vmem:[#allocation5 + $0x468] sm:$0xff]
    %v249 = vld [vmem:[#allocation5 + $0x470] sm:$0xf]
    %v250 = vld [vmem:[#allocation5 + $0x474] sm:$0xff]
    %v251 = vld [vmem:[#allocation5 + $0x47c] sm:$0xff]
    %v252 = vld [vmem:[#allocation5 + $0x484] sm:$0xf]
    %v253 = vld [vmem:[#allocation5 + $0x488] sm:$0xff]
    %v254 = vld [vmem:[#allocation5 + $0x490] sm:$0xff]
    %v255 = vld [vmem:[#allocation5 + $0x498] sm:$0xf]
    %v256 = vld [vmem:[#allocation5 + $0x49c] sm:$0xff]
    %v257 = vld [vmem:[#allocation5 + $0x4a4] sm:$0xff]
    %v258 = vld [vmem:[#allocation5 + $0x4ac] sm:$0xf]
    %v259 = vld [vmem:[#allocation5 + $0x4b0] sm:$0xff]
    %v260 = vld [vmem:[#allocation5 + $0x4b8] sm:$0xff]
    %v261 = vld [vmem:[#allocation5 + $0x4c0] sm:$0xf]
    %v262 = vld [vmem:[#allocation5 + $0x4c4] sm:$0xff]
    %v263 = vld [vmem:[#allocation5 + $0x4cc] sm:$0xff]
    %v264 = vld [vmem:[#allocation5 + $0x4d4] sm:$0xf]
    %v265 = vld [vmem:[#allocation5 + $0x4d8] sm:$0xff]
    %v266 = vld [vmem:[#allocation5 + $0x4e0] sm:$0xff]
    %v267 = vld [vmem:[#allocation5 + $0x4e8] sm:$0xf]
    %v268 = vld [vmem:[#allocation5 + $0x4ec] sm:$0xff]
    %v269 = vld [vmem:[#allocation5 + $0x4f4] sm:$0xff]
    %v270 = vld [vmem:[#allocation5 + $0x4fc] sm:$0xf]
    %v271 = vld [vmem:[#allocation5 + $0x500] sm:$0xff]
    %v272 = vld [vmem:[#allocation5 + $0x508] sm:$0xff]
    %v273 = vld [vmem:[#allocation5 + $0x510] sm:$0xf]
    %v274 = vld [vmem:[#allocation5 + $0x514] sm:$0xff]
    %v275 = vld [vmem:[#allocation5 + $0x51c] sm:$0xff]
    %v276 = vld [vmem:[#allocation5 + $0x524] sm:$0xf]
    %v277 = vld [vmem:[#allocation5 + $0x528] sm:$0xff]
    %v278 = vld [vmem:[#allocation5 + $0x530] sm:$0xff]
    %v279 = vld [vmem:[#allocation5 + $0x538] sm:$0xf]
    %v280 = vld [vmem:[#allocation5 + $0x53c] sm:$0xff]
    %v281 = vld [vmem:[#allocation5 + $0x544] sm:$0xff]
    %v282 = vld [vmem:[#allocation5 + $0x54c] sm:$0xf]
    %v283 = vld [vmem:[#allocation5 + $0x550] sm:$0xff]
    %v284 = vld [vmem:[#allocation5 + $0x558] sm:$0xff]
    %v285 = vld [vmem:[#allocation5 + $0x560] sm:$0xf]
    %v286 = vld [vmem:[#allocation5 + $0x564] sm:$0xff]
    %v287 = vld [vmem:[#allocation5 + $0x56c] sm:$0xff]
    %v288 = vld [vmem:[#allocation5 + $0x574] sm:$0xf]
    %v289 = vld [vmem:[#allocation5 + $0x578] sm:$0xff]
    %v290 = vld [vmem:[#allocation5 + $0x580] sm:$0xff]
    %v291 = vld [vmem:[#allocation5 + $0x588] sm:$0xf]
    %v292 = vld [vmem:[#allocation5 + $0x58c] sm:$0xff]
    %v293 = vld [vmem:[#allocation5 + $0x594] sm:$0xff]
    %v294 = vld [vmem:[#allocation5 + $0x59c] sm:$0xf]
    %v295 = vld [vmem:[#allocation5 + $0x5a0] sm:$0xff]
    %v296 = vld [vmem:[#allocation5 + $0x5a8] sm:$0xff]
    %v297 = vld [vmem:[#allocation5 + $0x5b0] sm:$0xf]
    %v298 = vld [vmem:[#allocation5 + $0x5b4] sm:$0xff]
    %v299 = vld [vmem:[#allocation5 + $0x5bc] sm:$0xff]
    %v300 = vld [vmem:[#allocation5 + $0x5c4] sm:$0xf]
    %v301 = vld [vmem:[#allocation5 + $0x5c8] sm:$0xff]
    %v302 = vld [vmem:[#allocation5 + $0x5d0] sm:$0xff]
    %v303 = vld [vmem:[#allocation5 + $0x5d8] sm:$0xf]
    %v304 = vld [vmem:[#allocation5 + $0x5dc] sm:$0xff]
    %v305 = vld [vmem:[#allocation5 + $0x5e4] sm:$0xff]
    %v306 = vld [vmem:[#allocation5 + $0x5ec] sm:$0xf]
    %v307 = vld [vmem:[#allocation5 + $0x5f0] sm:$0xff]
    %v308 = vld [vmem:[#allocation5 + $0x5f8] sm:$0xff]
    %v309 = vld [vmem:[#allocation5 + $0x600] sm:$0xf]
    %v310 = vld [vmem:[#allocation5 + $0x604] sm:$0xff]
    %v311 = vld [vmem:[#allocation5 + $0x60c] sm:$0xff]
    %v312 = vld [vmem:[#allocation5 + $0x614] sm:$0xf]
    %v313 = vld [vmem:[#allocation5 + $0x618] sm:$0xff]
    %v314 = vld [vmem:[#allocation5 + $0x620] sm:$0xff]
    %v315 = vld [vmem:[#allocation5 + $0x628] sm:$0xf]
    %v316 = vld [vmem:[#allocation5 + $0x62c] sm:$0xff]
    %v317 = vld [vmem:[#allocation5 + $0x634] sm:$0xff]
    %v318 = vld [vmem:[#allocation5 + $0x63c] sm:$0xf]
    %v319 = vld [vmem:[#allocation5 + $0x640] sm:$0xff]
    %v320 = vld [vmem:[#allocation5 + $0x648] sm:$0xff]
    %v321 = vld [vmem:[#allocation5 + $0x650] sm:$0xf]
    %v322 = vld [vmem:[#allocation5 + $0x654] sm:$0xff]
    %v323 = vld [vmem:[#allocation5 + $0x65c] sm:$0xff]
    %v324 = vld [vmem:[#allocation5 + $0x664] sm:$0xf]
    %v325 = vld [vmem:[#allocation5 + $0x668] sm:$0xff]
    %v326 = vld [vmem:[#allocation5 + $0x670] sm:$0xff]
    %v327 = vld [vmem:[#allocation5 + $0x678] sm:$0xf]
    %v328 = vld [vmem:[#allocation5 + $0x67c] sm:$0xff]
    %v329 = vld [vmem:[#allocation5 + $0x684] sm:$0xff]
    %v330 = vld [vmem:[#allocation5 + $0x68c] sm:$0xf]
    %v331 = vld [vmem:[#allocation5 + $0x690] sm:$0xff]
    %v332 = vld [vmem:[#allocation5 + $0x698] sm:$0xff]
    %v333 = vld [vmem:[#allocation5 + $0x6a0] sm:$0xf]
    %v334 = vld [vmem:[#allocation5 + $0x6a4] sm:$0xff]
    %v335 = vld [vmem:[#allocation5 + $0x6ac] sm:$0xff]
    %v336 = vld [vmem:[#allocation5 + $0x6b4] sm:$0xf]
    %v337 = vld [vmem:[#allocation5 + $0x6b8] sm:$0xff]
    %v338 = vld [vmem:[#allocation5 + $0x6c0] sm:$0xff]
    %v339 = vld [vmem:[#allocation5 + $0x6c8] sm:$0xf]
    %v340 = vld [vmem:[#allocation5 + $0x6cc] sm:$0xff]
    %v341 = vld [vmem:[#allocation5 + $0x6d4] sm:$0xff]
    %v342 = vld [vmem:[#allocation5 + $0x6dc] sm:$0xf]
    %v343 = vld [vmem:[#allocation5 + $0x6e0] sm:$0xff]
    %v344 = vld [vmem:[#allocation5 + $0x6e8] sm:$0xff]
    %v345 = vld [vmem:[#allocation5 + $0x6f0] sm:$0xf]
    %v346 = vld [vmem:[#allocation5 + $0x6f4] sm:$0xff]
    %v347 = vld [vmem:[#allocation5 + $0x6fc] sm:$0xff]
    %v348 = vld [vmem:[#allocation5 + $0x704] sm:$0xf]
    %v349 = vld [vmem:[#allocation5 + $0x708] sm:$0xff]
    %v350 = vld [vmem:[#allocation5 + $0x710] sm:$0xff]
    %v351 = vld [vmem:[#allocation5 + $0x718] sm:$0xf]
    %v352 = vld [vmem:[#allocation5 + $0x71c] sm:$0xff]
    %v353 = vld [vmem:[#allocation5 + $0x724] sm:$0xff]
    %v354 = vld [vmem:[#allocation5 + $0x72c] sm:$0xf]
    %v355 = vld [vmem:[#allocation5 + $0x730] sm:$0xff]
    %v356 = vld [vmem:[#allocation5 + $0x738] sm:$0xff]
    %v357 = vld [vmem:[#allocation5 + $0x740] sm:$0xf]
    %v358 = vld [vmem:[#allocation5 + $0x744] sm:$0xff]
    %v359 = vld [vmem:[#allocation5 + $0x74c] sm:$0xff]
    %v360 = vld [vmem:[#allocation5 + $0x754] sm:$0xf]
    %v361 = vld [vmem:[#allocation5 + $0x758] sm:$0xff]
    %v362 = vld [vmem:[#allocation5 + $0x760] sm:$0xff]
    %v363 = vld [vmem:[#allocation5 + $0x768] sm:$0xf]
    %v364 = vld [vmem:[#allocation5 + $0x76c] sm:$0xff]
    %v365 = vld [vmem:[#allocation5 + $0x774] sm:$0xff]
    %v366 = vld [vmem:[#allocation5 + $0x77c] sm:$0xf]
    %v367 = vld [vmem:[#allocation5 + $0x780] sm:$0xff]
    %v368 = vld [vmem:[#allocation5 + $0x788] sm:$0xff]
    %v369 = vld [vmem:[#allocation5 + $0x790] sm:$0xf]
    %v370 = vld [vmem:[#allocation5 + $0x794] sm:$0xff]
    %v371 = vld [vmem:[#allocation5 + $0x79c] sm:$0xff]
    %v372 = vld [vmem:[#allocation5 + $0x7a4] sm:$0xf]
    %v373 = vld [vmem:[#allocation5 + $0x7a8] sm:$0xff]
    %v374 = vld [vmem:[#allocation5 + $0x7b0] sm:$0xff]
    %v375 = vld [vmem:[#allocation5 + $0x7b8] sm:$0xf]
    %v376 = vld [vmem:[#allocation5 + $0x7bc] sm:$0xff]
    %v377 = vld [vmem:[#allocation5 + $0x7c4] sm:$0xff]
    %v378 = vld [vmem:[#allocation5 + $0x7cc] sm:$0xf]
    %v379 = vld [vmem:[#allocation5 + $0x7d0] sm:$0xff]
    %v380 = vld [vmem:[#allocation5 + $0x7d8] sm:$0xff]
    %v381 = vld [vmem:[#allocation5 + $0x7e0] sm:$0xf]
    %v382 = vld [vmem:[#allocation5 + $0x7e4] sm:$0xff]
    %v383 = vld [vmem:[#allocation5 + $0x7ec] sm:$0xff]
    %v384 = vld [vmem:[#allocation5 + $0x7f4] sm:$0xf]
    %v385 = vld [vmem:[#allocation5 + $0x7f8] sm:$0xff]
    %v386 = vld [vmem:[#allocation5 + $0x800] sm:$0xff]
    %v387 = vld [vmem:[#allocation5 + $0x808] sm:$0xf]
    %v388 = vld [vmem:[#allocation5 + $0x80c] sm:$0xff]
    %v389 = vld [vmem:[#allocation5 + $0x814] sm:$0xff]
    %v390 = vld [vmem:[#allocation5 + $0x81c] sm:$0xf]
    %v391 = vld [vmem:[#allocation5 + $0x820] sm:$0xff]
    %v392 = vld [vmem:[#allocation5 + $0x828] sm:$0xff]
    %v393 = vld [vmem:[#allocation5 + $0x830] sm:$0xf]
    %v394 = vld [vmem:[#allocation5 + $0x834] sm:$0xff]
    %v395 = vld [vmem:[#allocation5 + $0x83c] sm:$0xff]
    %v396 = vld [vmem:[#allocation5 + $0x844] sm:$0xf]
    %v397 = vld [vmem:[#allocation5 + $0x848] sm:$0xff]
    %v398 = vld [vmem:[#allocation5 + $0x850] sm:$0xff]
    %v399 = vld [vmem:[#allocation5 + $0x858] sm:$0xf]
    %v400 = vld [vmem:[#allocation5 + $0x85c] sm:$0xff]
    %v401 = vld [vmem:[#allocation5 + $0x864] sm:$0xff]
    %v402 = vld [vmem:[#allocation5 + $0x86c] sm:$0xf]
    %v403 = vld [vmem:[#allocation5 + $0x870] sm:$0xff]
    %v404 = vld [vmem:[#allocation5 + $0x878] sm:$0xff]
    %v405 = vld [vmem:[#allocation5 + $0x880] sm:$0xf]
    %v406 = vld [vmem:[#allocation5 + $0x884] sm:$0xff]
    %v407 = vld [vmem:[#allocation5 + $0x88c] sm:$0xff]
    %v408 = vld [vmem:[#allocation5 + $0x894] sm:$0xf]
    %v409 = vld [vmem:[#allocation5 + $0x898] sm:$0xff]
    %v410 = vld [vmem:[#allocation5 + $0x8a0] sm:$0xff]
    %v411 = vld [vmem:[#allocation5 + $0x8a8] sm:$0xf]
    %v412 = vld [vmem:[#allocation5 + $0x8ac] sm:$0xff]
    %v413 = vld [vmem:[#allocation5 + $0x8b4] sm:$0xff]
    %v414 = vld [vmem:[#allocation5 + $0x8bc] sm:$0xf]
    %v415 = vld [vmem:[#allocation5 + $0x8c0] sm:$0xff]
    %v416 = vld [vmem:[#allocation5 + $0x8c8] sm:$0xff]
    %v417 = vld [vmem:[#allocation5 + $0x8d0] sm:$0xf]
    %v418 = vld [vmem:[#allocation5 + $0x8d4] sm:$0xff]
    %v419 = vld [vmem:[#allocation5 + $0x8dc] sm:$0xff]
    %v420 = vld [vmem:[#allocation5 + $0x8e4] sm:$0xf]
    %v421 = vld [vmem:[#allocation5 + $0x8e8] sm:$0xff]
    %v422 = vld [vmem:[#allocation5 + $0x8f0] sm:$0xff]
    %v423 = vld [vmem:[#allocation5 + $0x8f8] sm:$0xf]
    %v424 = vld [vmem:[#allocation5 + $0x8fc] sm:$0xff]
    %v425 = vld [vmem:[#allocation5 + $0x904] sm:$0xff]
    %v426 = vld [vmem:[#allocation5 + $0x90c] sm:$0xf]
    %v427 = vld [vmem:[#allocation5 + $0x910] sm:$0xff]
    %v428 = vld [vmem:[#allocation5 + $0x918] sm:$0xff]
    %v429 = vld [vmem:[#allocation5 + $0x920] sm:$0xf]
    %v430 = vld [vmem:[#allocation5 + $0x924] sm:$0xff]
    %v431 = vld [vmem:[#allocation5 + $0x92c] sm:$0xff]
    %v432 = vld [vmem:[#allocation5 + $0x934] sm:$0xf]
    %v433 = vld [vmem:[#allocation5 + $0x938] sm:$0xff]
    %v434 = vld [vmem:[#allocation5 + $0x940] sm:$0xff]
    %v435 = vld [vmem:[#allocation5 + $0x948] sm:$0xf]
    %v436 = vld [vmem:[#allocation5 + $0x94c] sm:$0xff]
    %v437 = vld [vmem:[#allocation5 + $0x954] sm:$0xff]
    %v438 = vld [vmem:[#allocation5 + $0x95c] sm:$0xf]
    %v439 = vld [vmem:[#allocation5 + $0x960] sm:$0xff]
    %v440 = vld [vmem:[#allocation5 + $0x968] sm:$0xff]
    %v441 = vld [vmem:[#allocation5 + $0x970] sm:$0xf]
    %v442 = vld [vmem:[#allocation5 + $0x974] sm:$0xff]
    %v443 = vld [vmem:[#allocation5 + $0x97c] sm:$0xff]
    %v444 = vld [vmem:[#allocation5 + $0x984] sm:$0xf]
    %v445 = vld [vmem:[#allocation5 + $0x988] sm:$0xff]
    %v446 = vld [vmem:[#allocation5 + $0x990] sm:$0xff]
    %v447 = vld [vmem:[#allocation5 + $0x998] sm:$0xf]
    %v448 = vld [vmem:[#allocation5 + $0x99c] sm:$0xff]
    %v449 = vld [vmem:[#allocation5 + $0x9a4] sm:$0xff]
    %v450 = vld [vmem:[#allocation5 + $0x9ac] sm:$0xf]
    %v451 = vld [vmem:[#allocation5 + $0x9b0] sm:$0xff]
    %v452 = vld [vmem:[#allocation5 + $0x9b8] sm:$0xff]
    %v453 = vld [vmem:[#allocation5 + $0x9c0] sm:$0xf]
    %v454 = vld [vmem:[#allocation5 + $0x9c4] sm:$0xff]
    %v455 = vld [vmem:[#allocation5 + $0x9cc] sm:$0xff]
    %v456 = vld [vmem:[#allocation5 + $0x9d4] sm:$0xf]
    %v457 = vld [vmem:[#allocation5 + $0x9d8] sm:$0xff]
    %v458 = vld [vmem:[#allocation5 + $0x9e0] sm:$0xff]
    %v459 = vld [vmem:[#allocation5 + $0x9e8] sm:$0xf]
    %v460 = vld [vmem:[#allocation5 + $0x9ec] sm:$0xff]
    %v461 = vld [vmem:[#allocation5 + $0x9f4] sm:$0xff]
    %v462 = vld [vmem:[#allocation5 + $0x9fc] sm:$0xf]
    %v463 = vld [vmem:[#allocation7] sm:$0x1f]
    %v465 = vlaneseq
    %v466 = vshrl.u32 %v465, 7
    %v467 = vsub.s32 0, %v466
    %v468 = vrot.slane %v463, %v467
    %v469 = vlaneseq
    %v470 = vshrl.u32 %v469, 7
    %v471 = vsub.s32 1, %v470
    %v472 = vrot.slane %v463, %v471
    %v473 = vlaneseq
    %v474 = vshrl.u32 %v473, 7
    %v475 = vsub.s32 2, %v474
    %v476 = vrot.slane %v463, %v475
    %v477 = vlaneseq
    %v478 = vshrl.u32 %v477, 7
    %v479 = vsub.s32 3, %v478
    %v480 = vrot.slane %v463, %v479
    %v481 = vlaneseq
    %v482 = vshrl.u32 %v481, 7
    %v483 = vsub.s32 4, %v482
    %v484 = vrot.slane %v463, %v483
    %v874 = vunpack.c.l.b16 %v79
    %v875 = vunpack.c.h.b16 %v79
    %v876 = vunpack.c.l.b16 %v80
    %v877 = vunpack.c.h.b16 %v80
    %v878 = vunpack.c.l.b16 %v81
    %v879 = vunpack.c.l.b16 %v82
    %v880 = vunpack.c.h.b16 %v82
    %v881 = vunpack.c.l.b16 %v83
    %v882 = vunpack.c.h.b16 %v83
    %v883 = vunpack.c.l.b16 %v84
    %v884 = vunpack.c.l.b16 %v85
    %v885 = vunpack.c.h.b16 %v85
    %v886 = vunpack.c.l.b16 %v86
    %v887 = vunpack.c.h.b16 %v86
    %v888 = vunpack.c.l.b16 %v87
    %v889 = vunpack.c.l.b16 %v88
    %v890 = vunpack.c.h.b16 %v88
    %v891 = vunpack.c.l.b16 %v89
    %v892 = vunpack.c.h.b16 %v89
    %v893 = vunpack.c.l.b16 %v90
    %v894 = vunpack.c.l.b16 %v91
    %v895 = vunpack.c.h.b16 %v91
    %v896 = vunpack.c.l.b16 %v92
    %v897 = vunpack.c.h.b16 %v92
    %v898 = vunpack.c.l.b16 %v93
    %v899 = vunpack.c.l.b16 %v94
    %v900 = vunpack.c.h.b16 %v94
    %v901 = vunpack.c.l.b16 %v95
    %v902 = vunpack.c.h.b16 %v95
    %v903 = vunpack.c.l.b16 %v96
    %v904 = vunpack.c.l.b16 %v97
    %v905 = vunpack.c.h.b16 %v97
    %v906 = vunpack.c.l.b16 %v98
    %v907 = vunpack.c.h.b16 %v98
    %v908 = vunpack.c.l.b16 %v99
    %v909 = vunpack.c.l.b16 %v100
    %v910 = vunpack.c.h.b16 %v100
    %v911 = vunpack.c.l.b16 %v101
    %v912 = vunpack.c.h.b16 %v101
    %v913 = vunpack.c.l.b16 %v102
    %v914 = vunpack.c.l.b16 %v103
    %v915 = vunpack.c.h.b16 %v103
    %v916 = vunpack.c.l.b16 %v104
    %v917 = vunpack.c.h.b16 %v104
    %v918 = vunpack.c.l.b16 %v105
    %v919 = vunpack.c.l.b16 %v106
    %v920 = vunpack.c.h.b16 %v106
    %v921 = vunpack.c.l.b16 %v107
    %v922 = vunpack.c.h.b16 %v107
    %v923 = vunpack.c.l.b16 %v108
    %v924 = vunpack.c.l.b16 %v109
    %v925 = vunpack.c.h.b16 %v109
    %v926 = vunpack.c.l.b16 %v110
    %v927 = vunpack.c.h.b16 %v110
    %v928 = vunpack.c.l.b16 %v111
    %v929 = vunpack.c.l.b16 %v112
    %v930 = vunpack.c.h.b16 %v112
    %v931 = vunpack.c.l.b16 %v113
    %v932 = vunpack.c.h.b16 %v113
    %v933 = vunpack.c.l.b16 %v114
    %v934 = vunpack.c.l.b16 %v115
    %v935 = vunpack.c.h.b16 %v115
    %v936 = vunpack.c.l.b16 %v116
    %v937 = vunpack.c.h.b16 %v116
    %v938 = vunpack.c.l.b16 %v117
    %v939 = vunpack.c.l.b16 %v118
    %v940 = vunpack.c.h.b16 %v118
    %v941 = vunpack.c.l.b16 %v119
    %v942 = vunpack.c.h.b16 %v119
    %v943 = vunpack.c.l.b16 %v120
    %v944 = vunpack.c.l.b16 %v121
    %v945 = vunpack.c.h.b16 %v121
    %v946 = vunpack.c.l.b16 %v122
    %v947 = vunpack.c.h.b16 %v122
    %v948 = vunpack.c.l.b16 %v123
    %v949 = vunpack.c.l.b16 %v124
    %v950 = vunpack.c.h.b16 %v124
    %v951 = vunpack.c.l.b16 %v125
    %v952 = vunpack.c.h.b16 %v125
    %v953 = vunpack.c.l.b16 %v126
    %v954 = vunpack.c.l.b16 %v127
    %v955 = vunpack.c.h.b16 %v127
    %v956 = vunpack.c.l.b16 %v128
    %v957 = vunpack.c.h.b16 %v128
    %v958 = vunpack.c.l.b16 %v129
    %v959 = vunpack.c.l.b16 %v130
    %v960 = vunpack.c.h.b16 %v130
    %v961 = vunpack.c.l.b16 %v131
    %v962 = vunpack.c.h.b16 %v131
    %v963 = vunpack.c.l.b16 %v132
    %v964 = vunpack.c.l.b16 %v133
    %v965 = vunpack.c.h.b16 %v133
    %v966 = vunpack.c.l.b16 %v134
    %v967 = vunpack.c.h.b16 %v134
    %v968 = vunpack.c.l.b16 %v135
    %v969 = vunpack.c.l.b16 %v136
    %v970 = vunpack.c.h.b16 %v136
    %v971 = vunpack.c.l.b16 %v137
    %v972 = vunpack.c.h.b16 %v137
    %v973 = vunpack.c.l.b16 %v138
    %v974 = vunpack.c.l.b16 %v139
    %v975 = vunpack.c.h.b16 %v139
    %v976 = vunpack.c.l.b16 %v140
    %v977 = vunpack.c.h.b16 %v140
    %v978 = vunpack.c.l.b16 %v141
    %v979 = vunpack.c.l.b16 %v142
    %v980 = vunpack.c.h.b16 %v142
    %v981 = vunpack.c.l.b16 %v143
    %v982 = vunpack.c.h.b16 %v143
    %v983 = vunpack.c.l.b16 %v144
    %v984 = vunpack.c.l.b16 %v145
    %v985 = vunpack.c.h.b16 %v145
    %v986 = vunpack.c.l.b16 %v146
    %v987 = vunpack.c.h.b16 %v146
    %v988 = vunpack.c.l.b16 %v147
    %v989 = vunpack.c.l.b16 %v148
    %v990 = vunpack.c.h.b16 %v148
    %v991 = vunpack.c.l.b16 %v149
    %v992 = vunpack.c.h.b16 %v149
    %v993 = vunpack.c.l.b16 %v150
    %v994 = vunpack.c.l.b16 %v151
    %v995 = vunpack.c.h.b16 %v151
    %v996 = vunpack.c.l.b16 %v152
    %v997 = vunpack.c.h.b16 %v152
    %v998 = vunpack.c.l.b16 %v153
    %v999 = vunpack.c.l.b16 %v154
    %v1000 = vunpack.c.h.b16 %v154
    %v1001 = vunpack.c.l.b16 %v155
    %v1002 = vunpack.c.h.b16 %v155
    %v1003 = vunpack.c.l.b16 %v156
    %v1004 = vunpack.c.l.b16 %v157
    %v1005 = vunpack.c.h.b16 %v157
    %v1006 = vunpack.c.l.b16 %v158
    %v1007 = vunpack.c.h.b16 %v158
    %v1008 = vunpack.c.l.b16 %v159
    %v1009 = vunpack.c.l.b16 %v160
    %v1010 = vunpack.c.h.b16 %v160
    %v1011 = vunpack.c.l.b16 %v161
    %v1012 = vunpack.c.h.b16 %v161
    %v1013 = vunpack.c.l.b16 %v162
    %v1014 = vunpack.c.l.b16 %v163
    %v1015 = vunpack.c.h.b16 %v163
    %v1016 = vunpack.c.l.b16 %v164
    %v1017 = vunpack.c.h.b16 %v164
    %v1018 = vunpack.c.l.b16 %v165
    %v1019 = vunpack.c.l.b16 %v166
    %v1020 = vunpack.c.h.b16 %v166
    %v1021 = vunpack.c.l.b16 %v167
    %v1022 = vunpack.c.h.b16 %v167
    %v1023 = vunpack.c.l.b16 %v168
    %v1024 = vunpack.c.l.b16 %v169
    %v1025 = vunpack.c.h.b16 %v169
    %v1026 = vunpack.c.l.b16 %v170
    %v1027 = vunpack.c.h.b16 %v170
    %v1028 = vunpack.c.l.b16 %v171
    %v1029 = vunpack.c.l.b16 %v172
    %v1030 = vunpack.c.h.b16 %v172
    %v1031 = vunpack.c.l.b16 %v173
    %v1032 = vunpack.c.h.b16 %v173
    %v1033 = vunpack.c.l.b16 %v174
    %v1034 = vunpack.c.l.b16 %v175
    %v1035 = vunpack.c.h.b16 %v175
    %v1036 = vunpack.c.l.b16 %v176
    %v1037 = vunpack.c.h.b16 %v176
    %v1038 = vunpack.c.l.b16 %v177
    %v1039 = vunpack.c.l.b16 %v178
    %v1040 = vunpack.c.h.b16 %v178
    %v1041 = vunpack.c.l.b16 %v179
    %v1042 = vunpack.c.h.b16 %v179
    %v1043 = vunpack.c.l.b16 %v180
    %v1044 = vunpack.c.l.b16 %v181
    %v1045 = vunpack.c.h.b16 %v181
    %v1046 = vunpack.c.l.b16 %v182
    %v1047 = vunpack.c.h.b16 %v182
    %v1048 = vunpack.c.l.b16 %v183
    %v1049 = vunpack.c.l.b16 %v184
    %v1050 = vunpack.c.h.b16 %v184
    %v1051 = vunpack.c.l.b16 %v185
    %v1052 = vunpack.c.h.b16 %v185
    %v1053 = vunpack.c.l.b16 %v186
    %v1054 = vunpack.c.l.b16 %v187
    %v1055 = vunpack.c.h.b16 %v187
    %v1056 = vunpack.c.l.b16 %v188
    %v1057 = vunpack.c.h.b16 %v188
    %v1058 = vunpack.c.l.b16 %v189
    %v1059 = vunpack.c.l.b16 %v190
    %v1060 = vunpack.c.h.b16 %v190
    %v1061 = vunpack.c.l.b16 %v191
    %v1062 = vunpack.c.h.b16 %v191
    %v1063 = vunpack.c.l.b16 %v192
    %v1064 = vunpack.c.l.b16 %v193
    %v1065 = vunpack.c.h.b16 %v193
    %v1066 = vunpack.c.l.b16 %v194
    %v1067 = vunpack.c.h.b16 %v194
    %v1068 = vunpack.c.l.b16 %v195
    %v1069 = vunpack.c.l.b16 %v196
    %v1070 = vunpack.c.h.b16 %v196
    %v1071 = vunpack.c.l.b16 %v197
    %v1072 = vunpack.c.h.b16 %v197
    %v1073 = vunpack.c.l.b16 %v198
    %v1074 = vunpack.c.l.b16 %v199
    %v1075 = vunpack.c.h.b16 %v199
    %v1076 = vunpack.c.l.b16 %v200
    %v1077 = vunpack.c.h.b16 %v200
    %v1078 = vunpack.c.l.b16 %v201
    %v1079 = vunpack.c.l.b16 %v202
    %v1080 = vunpack.c.h.b16 %v202
    %v1081 = vunpack.c.l.b16 %v203
    %v1082 = vunpack.c.h.b16 %v203
    %v1083 = vunpack.c.l.b16 %v204
    %v1084 = vunpack.c.l.b16 %v205
    %v1085 = vunpack.c.h.b16 %v205
    %v1086 = vunpack.c.l.b16 %v206
    %v1087 = vunpack.c.h.b16 %v206
    %v1088 = vunpack.c.l.b16 %v207
    %v1089 = vunpack.c.l.b16 %v208
    %v1090 = vunpack.c.h.b16 %v208
    %v1091 = vunpack.c.l.b16 %v209
    %v1092 = vunpack.c.h.b16 %v209
    %v1093 = vunpack.c.l.b16 %v210
    %v1094 = vunpack.c.l.b16 %v211
    %v1095 = vunpack.c.h.b16 %v211
    %v1096 = vunpack.c.l.b16 %v212
    %v1097 = vunpack.c.h.b16 %v212
    %v1098 = vunpack.c.l.b16 %v213
    %v1099 = vunpack.c.l.b16 %v214
    %v1100 = vunpack.c.h.b16 %v214
    %v1101 = vunpack.c.l.b16 %v215
    %v1102 = vunpack.c.h.b16 %v215
    %v1103 = vunpack.c.l.b16 %v216
    %v1104 = vunpack.c.l.b16 %v217
    %v1105 = vunpack.c.h.b16 %v217
    %v1106 = vunpack.c.l.b16 %v218
    %v1107 = vunpack.c.h.b16 %v218
    %v1108 = vunpack.c.l.b16 %v219
    %v1109 = vunpack.c.l.b16 %v220
    %v1110 = vunpack.c.h.b16 %v220
    %v1111 = vunpack.c.l.b16 %v221
    %v1112 = vunpack.c.h.b16 %v221
    %v1113 = vunpack.c.l.b16 %v222
    %v1114 = vunpack.c.l.b16 %v223
    %v1115 = vunpack.c.h.b16 %v223
    %v1116 = vunpack.c.l.b16 %v224
    %v1117 = vunpack.c.h.b16 %v224
    %v1118 = vunpack.c.l.b16 %v225
    %v1119 = vunpack.c.l.b16 %v226
    %v1120 = vunpack.c.h.b16 %v226
    %v1121 = vunpack.c.l.b16 %v227
    %v1122 = vunpack.c.h.b16 %v227
    %v1123 = vunpack.c.l.b16 %v228
    %v1124 = vunpack.c.l.b16 %v229
    %v1125 = vunpack.c.h.b16 %v229
    %v1126 = vunpack.c.l.b16 %v230
    %v1127 = vunpack.c.h.b16 %v230
    %v1128 = vunpack.c.l.b16 %v231
    %v1129 = vunpack.c.l.b16 %v232
    %v1130 = vunpack.c.h.b16 %v232
    %v1131 = vunpack.c.l.b16 %v233
    %v1132 = vunpack.c.h.b16 %v233
    %v1133 = vunpack.c.l.b16 %v234
    %v1134 = vunpack.c.l.b16 %v235
    %v1135 = vunpack.c.h.b16 %v235
    %v1136 = vunpack.c.l.b16 %v236
    %v1137 = vunpack.c.h.b16 %v236
    %v1138 = vunpack.c.l.b16 %v237
    %v1139 = vunpack.c.l.b16 %v238
    %v1140 = vunpack.c.h.b16 %v238
    %v1141 = vunpack.c.l.b16 %v239
    %v1142 = vunpack.c.h.b16 %v239
    %v1143 = vunpack.c.l.b16 %v240
    %v1144 = vunpack.c.l.b16 %v241
    %v1145 = vunpack.c.h.b16 %v241
    %v1146 = vunpack.c.l.b16 %v242
    %v1147 = vunpack.c.h.b16 %v242
    %v1148 = vunpack.c.l.b16 %v243
    %v1149 = vunpack.c.l.b16 %v244
    %v1150 = vunpack.c.h.b16 %v244
    %v1151 = vunpack.c.l.b16 %v245
    %v1152 = vunpack.c.h.b16 %v245
    %v1153 = vunpack.c.l.b16 %v246
    %v1154 = vunpack.c.l.b16 %v247
    %v1155 = vunpack.c.h.b16 %v247
    %v1156 = vunpack.c.l.b16 %v248
    %v1157 = vunpack.c.h.b16 %v248
    %v1158 = vunpack.c.l.b16 %v249
    %v1159 = vunpack.c.l.b16 %v250
    %v1160 = vunpack.c.h.b16 %v250
    %v1161 = vunpack.c.l.b16 %v251
    %v1162 = vunpack.c.h.b16 %v251
    %v1163 = vunpack.c.l.b16 %v252
    %v1164 = vunpack.c.l.b16 %v253
    %v1165 = vunpack.c.h.b16 %v253
    %v1166 = vunpack.c.l.b16 %v254
    %v1167 = vunpack.c.h.b16 %v254
    %v1168 = vunpack.c.l.b16 %v255
    %v1169 = vunpack.c.l.b16 %v256
    %v1170 = vunpack.c.h.b16 %v256
    %v1171 = vunpack.c.l.b16 %v257
    %v1172 = vunpack.c.h.b16 %v257
    %v1173 = vunpack.c.l.b16 %v258
    %v1174 = vunpack.c.l.b16 %v259
    %v1175 = vunpack.c.h.b16 %v259
    %v1176 = vunpack.c.l.b16 %v260
    %v1177 = vunpack.c.h.b16 %v260
    %v1178 = vunpack.c.l.b16 %v261
    %v1179 = vunpack.c.l.b16 %v262
    %v1180 = vunpack.c.h.b16 %v262
    %v1181 = vunpack.c.l.b16 %v263
    %v1182 = vunpack.c.h.b16 %v263
    %v1183 = vunpack.c.l.b16 %v264
    %v1184 = vunpack.c.l.b16 %v265
    %v1185 = vunpack.c.h.b16 %v265
    %v1186 = vunpack.c.l.b16 %v266
    %v1187 = vunpack.c.h.b16 %v266
    %v1188 = vunpack.c.l.b16 %v267
    %v1189 = vunpack.c.l.b16 %v268
    %v1190 = vunpack.c.h.b16 %v268
    %v1191 = vunpack.c.l.b16 %v269
    %v1192 = vunpack.c.h.b16 %v269
    %v1193 = vunpack.c.l.b16 %v270
    %v1194 = vunpack.c.l.b16 %v271
    %v1195 = vunpack.c.h.b16 %v271
    %v1196 = vunpack.c.l.b16 %v272
    %v1197 = vunpack.c.h.b16 %v272
    %v1198 = vunpack.c.l.b16 %v273
    %v1199 = vunpack.c.l.b16 %v274
    %v1200 = vunpack.c.h.b16 %v274
    %v1201 = vunpack.c.l.b16 %v275
    %v1202 = vunpack.c.h.b16 %v275
    %v1203 = vunpack.c.l.b16 %v276
    %v1204 = vunpack.c.l.b16 %v277
    %v1205 = vunpack.c.h.b16 %v277
    %v1206 = vunpack.c.l.b16 %v278
    %v1207 = vunpack.c.h.b16 %v278
    %v1208 = vunpack.c.l.b16 %v279
    %v1209 = vunpack.c.l.b16 %v280
    %v1210 = vunpack.c.h.b16 %v280
    %v1211 = vunpack.c.l.b16 %v281
    %v1212 = vunpack.c.h.b16 %v281
    %v1213 = vunpack.c.l.b16 %v282
    %v1214 = vunpack.c.l.b16 %v283
    %v1215 = vunpack.c.h.b16 %v283
    %v1216 = vunpack.c.l.b16 %v284
    %v1217 = vunpack.c.h.b16 %v284
    %v1218 = vunpack.c.l.b16 %v285
    %v1219 = vunpack.c.l.b16 %v286
    %v1220 = vunpack.c.h.b16 %v286
    %v1221 = vunpack.c.l.b16 %v287
    %v1222 = vunpack.c.h.b16 %v287
    %v1223 = vunpack.c.l.b16 %v288
    %v1224 = vunpack.c.l.b16 %v289
    %v1225 = vunpack.c.h.b16 %v289
    %v1226 = vunpack.c.l.b16 %v290
    %v1227 = vunpack.c.h.b16 %v290
    %v1228 = vunpack.c.l.b16 %v291
    %v1229 = vunpack.c.l.b16 %v292
    %v1230 = vunpack.c.h.b16 %v292
    %v1231 = vunpack.c.l.b16 %v293
    %v1232 = vunpack.c.h.b16 %v293
    %v1233 = vunpack.c.l.b16 %v294
    %v1234 = vunpack.c.l.b16 %v295
    %v1235 = vunpack.c.h.b16 %v295
    %v1236 = vunpack.c.l.b16 %v296
    %v1237 = vunpack.c.h.b16 %v296
    %v1238 = vunpack.c.l.b16 %v297
    %v1239 = vunpack.c.l.b16 %v298
    %v1240 = vunpack.c.h.b16 %v298
    %v1241 = vunpack.c.l.b16 %v299
    %v1242 = vunpack.c.h.b16 %v299
    %v1243 = vunpack.c.l.b16 %v300
    %v1244 = vunpack.c.l.b16 %v301
    %v1245 = vunpack.c.h.b16 %v301
    %v1246 = vunpack.c.l.b16 %v302
    %v1247 = vunpack.c.h.b16 %v302
    %v1248 = vunpack.c.l.b16 %v303
    %v1249 = vunpack.c.l.b16 %v304
    %v1250 = vunpack.c.h.b16 %v304
    %v1251 = vunpack.c.l.b16 %v305
    %v1252 = vunpack.c.h.b16 %v305
    %v1253 = vunpack.c.l.b16 %v306
    %v1254 = vunpack.c.l.b16 %v307
    %v1255 = vunpack.c.h.b16 %v307
    %v1256 = vunpack.c.l.b16 %v308
    %v1257 = vunpack.c.h.b16 %v308
    %v1258 = vunpack.c.l.b16 %v309
    %v1259 = vunpack.c.l.b16 %v310
    %v1260 = vunpack.c.h.b16 %v310
    %v1261 = vunpack.c.l.b16 %v311
    %v1262 = vunpack.c.h.b16 %v311
    %v1263 = vunpack.c.l.b16 %v312
    %v1264 = vunpack.c.l.b16 %v313
    %v1265 = vunpack.c.h.b16 %v313
    %v1266 = vunpack.c.l.b16 %v314
    %v1267 = vunpack.c.h.b16 %v314
    %v1268 = vunpack.c.l.b16 %v315
    %v1269 = vunpack.c.l.b16 %v316
    %v1270 = vunpack.c.h.b16 %v316
    %v1271 = vunpack.c.l.b16 %v317
    %v1272 = vunpack.c.h.b16 %v317
    %v1273 = vunpack.c.l.b16 %v318
    %v1274 = vunpack.c.l.b16 %v319
    %v1275 = vunpack.c.h.b16 %v319
    %v1276 = vunpack.c.l.b16 %v320
    %v1277 = vunpack.c.h.b16 %v320
    %v1278 = vunpack.c.l.b16 %v321
    %v1279 = vunpack.c.l.b16 %v322
    %v1280 = vunpack.c.h.b16 %v322
    %v1281 = vunpack.c.l.b16 %v323
    %v1282 = vunpack.c.h.b16 %v323
    %v1283 = vunpack.c.l.b16 %v324
    %v1284 = vunpack.c.l.b16 %v325
    %v1285 = vunpack.c.h.b16 %v325
    %v1286 = vunpack.c.l.b16 %v326
    %v1287 = vunpack.c.h.b16 %v326
    %v1288 = vunpack.c.l.b16 %v327
    %v1289 = vunpack.c.l.b16 %v328
    %v1290 = vunpack.c.h.b16 %v328
    %v1291 = vunpack.c.l.b16 %v329
    %v1292 = vunpack.c.h.b16 %v329
    %v1293 = vunpack.c.l.b16 %v330
    %v1294 = vunpack.c.l.b16 %v331
    %v1295 = vunpack.c.h.b16 %v331
    %v1296 = vunpack.c.l.b16 %v332
    %v1297 = vunpack.c.h.b16 %v332
    %v1298 = vunpack.c.l.b16 %v333
    %v1299 = vunpack.c.l.b16 %v334
    %v1300 = vunpack.c.h.b16 %v334
    %v1301 = vunpack.c.l.b16 %v335
    %v1302 = vunpack.c.h.b16 %v335
    %v1303 = vunpack.c.l.b16 %v336
    %v1304 = vunpack.c.l.b16 %v337
    %v1305 = vunpack.c.h.b16 %v337
    %v1306 = vunpack.c.l.b16 %v338
    %v1307 = vunpack.c.h.b16 %v338
    %v1308 = vunpack.c.l.b16 %v339
    %v1309 = vunpack.c.l.b16 %v340
    %v1310 = vunpack.c.h.b16 %v340
    %v1311 = vunpack.c.l.b16 %v341
    %v1312 = vunpack.c.h.b16 %v341
    %v1313 = vunpack.c.l.b16 %v342
    %v1314 = vunpack.c.l.b16 %v343
    %v1315 = vunpack.c.h.b16 %v343
    %v1316 = vunpack.c.l.b16 %v344
    %v1317 = vunpack.c.h.b16 %v344
    %v1318 = vunpack.c.l.b16 %v345
    %v1319 = vunpack.c.l.b16 %v346
    %v1320 = vunpack.c.h.b16 %v346
    %v1321 = vunpack.c.l.b16 %v347
    %v1322 = vunpack.c.h.b16 %v347
    %v1323 = vunpack.c.l.b16 %v348
    %v1324 = vunpack.c.l.b16 %v349
    %v1325 = vunpack.c.h.b16 %v349
    %v1326 = vunpack.c.l.b16 %v350
    %v1327 = vunpack.c.h.b16 %v350
    %v1328 = vunpack.c.l.b16 %v351
    %v1329 = vunpack.c.l.b16 %v352
    %v1330 = vunpack.c.h.b16 %v352
    %v1331 = vunpack.c.l.b16 %v353
    %v1332 = vunpack.c.h.b16 %v353
    %v1333 = vunpack.c.l.b16 %v354
    %v1334 = vunpack.c.l.b16 %v355
    %v1335 = vunpack.c.h.b16 %v355
    %v1336 = vunpack.c.l.b16 %v356
    %v1337 = vunpack.c.h.b16 %v356
    %v1338 = vunpack.c.l.b16 %v357
    %v1339 = vunpack.c.l.b16 %v358
    %v1340 = vunpack.c.h.b16 %v358
    %v1341 = vunpack.c.l.b16 %v359
    %v1342 = vunpack.c.h.b16 %v359
    %v1343 = vunpack.c.l.b16 %v360
    %v1344 = vunpack.c.l.b16 %v361
    %v1345 = vunpack.c.h.b16 %v361
    %v1346 = vunpack.c.l.b16 %v362
    %v1347 = vunpack.c.h.b16 %v362
    %v1348 = vunpack.c.l.b16 %v363
    %v1349 = vunpack.c.l.b16 %v364
    %v1350 = vunpack.c.h.b16 %v364
    %v1351 = vunpack.c.l.b16 %v365
    %v1352 = vunpack.c.h.b16 %v365
    %v1353 = vunpack.c.l.b16 %v366
    %v1354 = vunpack.c.l.b16 %v367
    %v1355 = vunpack.c.h.b16 %v367
    %v1356 = vunpack.c.l.b16 %v368
    %v1357 = vunpack.c.h.b16 %v368
    %v1358 = vunpack.c.l.b16 %v369
    %v1359 = vunpack.c.l.b16 %v370
    %v1360 = vunpack.c.h.b16 %v370
    %v1361 = vunpack.c.l.b16 %v371
    %v1362 = vunpack.c.h.b16 %v371
    %v1363 = vunpack.c.l.b16 %v372
    %v1364 = vunpack.c.l.b16 %v373
    %v1365 = vunpack.c.h.b16 %v373
    %v1366 = vunpack.c.l.b16 %v374
    %v1367 = vunpack.c.h.b16 %v374
    %v1368 = vunpack.c.l.b16 %v375
    %v1369 = vunpack.c.l.b16 %v376
    %v1370 = vunpack.c.h.b16 %v376
    %v1371 = vunpack.c.l.b16 %v377
    %v1372 = vunpack.c.h.b16 %v377
    %v1373 = vunpack.c.l.b16 %v378
    %v1374 = vunpack.c.l.b16 %v379
    %v1375 = vunpack.c.h.b16 %v379
    %v1376 = vunpack.c.l.b16 %v380
    %v1377 = vunpack.c.h.b16 %v380
    %v1378 = vunpack.c.l.b16 %v381
    %v1379 = vunpack.c.l.b16 %v382
    %v1380 = vunpack.c.h.b16 %v382
    %v1381 = vunpack.c.l.b16 %v383
    %v1382 = vunpack.c.h.b16 %v383
    %v1383 = vunpack.c.l.b16 %v384
    %v1384 = vunpack.c.l.b16 %v385
    %v1385 = vunpack.c.h.b16 %v385
    %v1386 = vunpack.c.l.b16 %v386
    %v1387 = vunpack.c.h.b16 %v386
    %v1388 = vunpack.c.l.b16 %v387
    %v1389 = vunpack.c.l.b16 %v388
    %v1390 = vunpack.c.h.b16 %v388
    %v1391 = vunpack.c.l.b16 %v389
    %v1392 = vunpack.c.h.b16 %v389
    %v1393 = vunpack.c.l.b16 %v390
    %v1394 = vunpack.c.l.b16 %v391
    %v1395 = vunpack.c.h.b16 %v391
    %v1396 = vunpack.c.l.b16 %v392
    %v1397 = vunpack.c.h.b16 %v392
    %v1398 = vunpack.c.l.b16 %v393
    %v1399 = vunpack.c.l.b16 %v394
    %v1400 = vunpack.c.h.b16 %v394
    %v1401 = vunpack.c.l.b16 %v395
    %v1402 = vunpack.c.h.b16 %v395
    %v1403 = vunpack.c.l.b16 %v396
    %v1404 = vunpack.c.l.b16 %v397
    %v1405 = vunpack.c.h.b16 %v397
    %v1406 = vunpack.c.l.b16 %v398
    %v1407 = vunpack.c.h.b16 %v398
    %v1408 = vunpack.c.l.b16 %v399
    %v1409 = vunpack.c.l.b16 %v400
    %v1410 = vunpack.c.h.b16 %v400
    %v1411 = vunpack.c.l.b16 %v401
    %v1412 = vunpack.c.h.b16 %v401
    %v1413 = vunpack.c.l.b16 %v402
    %v1414 = vunpack.c.l.b16 %v403
    %v1415 = vunpack.c.h.b16 %v403
    %v1416 = vunpack.c.l.b16 %v404
    %v1417 = vunpack.c.h.b16 %v404
    %v1418 = vunpack.c.l.b16 %v405
    %v1419 = vunpack.c.l.b16 %v406
    %v1420 = vunpack.c.h.b16 %v406
    %v1421 = vunpack.c.l.b16 %v407
    %v1422 = vunpack.c.h.b16 %v407
    %v1423 = vunpack.c.l.b16 %v408
    %v1424 = vunpack.c.l.b16 %v409
    %v1425 = vunpack.c.h.b16 %v409
    %v1426 = vunpack.c.l.b16 %v410
    %v1427 = vunpack.c.h.b16 %v410
    %v1428 = vunpack.c.l.b16 %v411
    %v1429 = vunpack.c.l.b16 %v412
    %v1430 = vunpack.c.h.b16 %v412
    %v1431 = vunpack.c.l.b16 %v413
    %v1432 = vunpack.c.h.b16 %v413
    %v1433 = vunpack.c.l.b16 %v414
    %v1434 = vunpack.c.l.b16 %v415
    %v1435 = vunpack.c.h.b16 %v415
    %v1436 = vunpack.c.l.b16 %v416
    %v1437 = vunpack.c.h.b16 %v416
    %v1438 = vunpack.c.l.b16 %v417
    %v1439 = vunpack.c.l.b16 %v418
    %v1440 = vunpack.c.h.b16 %v418
    %v1441 = vunpack.c.l.b16 %v419
    %v1442 = vunpack.c.h.b16 %v419
    %v1443 = vunpack.c.l.b16 %v420
    %v1444 = vunpack.c.l.b16 %v421
    %v1445 = vunpack.c.h.b16 %v421
    %v1446 = vunpack.c.l.b16 %v422
    %v1447 = vunpack.c.h.b16 %v422
    %v1448 = vunpack.c.l.b16 %v423
    %v1449 = vunpack.c.l.b16 %v424
    %v1450 = vunpack.c.h.b16 %v424
    %v1451 = vunpack.c.l.b16 %v425
    %v1452 = vunpack.c.h.b16 %v425
    %v1453 = vunpack.c.l.b16 %v426
    %v1454 = vunpack.c.l.b16 %v427
    %v1455 = vunpack.c.h.b16 %v427
    %v1456 = vunpack.c.l.b16 %v428
    %v1457 = vunpack.c.h.b16 %v428
    %v1458 = vunpack.c.l.b16 %v429
    %v1459 = vunpack.c.l.b16 %v430
    %v1460 = vunpack.c.h.b16 %v430
    %v1461 = vunpack.c.l.b16 %v431
    %v1462 = vunpack.c.h.b16 %v431
    %v1463 = vunpack.c.l.b16 %v432
    %v1464 = vunpack.c.l.b16 %v433
    %v1465 = vunpack.c.h.b16 %v433
    %v1466 = vunpack.c.l.b16 %v434
    %v1467 = vunpack.c.h.b16 %v434
    %v1468 = vunpack.c.l.b16 %v435
    %v1469 = vunpack.c.l.b16 %v436
    %v1470 = vunpack.c.h.b16 %v436
    %v1471 = vunpack.c.l.b16 %v437
    %v1472 = vunpack.c.h.b16 %v437
    %v1473 = vunpack.c.l.b16 %v438
    %v1474 = vunpack.c.l.b16 %v439
    %v1475 = vunpack.c.h.b16 %v439
    %v1476 = vunpack.c.l.b16 %v440
    %v1477 = vunpack.c.h.b16 %v440
    %v1478 = vunpack.c.l.b16 %v441
    %v1479 = vunpack.c.l.b16 %v442
    %v1480 = vunpack.c.h.b16 %v442
    %v1481 = vunpack.c.l.b16 %v443
    %v1482 = vunpack.c.h.b16 %v443
    %v1483 = vunpack.c.l.b16 %v444
    %v1484 = vunpack.c.l.b16 %v445
    %v1485 = vunpack.c.h.b16 %v445
    %v1486 = vunpack.c.l.b16 %v446
    %v1487 = vunpack.c.h.b16 %v446
    %v1488 = vunpack.c.l.b16 %v447
    %v1489 = vunpack.c.l.b16 %v448
    %v1490 = vunpack.c.h.b16 %v448
    %v1491 = vunpack.c.l.b16 %v449
    %v1492 = vunpack.c.h.b16 %v449
    %v1493 = vunpack.c.l.b16 %v450
    %v1494 = vunpack.c.l.b16 %v451
    %v1495 = vunpack.c.h.b16 %v451
    %v1496 = vunpack.c.l.b16 %v452
    %v1497 = vunpack.c.h.b16 %v452
    %v1498 = vunpack.c.l.b16 %v453
    %v1499 = vunpack.c.l.b16 %v454
    %v1500 = vunpack.c.h.b16 %v454
    %v1501 = vunpack.c.l.b16 %v455
    %v1502 = vunpack.c.h.b16 %v455
    %v1503 = vunpack.c.l.b16 %v456
    %v1504 = vunpack.c.l.b16 %v457
    %v1505 = vunpack.c.h.b16 %v457
    %v1506 = vunpack.c.l.b16 %v458
    %v1507 = vunpack.c.h.b16 %v458
    %v1508 = vunpack.c.l.b16 %v459
    %v1509 = vunpack.c.l.b16 %v460
    %v1510 = vunpack.c.h.b16 %v460
    %v1511 = vunpack.c.l.b16 %v461
    %v1512 = vunpack.c.h.b16 %v461
    %v1513 = vunpack.c.l.b16 %v462
    %v1514 = vpack.c.b16 %v879, %v874
    %v1515 = vpack.c.b16 %v880, %v875
    %v1516 = vpack.c.b16 %v881, %v876
    %v1517 = vpack.c.b16 %v882, %v877
    %v1518 = vpack.c.b16 %v883, %v878
    %v1519 = vpack.c.b16 %v889, %v884
    %v1520 = vpack.c.b16 %v890, %v885
    %v1521 = vpack.c.b16 %v891, %v886
    %v1522 = vpack.c.b16 %v892, %v887
    %v1523 = vpack.c.b16 %v893, %v888
    %v1524 = vpack.c.b16 %v899, %v894
    %v1525 = vpack.c.b16 %v900, %v895
    %v1526 = vpack.c.b16 %v901, %v896
    %v1527 = vpack.c.b16 %v902, %v897
    %v1528 = vpack.c.b16 %v903, %v898
    %v1529 = vpack.c.b16 %v909, %v904
    %v1530 = vpack.c.b16 %v910, %v905
    %v1531 = vpack.c.b16 %v911, %v906
    %v1532 = vpack.c.b16 %v912, %v907
    %v1533 = vpack.c.b16 %v913, %v908
    %v1534 = vpack.c.b16 %v919, %v914
    %v1535 = vpack.c.b16 %v920, %v915
    %v1536 = vpack.c.b16 %v921, %v916
    %v1537 = vpack.c.b16 %v922, %v917
    %v1538 = vpack.c.b16 %v923, %v918
    %v1539 = vpack.c.b16 %v929, %v924
    %v1540 = vpack.c.b16 %v930, %v925
    %v1541 = vpack.c.b16 %v931, %v926
    %v1542 = vpack.c.b16 %v932, %v927
    %v1543 = vpack.c.b16 %v933, %v928
    %v1544 = vpack.c.b16 %v939, %v934
    %v1545 = vpack.c.b16 %v940, %v935
    %v1546 = vpack.c.b16 %v941, %v936
    %v1547 = vpack.c.b16 %v942, %v937
    %v1548 = vpack.c.b16 %v943, %v938
    %v1549 = vpack.c.b16 %v949, %v944
    %v1550 = vpack.c.b16 %v950, %v945
    %v1551 = vpack.c.b16 %v951, %v946
    %v1552 = vpack.c.b16 %v952, %v947
    %v1553 = vpack.c.b16 %v953, %v948
    %v1554 = vpack.c.b16 %v959, %v954
    %v1555 = vpack.c.b16 %v960, %v955
    %v1556 = vpack.c.b16 %v961, %v956
    %v1557 = vpack.c.b16 %v962, %v957
    %v1558 = vpack.c.b16 %v963, %v958
    %v1559 = vpack.c.b16 %v969, %v964
    %v1560 = vpack.c.b16 %v970, %v965
    %v1561 = vpack.c.b16 %v971, %v966
    %v1562 = vpack.c.b16 %v972, %v967
    %v1563 = vpack.c.b16 %v973, %v968
    %v1564 = vpack.c.b16 %v979, %v974
    %v1565 = vpack.c.b16 %v980, %v975
    %v1566 = vpack.c.b16 %v981, %v976
    %v1567 = vpack.c.b16 %v982, %v977
    %v1568 = vpack.c.b16 %v983, %v978
    %v1569 = vpack.c.b16 %v989, %v984
    %v1570 = vpack.c.b16 %v990, %v985
    %v1571 = vpack.c.b16 %v991, %v986
    %v1572 = vpack.c.b16 %v992, %v987
    %v1573 = vpack.c.b16 %v993, %v988
    %v1574 = vpack.c.b16 %v999, %v994
    %v1575 = vpack.c.b16 %v1000, %v995
    %v1576 = vpack.c.b16 %v1001, %v996
    %v1577 = vpack.c.b16 %v1002, %v997
    %v1578 = vpack.c.b16 %v1003, %v998
    %v1579 = vpack.c.b16 %v1009, %v1004
    %v1580 = vpack.c.b16 %v1010, %v1005
    %v1581 = vpack.c.b16 %v1011, %v1006
    %v1582 = vpack.c.b16 %v1012, %v1007
    %v1583 = vpack.c.b16 %v1013, %v1008
    %v1584 = vpack.c.b16 %v1019, %v1014
    %v1585 = vpack.c.b16 %v1020, %v1015
    %v1586 = vpack.c.b16 %v1021, %v1016
    %v1587 = vpack.c.b16 %v1022, %v1017
    %v1588 = vpack.c.b16 %v1023, %v1018
    %v1589 = vpack.c.b16 %v1029, %v1024
    %v1590 = vpack.c.b16 %v1030, %v1025
    %v1591 = vpack.c.b16 %v1031, %v1026
    %v1592 = vpack.c.b16 %v1032, %v1027
    %v1593 = vpack.c.b16 %v1033, %v1028
    %v1594 = vpack.c.b16 %v1039, %v1034
    %v1595 = vpack.c.b16 %v1040, %v1035
    %v1596 = vpack.c.b16 %v1041, %v1036
    %v1597 = vpack.c.b16 %v1042, %v1037
    %v1598 = vpack.c.b16 %v1043, %v1038
    %v1599 = vpack.c.b16 %v1049, %v1044
    %v1600 = vpack.c.b16 %v1050, %v1045
    %v1601 = vpack.c.b16 %v1051, %v1046
    %v1602 = vpack.c.b16 %v1052, %v1047
    %v1603 = vpack.c.b16 %v1053, %v1048
    %v1604 = vpack.c.b16 %v1059, %v1054
    %v1605 = vpack.c.b16 %v1060, %v1055
    %v1606 = vpack.c.b16 %v1061, %v1056
    %v1607 = vpack.c.b16 %v1062, %v1057
    %v1608 = vpack.c.b16 %v1063, %v1058
    %v1609 = vpack.c.b16 %v1069, %v1064
    %v1610 = vpack.c.b16 %v1070, %v1065
    %v1611 = vpack.c.b16 %v1071, %v1066
    %v1612 = vpack.c.b16 %v1072, %v1067
    %v1613 = vpack.c.b16 %v1073, %v1068
    %v1614 = vpack.c.b16 %v1079, %v1074
    %v1615 = vpack.c.b16 %v1080, %v1075
    %v1616 = vpack.c.b16 %v1081, %v1076
    %v1617 = vpack.c.b16 %v1082, %v1077
    %v1618 = vpack.c.b16 %v1083, %v1078
    %v1619 = vpack.c.b16 %v1089, %v1084
    %v1620 = vpack.c.b16 %v1090, %v1085
    %v1621 = vpack.c.b16 %v1091, %v1086
    %v1622 = vpack.c.b16 %v1092, %v1087
    %v1623 = vpack.c.b16 %v1093, %v1088
    %v1624 = vpack.c.b16 %v1099, %v1094
    %v1625 = vpack.c.b16 %v1100, %v1095
    %v1626 = vpack.c.b16 %v1101, %v1096
    %v1627 = vpack.c.b16 %v1102, %v1097
    %v1628 = vpack.c.b16 %v1103, %v1098
    %v1629 = vpack.c.b16 %v1109, %v1104
    %v1630 = vpack.c.b16 %v1110, %v1105
    %v1631 = vpack.c.b16 %v1111, %v1106
    %v1632 = vpack.c.b16 %v1112, %v1107
    %v1633 = vpack.c.b16 %v1113, %v1108
    %v1634 = vpack.c.b16 %v1119, %v1114
    %v1635 = vpack.c.b16 %v1120, %v1115
    %v1636 = vpack.c.b16 %v1121, %v1116
    %v1637 = vpack.c.b16 %v1122, %v1117
    %v1638 = vpack.c.b16 %v1123, %v1118
    %v1639 = vpack.c.b16 %v1129, %v1124
    %v1640 = vpack.c.b16 %v1130, %v1125
    %v1641 = vpack.c.b16 %v1131, %v1126
    %v1642 = vpack.c.b16 %v1132, %v1127
    %v1643 = vpack.c.b16 %v1133, %v1128
    %v1644 = vpack.c.b16 %v1139, %v1134
    %v1645 = vpack.c.b16 %v1140, %v1135
    %v1646 = vpack.c.b16 %v1141, %v1136
    %v1647 = vpack.c.b16 %v1142, %v1137
    %v1648 = vpack.c.b16 %v1143, %v1138
    %v1649 = vpack.c.b16 %v1149, %v1144
    %v1650 = vpack.c.b16 %v1150, %v1145
    %v1651 = vpack.c.b16 %v1151, %v1146
    %v1652 = vpack.c.b16 %v1152, %v1147
    %v1653 = vpack.c.b16 %v1153, %v1148
    %v1654 = vpack.c.b16 %v1159, %v1154
    %v1655 = vpack.c.b16 %v1160, %v1155
    %v1656 = vpack.c.b16 %v1161, %v1156
    %v1657 = vpack.c.b16 %v1162, %v1157
    %v1658 = vpack.c.b16 %v1163, %v1158
    %v1659 = vpack.c.b16 %v1169, %v1164
    %v1660 = vpack.c.b16 %v1170, %v1165
    %v1661 = vpack.c.b16 %v1171, %v1166
    %v1662 = vpack.c.b16 %v1172, %v1167
    %v1663 = vpack.c.b16 %v1173, %v1168
    %v1664 = vpack.c.b16 %v1179, %v1174
    %v1665 = vpack.c.b16 %v1180, %v1175
    %v1666 = vpack.c.b16 %v1181, %v1176
    %v1667 = vpack.c.b16 %v1182, %v1177
    %v1668 = vpack.c.b16 %v1183, %v1178
    %v1669 = vpack.c.b16 %v1189, %v1184
    %v1670 = vpack.c.b16 %v1190, %v1185
    %v1671 = vpack.c.b16 %v1191, %v1186
    %v1672 = vpack.c.b16 %v1192, %v1187
    %v1673 = vpack.c.b16 %v1193, %v1188
    %v1674 = vpack.c.b16 %v1199, %v1194
    %v1675 = vpack.c.b16 %v1200, %v1195
    %v1676 = vpack.c.b16 %v1201, %v1196
    %v1677 = vpack.c.b16 %v1202, %v1197
    %v1678 = vpack.c.b16 %v1203, %v1198
    %v1679 = vpack.c.b16 %v1209, %v1204
    %v1680 = vpack.c.b16 %v1210, %v1205
    %v1681 = vpack.c.b16 %v1211, %v1206
    %v1682 = vpack.c.b16 %v1212, %v1207
    %v1683 = vpack.c.b16 %v1213, %v1208
    %v1684 = vpack.c.b16 %v1219, %v1214
    %v1685 = vpack.c.b16 %v1220, %v1215
    %v1686 = vpack.c.b16 %v1221, %v1216
    %v1687 = vpack.c.b16 %v1222, %v1217
    %v1688 = vpack.c.b16 %v1223, %v1218
    %v1689 = vpack.c.b16 %v1229, %v1224
    %v1690 = vpack.c.b16 %v1230, %v1225
    %v1691 = vpack.c.b16 %v1231, %v1226
    %v1692 = vpack.c.b16 %v1232, %v1227
    %v1693 = vpack.c.b16 %v1233, %v1228
    %v1694 = vpack.c.b16 %v1239, %v1234
    %v1695 = vpack.c.b16 %v1240, %v1235
    %v1696 = vpack.c.b16 %v1241, %v1236
    %v1697 = vpack.c.b16 %v1242, %v1237
    %v1698 = vpack.c.b16 %v1243, %v1238
    %v1699 = vpack.c.b16 %v1249, %v1244
    %v1700 = vpack.c.b16 %v1250, %v1245
    %v1701 = vpack.c.b16 %v1251, %v1246
    %v1702 = vpack.c.b16 %v1252, %v1247
    %v1703 = vpack.c.b16 %v1253, %v1248
    %v1704 = vpack.c.b16 %v1259, %v1254
    %v1705 = vpack.c.b16 %v1260, %v1255
    %v1706 = vpack.c.b16 %v1261, %v1256
    %v1707 = vpack.c.b16 %v1262, %v1257
    %v1708 = vpack.c.b16 %v1263, %v1258
    %v1709 = vpack.c.b16 %v1269, %v1264
    %v1710 = vpack.c.b16 %v1270, %v1265
    %v1711 = vpack.c.b16 %v1271, %v1266
    %v1712 = vpack.c.b16 %v1272, %v1267
    %v1713 = vpack.c.b16 %v1273, %v1268
    %v1714 = vpack.c.b16 %v1279, %v1274
    %v1715 = vpack.c.b16 %v1280, %v1275
    %v1716 = vpack.c.b16 %v1281, %v1276
    %v1717 = vpack.c.b16 %v1282, %v1277
    %v1718 = vpack.c.b16 %v1283, %v1278
    %v1719 = vpack.c.b16 %v1289, %v1284
    %v1720 = vpack.c.b16 %v1290, %v1285
    %v1721 = vpack.c.b16 %v1291, %v1286
    %v1722 = vpack.c.b16 %v1292, %v1287
    %v1723 = vpack.c.b16 %v1293, %v1288
    %v1724 = vpack.c.b16 %v1299, %v1294
    %v1725 = vpack.c.b16 %v1300, %v1295
    %v1726 = vpack.c.b16 %v1301, %v1296
    %v1727 = vpack.c.b16 %v1302, %v1297
    %v1728 = vpack.c.b16 %v1303, %v1298
    %v1729 = vpack.c.b16 %v1309, %v1304
    %v1730 = vpack.c.b16 %v1310, %v1305
    %v1731 = vpack.c.b16 %v1311, %v1306
    %v1732 = vpack.c.b16 %v1312, %v1307
    %v1733 = vpack.c.b16 %v1313, %v1308
    %v1734 = vpack.c.b16 %v1319, %v1314
    %v1735 = vpack.c.b16 %v1320, %v1315
    %v1736 = vpack.c.b16 %v1321, %v1316
    %v1737 = vpack.c.b16 %v1322, %v1317
    %v1738 = vpack.c.b16 %v1323, %v1318
    %v1739 = vpack.c.b16 %v1329, %v1324
    %v1740 = vpack.c.b16 %v1330, %v1325
    %v1741 = vpack.c.b16 %v1331, %v1326
    %v1742 = vpack.c.b16 %v1332, %v1327
    %v1743 = vpack.c.b16 %v1333, %v1328
    %v1744 = vpack.c.b16 %v1339, %v1334
    %v1745 = vpack.c.b16 %v1340, %v1335
    %v1746 = vpack.c.b16 %v1341, %v1336
    %v1747 = vpack.c.b16 %v1342, %v1337
    %v1748 = vpack.c.b16 %v1343, %v1338
    %v1749 = vpack.c.b16 %v1349, %v1344
    %v1750 = vpack.c.b16 %v1350, %v1345
    %v1751 = vpack.c.b16 %v1351, %v1346
    %v1752 = vpack.c.b16 %v1352, %v1347
    %v1753 = vpack.c.b16 %v1353, %v1348
    %v1754 = vpack.c.b16 %v1359, %v1354
    %v1755 = vpack.c.b16 %v1360, %v1355
    %v1756 = vpack.c.b16 %v1361, %v1356
    %v1757 = vpack.c.b16 %v1362, %v1357
    %v1758 = vpack.c.b16 %v1363, %v1358
    %v1759 = vpack.c.b16 %v1369, %v1364
    %v1760 = vpack.c.b16 %v1370, %v1365
    %v1761 = vpack.c.b16 %v1371, %v1366
    %v1762 = vpack.c.b16 %v1372, %v1367
    %v1763 = vpack.c.b16 %v1373, %v1368
    %v1764 = vpack.c.b16 %v1379, %v1374
    %v1765 = vpack.c.b16 %v1380, %v1375
    %v1766 = vpack.c.b16 %v1381, %v1376
    %v1767 = vpack.c.b16 %v1382, %v1377
    %v1768 = vpack.c.b16 %v1383, %v1378
    %v1769 = vpack.c.b16 %v1389, %v1384
    %v1770 = vpack.c.b16 %v1390, %v1385
    %v1771 = vpack.c.b16 %v1391, %v1386
    %v1772 = vpack.c.b16 %v1392, %v1387
    %v1773 = vpack.c.b16 %v1393, %v1388
    %v1774 = vpack.c.b16 %v1399, %v1394
    %v1775 = vpack.c.b16 %v1400, %v1395
    %v1776 = vpack.c.b16 %v1401, %v1396
    %v1777 = vpack.c.b16 %v1402, %v1397
    %v1778 = vpack.c.b16 %v1403, %v1398
    %v1779 = vpack.c.b16 %v1409, %v1404
    %v1780 = vpack.c.b16 %v1410, %v1405
    %v1781 = vpack.c.b16 %v1411, %v1406
    %v1782 = vpack.c.b16 %v1412, %v1407
    %v1783 = vpack.c.b16 %v1413, %v1408
    %v1784 = vpack.c.b16 %v1419, %v1414
    %v1785 = vpack.c.b16 %v1420, %v1415
    %v1786 = vpack.c.b16 %v1421, %v1416
    %v1787 = vpack.c.b16 %v1422, %v1417
    %v1788 = vpack.c.b16 %v1423, %v1418
    %v1789 = vpack.c.b16 %v1429, %v1424
    %v1790 = vpack.c.b16 %v1430, %v1425
    %v1791 = vpack.c.b16 %v1431, %v1426
    %v1792 = vpack.c.b16 %v1432, %v1427
    %v1793 = vpack.c.b16 %v1433, %v1428
    %v1794 = vpack.c.b16 %v1439, %v1434
    %v1795 = vpack.c.b16 %v1440, %v1435
    %v1796 = vpack.c.b16 %v1441, %v1436
    %v1797 = vpack.c.b16 %v1442, %v1437
    %v1798 = vpack.c.b16 %v1443, %v1438
    %v1799 = vpack.c.b16 %v1449, %v1444
    %v1800 = vpack.c.b16 %v1450, %v1445
    %v1801 = vpack.c.b16 %v1451, %v1446
    %v1802 = vpack.c.b16 %v1452, %v1447
    %v1803 = vpack.c.b16 %v1453, %v1448
    %v1804 = vpack.c.b16 %v1459, %v1454
    %v1805 = vpack.c.b16 %v1460, %v1455
    %v1806 = vpack.c.b16 %v1461, %v1456
    %v1807 = vpack.c.b16 %v1462, %v1457
    %v1808 = vpack.c.b16 %v1463, %v1458
    %v1809 = vpack.c.b16 %v1469, %v1464
    %v1810 = vpack.c.b16 %v1470, %v1465
    %v1811 = vpack.c.b16 %v1471, %v1466
    %v1812 = vpack.c.b16 %v1472, %v1467
    %v1813 = vpack.c.b16 %v1473, %v1468
    %v1814 = vpack.c.b16 %v1479, %v1474
    %v1815 = vpack.c.b16 %v1480, %v1475
    %v1816 = vpack.c.b16 %v1481, %v1476
    %v1817 = vpack.c.b16 %v1482, %v1477
    %v1818 = vpack.c.b16 %v1483, %v1478
    %v1819 = vpack.c.b16 %v1489, %v1484
    %v1820 = vpack.c.b16 %v1490, %v1485
    %v1821 = vpack.c.b16 %v1491, %v1486
    %v1822 = vpack.c.b16 %v1492, %v1487
    %v1823 = vpack.c.b16 %v1493, %v1488
    %v1824 = vpack.c.b16 %v1499, %v1494
    %v1825 = vpack.c.b16 %v1500, %v1495
    %v1826 = vpack.c.b16 %v1501, %v1496
    %v1827 = vpack.c.b16 %v1502, %v1497
    %v1828 = vpack.c.b16 %v1503, %v1498
    %v1829 = vpack.c.b16 %v1509, %v1504
    %v1830 = vpack.c.b16 %v1510, %v1505
    %v1831 = vpack.c.b16 %v1511, %v1506
    %v1832 = vpack.c.b16 %v1512, %v1507
    %v1833 = vpack.c.b16 %v1513, %v1508
    %2154 = vmatprep.subr.bf16.mxu0 %v1515
    %2155 = vmatpush1.bf16.msra.mxu0 %v1514
    %2156 = vmatprep.subr.bf16.mxu0 %v1520
    %2157 = vmatpush1.bf16.msra.mxu0 %v1519
    %2158 = vmatprep.subr.bf16.mxu0 %v1525
    %2159 = vmatpush1.bf16.msra.mxu0 %v1524
    %2160 = vmatprep.subr.bf16.mxu0 %v1530
    %2161 = vmatpush1.bf16.msra.mxu0 %v1529
    %2162 = vmatprep.subr.bf16.mxu0 %v1535
    %2163 = vmatpush1.bf16.msra.mxu0 %v1534
    %2164 = vmatprep.subr.bf16.mxu0 %v1540
    %2165 = vmatpush1.bf16.msra.mxu0 %v1539
    %2166 = vmatprep.subr.bf16.mxu0 %v1545
    %2167 = vmatpush1.bf16.msra.mxu0 %v1544
    %2168 = vmatprep.subr.bf16.mxu0 %v1550
    %2169 = vmatpush1.bf16.msra.mxu0 %v1549
    %2170 = vmatprep.subr.bf16.mxu0 %v1555
    %2171 = vmatpush1.bf16.msra.mxu0 %v1554
    %2172 = vmatprep.subr.bf16.mxu0 %v1560
    %2173 = vmatpush1.bf16.msra.mxu0 %v1559
    %2174 = vmatprep.subr.bf16.mxu0 %v1565
    %2175 = vmatpush1.bf16.msra.mxu0 %v1564
    %2176 = vmatprep.subr.bf16.mxu0 %v1570
    %2177 = vmatpush1.bf16.msra.mxu0 %v1569
    %2178 = vmatprep.subr.bf16.mxu0 %v1575
    %2179 = vmatpush1.bf16.msra.mxu0 %v1574
    %2180 = vmatprep.subr.bf16.mxu0 %v1580
    %2181 = vmatpush1.bf16.msra.mxu0 %v1579
    %2182 = vmatprep.subr.bf16.mxu0 %v1585
    %2183 = vmatpush1.bf16.msra.mxu0 %v1584
    %2184 = vmatprep.subr.bf16.mxu0 %v1590
    %2185 = vmatpush1.bf16.msra.mxu0 %v1589
    %2186 = vmatprep.mubr.bf16.mxu0 %v72
    %2187 = vmatmul.mubr.bf16.gmra.mrb[0].mxu0 %v71
    %v2188 = vpop.f32.mrb[0].mxu0
    %v2189 = vadd.f32 %v468, %v2188
    %v2190 = vpop.f32.mrb[0].mxu0
    %v2191 = vadd.f32 %v472, %v2190
    %v2192 = vpop.f32.mrb[0].mxu0
    %v2193 = vadd.f32 %v468, %v2192
    %v2194 = vpop.f32.mrb[0].mxu0
    %v2195 = vadd.f32 %v472, %v2194
    %2196 = vdwg.mxu0
    %2197 = vmatprep.subr.bf16.mxu0 %v1595
    %2198 = vmatpush1.bf16.msra.mxu0 %v1594
    %2199 = vmatprep.subr.bf16.mxu0 %v1600
    %2200 = vmatpush1.bf16.msra.mxu0 %v1599
    %2201 = vmatprep.subr.bf16.mxu0 %v1605
    %2202 = vmatpush1.bf16.msra.mxu0 %v1604
    %2203 = vmatprep.subr.bf16.mxu0 %v1610
    %2204 = vmatpush1.bf16.msra.mxu0 %v1609
    %2205 = vmatprep.subr.bf16.mxu0 %v1615
    %2206 = vmatpush1.bf16.msra.mxu0 %v1614
    %2207 = vmatprep.subr.bf16.mxu0 %v1620
    %2208 = vmatpush1.bf16.msra.mxu0 %v1619
    %2209 = vmatprep.subr.bf16.mxu0 %v1625
    %2210 = vmatpush1.bf16.msra.mxu0 %v1624
    %2211 = vmatprep.subr.bf16.mxu0 %v1630
    %2212 = vmatpush1.bf16.msra.mxu0 %v1629
    %2213 = vmatprep.subr.bf16.mxu0 %v1635
    %2214 = vmatpush1.bf16.msra.mxu0 %v1634
    %2215 = vmatprep.subr.bf16.mxu0 %v1640
    %2216 = vmatpush1.bf16.msra.mxu0 %v1639
    %2217 = vmatprep.subr.bf16.mxu0 %v1645
    %2218 = vmatpush1.bf16.msra.mxu0 %v1644
    %2219 = vmatprep.subr.bf16.mxu0 %v1650
    %2220 = vmatpush1.bf16.msra.mxu0 %v1649
    %2221 = vmatprep.subr.bf16.mxu0 %v1655
    %2222 = vmatpush1.bf16.msra.mxu0 %v1654
    %2223 = vmatprep.subr.bf16.mxu0 %v1660
    %2224 = vmatpush1.bf16.msra.mxu0 %v1659
    %2225 = vmatprep.subr.bf16.mxu0 %v1665
    %2226 = vmatpush1.bf16.msra.mxu0 %v1664
    %2227 = vmatprep.subr.bf16.mxu0 %v1670
    %2228 = vmatpush1.bf16.msra.mxu0 %v1669
    %2229 = vmatprep.mubr.bf16.mxu0 %v74
    %2230 = vmatmul.mubr.bf16.gmra.mrb[0].mxu0 %v73
    %v2231 = vpop.f32.mrb[0].mxu0
    %v2232 = vadd.f32 %v2189, %v2231
    %v2233 = vpop.f32.mrb[0].mxu0
    %v2234 = vadd.f32 %v2191, %v2233
    %v2235 = vpop.f32.mrb[0].mxu0
    %v2236 = vadd.f32 %v2193, %v2235
    %v2237 = vpop.f32.mrb[0].mxu0
    %v2238 = vadd.f32 %v2195, %v2237
    %2239 = vdwg.mxu0
    %2240 = vmatprep.subr.bf16.mxu0 %v1675
    %2241 = vmatpush1.bf16.msra.mxu0 %v1674
    %2242 = vmatprep.subr.bf16.mxu0 %v1680
    %2243 = vmatpush1.bf16.msra.mxu0 %v1679
    %2244 = vmatprep.subr.bf16.mxu0 %v1685
    %2245 = vmatpush1.bf16.msra.mxu0 %v1684
    %2246 = vmatprep.subr.bf16.mxu0 %v1690
    %2247 = vmatpush1.bf16.msra.mxu0 %v1689
    %2248 = vmatprep.subr.bf16.mxu0 %v1695
    %2249 = vmatpush1.bf16.msra.mxu0 %v1694
    %2250 = vmatprep.subr.bf16.mxu0 %v1700
    %2251 = vmatpush1.bf16.msra.mxu0 %v1699
    %2252 = vmatprep.subr.bf16.mxu0 %v1705
    %2253 = vmatpush1.bf16.msra.mxu0 %v1704
    %2254 = vmatprep.subr.bf16.mxu0 %v1710
    %2255 = vmatpush1.bf16.msra.mxu0 %v1709
    %2256 = vmatprep.subr.bf16.mxu0 %v1715
    %2257 = vmatpush1.bf16.msra.mxu0 %v1714
    %2258 = vmatprep.subr.bf16.mxu0 %v1720
    %2259 = vmatpush1.bf16.msra.mxu0 %v1719
    %2260 = vmatprep.subr.bf16.mxu0 %v1725
    %2261 = vmatpush1.bf16.msra.mxu0 %v1724
    %2262 = vmatprep.subr.bf16.mxu0 %v1730
    %2263 = vmatpush1.bf16.msra.mxu0 %v1729
    %2264 = vmatprep.subr.bf16.mxu0 %v1735
    %2265 = vmatpush1.bf16.msra.mxu0 %v1734
    %2266 = vmatprep.subr.bf16.mxu0 %v1740
    %2267 = vmatpush1.bf16.msra.mxu0 %v1739
    %2268 = vmatprep.subr.bf16.mxu0 %v1745
    %2269 = vmatpush1.bf16.msra.mxu0 %v1744
    %2270 = vmatprep.subr.bf16.mxu0 %v1750
    %2271 = vmatpush1.bf16.msra.mxu0 %v1749
    %2272 = vmatprep.mubr.bf16.mxu0 %v76
    %2273 = vmatmul.mubr.bf16.gmra.mrb[0].mxu0 %v75
    %v2274 = vpop.f32.mrb[0].mxu0
    %v2275 = vadd.f32 %v2232, %v2274
    %v2276 = vpop.f32.mrb[0].mxu0
    %v2277 = vadd.f32 %v2234, %v2276
    %v2278 = vpop.f32.mrb[0].mxu0
    %v2279 = vadd.f32 %v2236, %v2278
    %v2280 = vpop.f32.mrb[0].mxu0
    %v2281 = vadd.f32 %v2238, %v2280
    %2282 = vdwg.mxu0
    %2283 = vmatprep.subr.bf16.mxu0 %v1755
    %2284 = vmatpush1.bf16.msra.mxu0 %v1754
    %2285 = vmatprep.subr.bf16.mxu0 %v1760
    %2286 = vmatpush1.bf16.msra.mxu0 %v1759
    %2287 = vmatprep.subr.bf16.mxu0 %v1765
    %2288 = vmatpush1.bf16.msra.mxu0 %v1764
    %2289 = vmatprep.subr.bf16.mxu0 %v1770
    %2290 = vmatpush1.bf16.msra.mxu0 %v1769
    %2291 = vmatprep.subr.bf16.mxu0 %v1775
    %2292 = vmatpush1.bf16.msra.mxu0 %v1774
    %2293 = vmatprep.subr.bf16.mxu0 %v1780
    %2294 = vmatpush1.bf16.msra.mxu0 %v1779
    %2295 = vmatprep.subr.bf16.mxu0 %v1785
    %2296 = vmatpush1.bf16.msra.mxu0 %v1784
    %2297 = vmatprep.subr.bf16.mxu0 %v1790
    %2298 = vmatpush1.bf16.msra.mxu0 %v1789
    %2299 = vmatprep.subr.bf16.mxu0 %v1795
    %2300 = vmatpush1.bf16.msra.mxu0 %v1794
    %2301 = vmatprep.subr.bf16.mxu0 %v1800
    %2302 = vmatpush1.bf16.msra.mxu0 %v1799
    %2303 = vmatprep.subr.bf16.mxu0 %v1805
    %2304 = vmatpush1.bf16.msra.mxu0 %v1804
    %2305 = vmatprep.subr.bf16.mxu0 %v1810
    %2306 = vmatpush1.bf16.msra.mxu0 %v1809
    %2307 = vmatprep.subr.bf16.mxu0 %v1815
    %2308 = vmatpush1.bf16.msra.mxu0 %v1814
    %2309 = vmatprep.subr.bf16.mxu0 %v1820
    %2310 = vmatpush1.bf16.msra.mxu0 %v1819
    %2311 = vmatprep.subr.bf16.mxu0 %v1825
    %2312 = vmatpush1.bf16.msra.mxu0 %v1824
    %2313 = vmatprep.subr.bf16.mxu0 %v1830
    %2314 = vmatpush1.bf16.msra.mxu0 %v1829
    %2315 = vmatprep.mubr.bf16.mxu0 %v78
    %2316 = vmatmul.mubr.bf16.gmra.mrb[0].mxu0 %v77
    %v2317 = vpop.f32.mrb[0].mxu0
    %v2318 = vadd.f32 %v2275, %v2317
    %v2319 = vpop.f32.mrb[0].mxu0
    %v2320 = vadd.f32 %v2277, %v2319
    %v2321 = vpop.f32.mrb[0].mxu0
    %v2322 = vadd.f32 %v2279, %v2321
    %v2323 = vpop.f32.mrb[0].mxu0
    %v2324 = vadd.f32 %v2281, %v2323
    %2325 = vdwg.mxu0
    %2326 = vmatprep.subr.bf16.mxu0 %v1517
    %2327 = vmatpush1.bf16.msra.mxu0 %v1516
    %2328 = vmatprep.subr.bf16.mxu0 %v1522
    %2329 = vmatpush1.bf16.msra.mxu0 %v1521
    %2330 = vmatprep.subr.bf16.mxu0 %v1527
    %2331 = vmatpush1.bf16.msra.mxu0 %v1526
    %2332 = vmatprep.subr.bf16.mxu0 %v1532
    %2333 = vmatpush1.bf16.msra.mxu0 %v1531
    %2334 = vmatprep.subr.bf16.mxu0 %v1537
    %2335 = vmatpush1.bf16.msra.mxu0 %v1536
    %2336 = vmatprep.subr.bf16.mxu0 %v1542
    %2337 = vmatpush1.bf16.msra.mxu0 %v1541
    %2338 = vmatprep.subr.bf16.mxu0 %v1547
    %2339 = vmatpush1.bf16.msra.mxu0 %v1546
    %2340 = vmatprep.subr.bf16.mxu0 %v1552
    %2341 = vmatpush1.bf16.msra.mxu0 %v1551
    %2342 = vmatprep.subr.bf16.mxu0 %v1557
    %2343 = vmatpush1.bf16.msra.mxu0 %v1556
    %2344 = vmatprep.subr.bf16.mxu0 %v1562
    %2345 = vmatpush1.bf16.msra.mxu0 %v1561
    %2346 = vmatprep.subr.bf16.mxu0 %v1567
    %2347 = vmatpush1.bf16.msra.mxu0 %v1566
    %2348 = vmatprep.subr.bf16.mxu0 %v1572
    %2349 = vmatpush1.bf16.msra.mxu0 %v1571
    %2350 = vmatprep.subr.bf16.mxu0 %v1577
    %2351 = vmatpush1.bf16.msra.mxu0 %v1576
    %2352 = vmatprep.subr.bf16.mxu0 %v1582
    %2353 = vmatpush1.bf16.msra.mxu0 %v1581
    %2354 = vmatprep.subr.bf16.mxu0 %v1587
    %2355 = vmatpush1.bf16.msra.mxu0 %v1586
    %2356 = vmatprep.subr.bf16.mxu0 %v1592
    %2357 = vmatpush1.bf16.msra.mxu0 %v1591
    %2358 = vmatprep.mubr.bf16.mxu0 %v72
    %2359 = vmatmul.mubr.bf16.gmra.mrb[0].mxu0 %v71
    %v2360 = vpop.f32.mrb[0].mxu0
    %v2361 = vadd.f32 %v476, %v2360
    %v2362 = vpop.f32.mrb[0].mxu0
    %v2363 = vadd.f32 %v480, %v2362
    %v2364 = vpop.f32.mrb[0].mxu0
    %v2365 = vadd.f32 %v476, %v2364
    %v2366 = vpop.f32.mrb[0].mxu0
    %v2367 = vadd.f32 %v480, %v2366
    %2368 = vdwg.mxu0
    %2369 = vmatprep.subr.bf16.mxu0 %v1597
    %2370 = vmatpush1.bf16.msra.mxu0 %v1596
    %2371 = vmatprep.subr.bf16.mxu0 %v1602
    %2372 = vmatpush1.bf16.msra.mxu0 %v1601
    %2373 = vmatprep.subr.bf16.mxu0 %v1607
    %2374 = vmatpush1.bf16.msra.mxu0 %v1606
    %2375 = vmatprep.subr.bf16.mxu0 %v1612
    %2376 = vmatpush1.bf16.msra.mxu0 %v1611
    %2377 = vmatprep.subr.bf16.mxu0 %v1617
    %2378 = vmatpush1.bf16.msra.mxu0 %v1616
    %2379 = vmatprep.subr.bf16.mxu0 %v1622
    %2380 = vmatpush1.bf16.msra.mxu0 %v1621
    %2381 = vmatprep.subr.bf16.mxu0 %v1627
    %2382 = vmatpush1.bf16.msra.mxu0 %v1626
    %2383 = vmatprep.subr.bf16.mxu0 %v1632
    %2384 = vmatpush1.bf16.msra.mxu0 %v1631
    %2385 = vmatprep.subr.bf16.mxu0 %v1637
    %2386 = vmatpush1.bf16.msra.mxu0 %v1636
    %2387 = vmatprep.subr.bf16.mxu0 %v1642
    %2388 = vmatpush1.bf16.msra.mxu0 %v1641
    %2389 = vmatprep.subr.bf16.mxu0 %v1647
    %2390 = vmatpush1.bf16.msra.mxu0 %v1646
    %2391 = vmatprep.subr.bf16.mxu0 %v1652
    %2392 = vmatpush1.bf16.msra.mxu0 %v1651
    %2393 = vmatprep.subr.bf16.mxu0 %v1657
    %2394 = vmatpush1.bf16.msra.mxu0 %v1656
    %2395 = vmatprep.subr.bf16.mxu0 %v1662
    %2396 = vmatpush1.bf16.msra.mxu0 %v1661
    %2397 = vmatprep.subr.bf16.mxu0 %v1667
    %2398 = vmatpush1.bf16.msra.mxu0 %v1666
    %2399 = vmatprep.subr.bf16.mxu0 %v1672
    %2400 = vmatpush1.bf16.msra.mxu0 %v1671
    %2401 = vmatprep.mubr.bf16.mxu0 %v74
    %2402 = vmatmul.mubr.bf16.gmra.mrb[0].mxu0 %v73
    %v2403 = vpop.f32.mrb[0].mxu0
    %v2404 = vadd.f32 %v2361, %v2403
    %v2405 = vpop.f32.mrb[0].mxu0
    %v2406 = vadd.f32 %v2363, %v2405
    %v2407 = vpop.f32.mrb[0].mxu0
    %v2408 = vadd.f32 %v2365, %v2407
    %v2409 = vpop.f32.mrb[0].mxu0
    %v2410 = vadd.f32 %v2367, %v2409
    %2411 = vdwg.mxu0
    %2412 = vmatprep.subr.bf16.mxu0 %v1677
    %2413 = vmatpush1.bf16.msra.mxu0 %v1676
    %2414 = vmatprep.subr.bf16.mxu0 %v1682
    %2415 = vmatpush1.bf16.msra.mxu0 %v1681
    %2416 = vmatprep.subr.bf16.mxu0 %v1687
    %2417 = vmatpush1.bf16.msra.mxu0 %v1686
    %2418 = vmatprep.subr.bf16.mxu0 %v1692
    %2419 = vmatpush1.bf16.msra.mxu0 %v1691
    %2420 = vmatprep.subr.bf16.mxu0 %v1697
    %2421 = vmatpush1.bf16.msra.mxu0 %v1696
    %2422 = vmatprep.subr.bf16.mxu0 %v1702
    %2423 = vmatpush1.bf16.msra.mxu0 %v1701
    %2424 = vmatprep.subr.bf16.mxu0 %v1707
    %2425 = vmatpush1.bf16.msra.mxu0 %v1706
    %2426 = vmatprep.subr.bf16.mxu0 %v1712
    %2427 = vmatpush1.bf16.msra.mxu0 %v1711
    %2428 = vmatprep.subr.bf16.mxu0 %v1717
    %2429 = vmatpush1.bf16.msra.mxu0 %v1716
    %2430 = vmatprep.subr.bf16.mxu0 %v1722
    %2431 = vmatpush1.bf16.msra.mxu0 %v1721
    %2432 = vmatprep.subr.bf16.mxu0 %v1727
    %2433 = vmatpush1.bf16.msra.mxu0 %v1726
    %2434 = vmatprep.subr.bf16.mxu0 %v1732
    %2435 = vmatpush1.bf16.msra.mxu0 %v1731
    %2436 = vmatprep.subr.bf16.mxu0 %v1737
    %2437 = vmatpush1.bf16.msra.mxu0 %v1736
    %2438 = vmatprep.subr.bf16.mxu0 %v1742
    %2439 = vmatpush1.bf16.msra.mxu0 %v1741
    %2440 = vmatprep.subr.bf16.mxu0 %v1747
    %2441 = vmatpush1.bf16.msra.mxu0 %v1746
    %2442 = vmatprep.subr.bf16.mxu0 %v1752
    %2443 = vmatpush1.bf16.msra.mxu0 %v1751
    %2444 = vmatprep.mubr.bf16.mxu0 %v76
    %2445 = vmatmul.mubr.bf16.gmra.mrb[0].mxu0 %v75
    %v2446 = vpop.f32.mrb[0].mxu0
    %v2447 = vadd.f32 %v2404, %v2446
    %v2448 = vpop.f32.mrb[0].mxu0
    %v2449 = vadd.f32 %v2406, %v2448
    %v2450 = vpop.f32.mrb[0].mxu0
    %v2451 = vadd.f32 %v2408, %v2450
    %v2452 = vpop.f32.mrb[0].mxu0
    %v2453 = vadd.f32 %v2410, %v2452
    %2454 = vdwg.mxu0
    %2455 = vmatprep.subr.bf16.mxu0 %v1757
    %2456 = vmatpush1.bf16.msra.mxu0 %v1756
    %2457 = vmatprep.subr.bf16.mxu0 %v1762
    %2458 = vmatpush1.bf16.msra.mxu0 %v1761
    %2459 = vmatprep.subr.bf16.mxu0 %v1767
    %2460 = vmatpush1.bf16.msra.mxu0 %v1766
    %2461 = vmatprep.subr.bf16.mxu0 %v1772
    %2462 = vmatpush1.bf16.msra.mxu0 %v1771
    %2463 = vmatprep.subr.bf16.mxu0 %v1777
    %2464 = vmatpush1.bf16.msra.mxu0 %v1776
    %2465 = vmatprep.subr.bf16.mxu0 %v1782
    %2466 = vmatpush1.bf16.msra.mxu0 %v1781
    %2467 = vmatprep.subr.bf16.mxu0 %v1787
    %2468 = vmatpush1.bf16.msra.mxu0 %v1786
    %2469 = vmatprep.subr.bf16.mxu0 %v1792
    %2470 = vmatpush1.bf16.msra.mxu0 %v1791
    %2471 = vmatprep.subr.bf16.mxu0 %v1797
    %2472 = vmatpush1.bf16.msra.mxu0 %v1796
    %2473 = vmatprep.subr.bf16.mxu0 %v1802
    %2474 = vmatpush1.bf16.msra.mxu0 %v1801
    %2475 = vmatprep.subr.bf16.mxu0 %v1807
    %2476 = vmatpush1.bf16.msra.mxu0 %v1806
    %2477 = vmatprep.subr.bf16.mxu0 %v1812
    %2478 = vmatpush1.bf16.msra.mxu0 %v1811
    %2479 = vmatprep.subr.bf16.mxu0 %v1817
    %2480 = vmatpush1.bf16.msra.mxu0 %v1816
    %2481 = vmatprep.subr.bf16.mxu0 %v1822
    %2482 = vmatpush1.bf16.msra.mxu0 %v1821
    %2483 = vmatprep.subr.bf16.mxu0 %v1827
    %2484 = vmatpush1.bf16.msra.mxu0 %v1826
    %2485 = vmatprep.subr.bf16.mxu0 %v1832
    %2486 = vmatpush1.bf16.msra.mxu0 %v1831
    %2487 = vmatprep.mubr.bf16.mxu0 %v78
    %2488 = vmatmul.mubr.bf16.gmra.mrb[0].mxu0 %v77
    %v2489 = vpop.f32.mrb[0].mxu0
    %v2490 = vadd.f32 %v2447, %v2489
    %v2491 = vpop.f32.mrb[0].mxu0
    %v2492 = vadd.f32 %v2449, %v2491
    %v2493 = vpop.f32.mrb[0].mxu0
    %v2494 = vadd.f32 %v2451, %v2493
    %v2495 = vpop.f32.mrb[0].mxu0
    %v2496 = vadd.f32 %v2453, %v2495
    %2497 = vdwg.mxu0
    %2498 = vmatprep.subr.bf16.mxu0 0
    %2499 = vmatpush1.bf16.msra.mxu0 %v1518
    %2500 = vmatprep.subr.bf16.mxu0 0
    %2501 = vmatpush1.bf16.msra.mxu0 %v1523
    %2502 = vmatprep.subr.bf16.mxu0 0
    %2503 = vmatpush1.bf16.msra.mxu0 %v1528
    %2504 = vmatprep.subr.bf16.mxu0 0
    %2505 = vmatpush1.bf16.msra.mxu0 %v1533
    %2506 = vmatprep.subr.bf16.mxu0 0
    %2507 = vmatpush1.bf16.msra.mxu0 %v1538
    %2508 = vmatprep.subr.bf16.mxu0 0
    %2509 = vmatpush1.bf16.msra.mxu0 %v1543
    %2510 = vmatprep.subr.bf16.mxu0 0
    %2511 = vmatpush1.bf16.msra.mxu0 %v1548
    %2512 = vmatprep.subr.bf16.mxu0 0
    %2513 = vmatpush1.bf16.msra.mxu0 %v1553
    %2514 = vmatprep.subr.bf16.mxu0 0
    %2515 = vmatpush1.bf16.msra.mxu0 %v1558
    %2516 = vmatprep.subr.bf16.mxu0 0
    %2517 = vmatpush1.bf16.msra.mxu0 %v1563
    %2518 = vmatprep.subr.bf16.mxu0 0
    %2519 = vmatpush1.bf16.msra.mxu0 %v1568
    %2520 = vmatprep.subr.bf16.mxu0 0
    %2521 = vmatpush1.bf16.msra.mxu0 %v1573
    %2522 = vmatprep.subr.bf16.mxu0 0
    %2523 = vmatpush1.bf16.msra.mxu0 %v1578
    %2524 = vmatprep.subr.bf16.mxu0 0
    %2525 = vmatpush1.bf16.msra.mxu0 %v1583
    %2526 = vmatprep.subr.bf16.mxu0 0
    %2527 = vmatpush1.bf16.msra.mxu0 %v1588
    %2528 = vmatprep.subr.bf16.mxu0 0
    %2529 = vmatpush1.bf16.msra.mxu0 %v1593
    %2530 = vmatprep.mubr.bf16.mxu0 %v72
    %2531 = vmatmul.mubr.bf16.gmra.mrb[0].mxu0 %v71
    %v2532 = vpop.f32.mrb[0].mxu0
    %v2533 = vadd.f32 %v484, %v2532
    %v2534 = vpop.f32.mrb[0].mxu0
    %v2535 = vpop.f32.mrb[0].mxu0
    %v2536 = vadd.f32 %v484, %v2535
    %v2537 = vpop.f32.mrb[0].mxu0
    %2538 = vdwg.mxu0
    %2539 = vmatprep.subr.bf16.mxu0 0
    %2540 = vmatpush1.bf16.msra.mxu0 %v1598
    %2541 = vmatprep.subr.bf16.mxu0 0
    %2542 = vmatpush1.bf16.msra.mxu0 %v1603
    %2543 = vmatprep.subr.bf16.mxu0 0
    %2544 = vmatpush1.bf16.msra.mxu0 %v1608
    %2545 = vmatprep.subr.bf16.mxu0 0
    %2546 = vmatpush1.bf16.msra.mxu0 %v1613
    %2547 = vmatprep.subr.bf16.mxu0 0
    %2548 = vmatpush1.bf16.msra.mxu0 %v1618
    %2549 = vmatprep.subr.bf16.mxu0 0
    %2550 = vmatpush1.bf16.msra.mxu0 %v1623
    %2551 = vmatprep.subr.bf16.mxu0 0
    %2552 = vmatpush1.bf16.msra.mxu0 %v1628
    %2553 = vmatprep.subr.bf16.mxu0 0
    %2554 = vmatpush1.bf16.msra.mxu0 %v1633
    %2555 = vmatprep.subr.bf16.mxu0 0
    %2556 = vmatpush1.bf16.msra.mxu0 %v1638
    %2557 = vmatprep.subr.bf16.mxu0 0
    %2558 = vmatpush1.bf16.msra.mxu0 %v1643
    %2559 = vmatprep.subr.bf16.mxu0 0
    %2560 = vmatpush1.bf16.msra.mxu0 %v1648
    %2561 = vmatprep.subr.bf16.mxu0 0
    %2562 = vmatpush1.bf16.msra.mxu0 %v1653
    %2563 = vmatprep.subr.bf16.mxu0 0
    %2564 = vmatpush1.bf16.msra.mxu0 %v1658
    %2565 = vmatprep.subr.bf16.mxu0 0
    %2566 = vmatpush1.bf16.msra.mxu0 %v1663
    %2567 = vmatprep.subr.bf16.mxu0 0
    %2568 = vmatpush1.bf16.msra.mxu0 %v1668
    %2569 = vmatprep.subr.bf16.mxu0 0
    %2570 = vmatpush1.bf16.msra.mxu0 %v1673
    %2571 = vmatprep.mubr.bf16.mxu0 %v74
    %2572 = vmatmul.mubr.bf16.gmra.mrb[0].mxu0 %v73
    %v2573 = vpop.f32.mrb[0].mxu0
    %v2574 = vadd.f32 %v2533, %v2573
    %v2575 = vpop.f32.mrb[0].mxu0
    %v2576 = vpop.f32.mrb[0].mxu0
    %v2577 = vadd.f32 %v2536, %v2576
    %v2578 = vpop.f32.mrb[0].mxu0
    %2579 = vdwg.mxu0
    %2580 = vmatprep.subr.bf16.mxu0 0
    %2581 = vmatpush1.bf16.msra.mxu0 %v1678
    %2582 = vmatprep.subr.bf16.mxu0 0
    %2583 = vmatpush1.bf16.msra.mxu0 %v1683
    %2584 = vmatprep.subr.bf16.mxu0 0
    %2585 = vmatpush1.bf16.msra.mxu0 %v1688
    %2586 = vmatprep.subr.bf16.mxu0 0
    %2587 = vmatpush1.bf16.msra.mxu0 %v1693
    %2588 = vmatprep.subr.bf16.mxu0 0
    %2589 = vmatpush1.bf16.msra.mxu0 %v1698
    %2590 = vmatprep.subr.bf16.mxu0 0
    %2591 = vmatpush1.bf16.msra.mxu0 %v1703
    %2592 = vmatprep.subr.bf16.mxu0 0
    %2593 = vmatpush1.bf16.msra.mxu0 %v1708
    %2594 = vmatprep.subr.bf16.mxu0 0
    %2595 = vmatpush1.bf16.msra.mxu0 %v1713
    %2596 = vmatprep.subr.bf16.mxu0 0
    %2597 = vmatpush1.bf16.msra.mxu0 %v1718
    %2598 = vmatprep.subr.bf16.mxu0 0
    %2599 = vmatpush1.bf16.msra.mxu0 %v1723
    %2600 = vmatprep.subr.bf16.mxu0 0
    %2601 = vmatpush1.bf16.msra.mxu0 %v1728
    %2602 = vmatprep.subr.bf16.mxu0 0
    %2603 = vmatpush1.bf16.msra.mxu0 %v1733
    %2604 = vmatprep.subr.bf16.mxu0 0
    %2605 = vmatpush1.bf16.msra.mxu0 %v1738
    %2606 = vmatprep.subr.bf16.mxu0 0
    %2607 = vmatpush1.bf16.msra.mxu0 %v1743
    %2608 = vmatprep.subr.bf16.mxu0 0
    %2609 = vmatpush1.bf16.msra.mxu0 %v1748
    %2610 = vmatprep.subr.bf16.mxu0 0
    %2611 = vmatpush1.bf16.msra.mxu0 %v1753
    %2612 = vmatprep.mubr.bf16.mxu0 %v76
    %2613 = vmatmul.mubr.bf16.gmra.mrb[0].mxu0 %v75
    %v2614 = vpop.f32.mrb[0].mxu0
    %v2615 = vadd.f32 %v2574, %v2614
    %v2616 = vpop.f32.mrb[0].mxu0
    %v2617 = vpop.f32.mrb[0].mxu0
    %v2618 = vadd.f32 %v2577, %v2617
    %v2619 = vpop.f32.mrb[0].mxu0
    %2620 = vdwg.mxu0
    %2621 = vmatprep.subr.bf16.mxu0 0
    %2622 = vmatpush1.bf16.msra.mxu0 %v1758
    %2623 = vmatprep.subr.bf16.mxu0 0
    %2624 = vmatpush1.bf16.msra.mxu0 %v1763
    %2625 = vmatprep.subr.bf16.mxu0 0
    %2626 = vmatpush1.bf16.msra.mxu0 %v1768
    %2627 = vmatprep.subr.bf16.mxu0 0
    %2628 = vmatpush1.bf16.msra.mxu0 %v1773
    %2629 = vmatprep.subr.bf16.mxu0 0
    %2630 = vmatpush1.bf16.msra.mxu0 %v1778
    %2631 = vmatprep.subr.bf16.mxu0 0
    %2632 = vmatpush1.bf16.msra.mxu0 %v1783
    %2633 = vmatprep.subr.bf16.mxu0 0
    %2634 = vmatpush1.bf16.msra.mxu0 %v1788
    %2635 = vmatprep.subr.bf16.mxu0 0
    %2636 = vmatpush1.bf16.msra.mxu0 %v1793
    %2637 = vmatprep.subr.bf16.mxu0 0
    %2638 = vmatpush1.bf16.msra.mxu0 %v1798
    %2639 = vmatprep.subr.bf16.mxu0 0
    %2640 = vmatpush1.bf16.msra.mxu0 %v1803
    %2641 = vmatprep.subr.bf16.mxu0 0
    %2642 = vmatpush1.bf16.msra.mxu0 %v1808
    %2643 = vmatprep.subr.bf16.mxu0 0
    %2644 = vmatpush1.bf16.msra.mxu0 %v1813
    %2645 = vmatprep.subr.bf16.mxu0 0
    %2646 = vmatpush1.bf16.msra.mxu0 %v1818
    %2647 = vmatprep.subr.bf16.mxu0 0
    %2648 = vmatpush1.bf16.msra.mxu0 %v1823
    %2649 = vmatprep.subr.bf16.mxu0 0
    %2650 = vmatpush1.bf16.msra.mxu0 %v1828
    %2651 = vmatprep.subr.bf16.mxu0 0
    %2652 = vmatpush1.bf16.msra.mxu0 %v1833
    %2653 = vmatprep.mubr.bf16.mxu0 %v78
    %2654 = vmatmul.mubr.bf16.gmra.mrb[0].mxu0 %v77
    %v2655 = vpop.f32.mrb[0].mxu0
    %v2656 = vadd.f32 %v2615, %v2655
    %v2657 = vpop.f32.mrb[0].mxu0
    %v2658 = vpop.f32.mrb[0].mxu0
    %v2659 = vadd.f32 %v2618, %v2658
    %v2660 = vpop.f32.mrb[0].mxu0
    %2661 = vdwg.mxu0
    %2662 = vst [vmem:[#allocation8] sm:$0xff] %v2318
    %2663 = vst [vmem:[#allocation8 + $0x8] sm:$0xff] %v2320
    %2664 = vst [vmem:[#allocation8 + $0x10] sm:$0xff] %v2490
    %2665 = vst [vmem:[#allocation8 + $0x18] sm:$0xff] %v2492
    %vm2666 = vcmask 719872
    %2667 = vst.msk [vmem:[#allocation8 + $0x20] sm:$0xff] %vm2666, %v2656
    %2668 = vst [vmem:[#allocation8 + $0x28] sm:$0xff] %v2322
    %2669 = vst [vmem:[#allocation8 + $0x30] sm:$0xff] %v2324
    %2670 = vst [vmem:[#allocation8 + $0x38] sm:$0xff] %v2494
    %2671 = vst [vmem:[#allocation8 + $0x40] sm:$0xff] %v2496
    %2672 = vst.msk [vmem:[#allocation8 + $0x48] sm:$0xff] %vm2666, %v2659
    // Predicated region
    $region26: #{tpu_custom_call.1} parent=1 // pred_check
      _
    $region27: #{tpu_custom_call.1} parent=1 // pred_check_branch
      %2674 = sbr.rel (0) target = $region29
    $region28: #{tpu_custom_call.1} parent=1 // pred_region
      %s2676 = ssub.s32 1280, 1280
      %2677 = vsyncadd [#allocation4], %s2676
      %s2678 = sshll.u32 [#allocation8], 4
      %s2679 = int_to_ptr.vmem [resolvable:$true] %s2678
      %2684 = dma.vmem_to_hbm [thread:$0]  %s2679, 1280, %s3, [#allocation4], 640, 640, 40
    $region29: #{tpu_custom_call.1} parent=1 // pred_fallthru
      _
    // Predicated region
    $region30: #{tpu_custom_call.1} parent=1 // pred_check
      _
    $region31: #{tpu_custom_call.1} parent=1 // pred_check_branch
      %2686 = sbr.rel (0) target = $region33
    $region32: #{tpu_custom_call.1} parent=1 // pred_region
      %2687 = dma.done [#allocation4], 1280
    $region33: #{tpu_custom_call.1} parent=1 // pred_fallthru
      _
    %2688 = vsyncpa [#allocation3], 1
    %2689 = vsyncpa [#allocation6], 1
    %2690 = vsyncpa [#allocation4], 1

// kernel: tpu_custom_call.1
$region0: #{tpu_custom_call.1}
  #allocation0 [shape = 'u32[]', space=smem, size = 0x4, offset = 0x4, fixed_abs, tag = 'smem constant byte address 0x4 - core index']
  #allocation1 [shape = 'u32[144,128]{1,0:T(1,128)}', space=vmem, size = 0x12000, scoped, tag = 'internal scratch']
  %s0 = inlined_call_operand.hbm [shape: f32[16,1024], index: 0, kind: input, shape index: {}]
  %s1 = inlined_call_operand.hbm [shape: bf16[1024,640], index: 1, kind: input, shape index: {}]
  %s2 = inlined_call_operand.hbm [shape: f32[1,640], index: 2, kind: input, shape index: {}]
  %s3 = inlined_call_operand.hbm [shape: f32[16,600], index: 3, kind: output, shape index: {}]
  %s4 = sld [smem:[#allocation0]]
  $region34: #{tpu_custom_call.1} parent=0
    _
  %s6 = ssub.s32 1, %s4
  %s7 = scalar_select 0, %s6, %s4
  $region1: #{tpu_custom_call.1} parent=0
    #allocation2 [shape = 'u8[65536]{0}', space=vmem, size = 0x10000, scoped, tag = 'input window, operand 0, single buffered']
    #allocation3 [shape = 's32[1]{0}', space=sflag, size = 0x4, scoped, tag = 'scoped memory for tpu_custom_call.1']
    #allocation4 [shape = 's32[1]{0}', space=sflag, size = 0x4, scoped, tag = 'scoped memory for tpu_custom_call.1']
    #allocation5 [shape = 'u8[1310720]{0}', space=vmem, size = 0x140000, scoped, tag = 'input window, operand 1, single buffered']
    #allocation6 [shape = 's32[1]{0}', space=sflag, size = 0x4, scoped, tag = 'scoped memory for tpu_custom_call.1']
    #allocation7 [shape = 'u8[2560]{0}', space=vmem, size = 0xc00, scoped, tag = 'input window, operand 2, single buffered']
    #allocation8 [shape = 'u8[40960]{0}', space=vmem, size = 0xa000, scoped, tag = 'output window, operand 0, single buffered']
    %8 = vsyncpa [#allocation3], 0
    %9 = vsyncpa [#allocation6], 0
    %10 = vsyncpa [#allocation4], 0
    // Predicated region
    $region2: #{tpu_custom_call.1} parent=1 // pred_check
      _
    $region3: #{tpu_custom_call.1} parent=1 // pred_check_branch
      %12 = sbr.rel (0) target = $region5
    $region4: #{tpu_custom_call.1} parent=1 // pred_region
      %s14 = ssub.s32 2048, 2048
      %15 = vsyncadd [#allocation3], %s14
      %s16 = sshll.u32 [#allocation2], 4
      %s17 = int_to_ptr.vmem [resolvable:$true] %s16
      %22 = dma.hbm_to_vmem [thread:$0]  %s0, 2048, %s17, [#allocation3], 1024, 1024, 64
    $region5: #{tpu_custom_call.1} parent=1 // pred_fallthru
      _
    // Predicated region
    $region6: #{tpu_custom_call.1} parent=1 // pred_check
      _
    $region7: #{tpu_custom_call.1} parent=1 // pred_check_branch
      %24 = sbr.rel (0) target = $region9
    $region8: #{tpu_custom_call.1} parent=1 // pred_region
      %s26 = ssub.s32 40960, 40960
      %27 = vsyncadd [#allocation6], %s26
      %s28 = sshll.u32 [#allocation5], 4
      %s29 = int_to_ptr.vmem [resolvable:$true] %s28
      %34 = dma.hbm_to_vmem [thread:$0]  %s1, 40960, %s29, [#allocation6], 320, 320, 20
    $region9: #{tpu_custom_call.1} parent=1 // pred_fallthru
      _
    // Predicated region
    $region10: #{tpu_custom_call.1} parent=1 // pred_check
      _
    $region11: #{tpu_custom_call.1} parent=1 // pred_check_branch
      %36 = sbr.rel (0) target = $region13
    $region12: #{tpu_custom_call.1} parent=1 // pred_region
      %s38 = ssub.s32 80, 80
      %39 = vsyncadd [#allocation6], %s38
      %s41 = sshll.u32 [#allocation7], 4
      %s42 = int_to_ptr.vmem [resolvable:$true] %s41
      %44 = dma.hbm_to_vmem [thread:$0]  %s2, 80, %s42, [#allocation6]
    $region13: #{tpu_custom_call.1} parent=1 // pred_fallthru
      _
    // Predicated region
    $region14: #{tpu_custom_call.1} parent=1 // pred_check
      _
    $region15: #{tpu_custom_call.1} parent=1 // pred_check_branch
      %46 = sbr.rel (0) target = $region17
    $region16: #{tpu_custom_call.1} parent=1 // pred_region
      %47 = dma.done [#allocation3], 2048
    $region17: #{tpu_custom_call.1} parent=1 // pred_fallthru
      _
    // Predicated region
    $region18: #{tpu_custom_call.1} parent=1 // pred_check
      _
    $region19: #{tpu_custom_call.1} parent=1 // pred_check_branch
      %49 = sbr.rel (0) target = $region21
    $region20: #{tpu_custom_call.1} parent=1 // pred_region
      %50 = dma.done [#allocation6], 40960
    $region21: #{tpu_custom_call.1} parent=1 // pred_fallthru
      _
    // Predicated region
    $region22: #{tpu_custom_call.1} parent=1 // pred_check
      _
    $region23: #{tpu_custom_call.1} parent=1 // pred_check_branch
      %52 = sbr.rel (0) target = $region25
    $region24: #{tpu_custom_call.1} parent=1 // pred_region
      %53 = dma.done [#allocation6], 80
    $region25: #{tpu_custom_call.1} parent=1 // pred_fallthru
      _
    %v55 = vld [vmem:[#allocation2] sm:$0xff]
    %v56 = vld [vmem:[#allocation2 + $0x8] sm:$0xff]
    %v57 = vld [vmem:[#allocation2 + $0x10] sm:$0xff]
    %v58 = vld [vmem:[#allocation2 + $0x18] sm:$0xff]
    %v59 = vld [vmem:[#allocation2 + $0x20] sm:$0xff]
    %v60 = vld [vmem:[#allocation2 + $0x28] sm:$0xff]
    %v61 = vld [vmem:[#allocation2 + $0x30] sm:$0xff]
    %v62 = vld [vmem:[#allocation2 + $0x38] sm:$0xff]
    %v63 = vld [vmem:[#allocation2 + $0x40] sm:$0xff]
    %v64 = vld [vmem:[#allocation2 + $0x48] sm:$0xff]
    %v65 = vld [vmem:[#allocation2 + $0x50] sm:$0xff]
    %v66 = vld [vmem:[#allocation2 + $0x58] sm:$0xff]
    %v67 = vld [vmem:[#allocation2 + $0x60] sm:$0xff]
    %v68 = vld [vmem:[#allocation2 + $0x68] sm:$0xff]
    %v69 = vld [vmem:[#allocation2 + $0x70] sm:$0xff]
    %v70 = vld [vmem:[#allocation2 + $0x78] sm:$0xff]
    %v71 = vpack.c.bf16 %v63, %v55
    %v72 = vpack.c.bf16 %v64, %v56
    %v73 = vpack.c.bf16 %v65, %v57
    %v74 = vpack.c.bf16 %v66, %v58
    %v75 = vpack.c.bf16 %v67, %v59
    %v76 = vpack.c.bf16 %v68, %v60
    %v77 = vpack.c.bf16 %v69, %v61
    %v78 = vpack.c.bf16 %v70, %v62
    %v79 = vld [vmem:[#allocation5] sm:$0xff]
    %v80 = vld [vmem:[#allocation5 + $0x8] sm:$0xff]
    %v81 = vld [vmem:[#allocation5 + $0x10] sm:$0xf]
    %v82 = vld [vmem:[#allocation5 + $0x14] sm:$0xff]
    %v83 = vld [vmem:[#allocation5 + $0x1c] sm:$0xff]
    %v84 = vld [vmem:[#allocation5 + $0x24] sm:$0xf]
    %v85 = vld [vmem:[#allocation5 + $0x28] sm:$0xff]
    %v86 = vld [vmem:[#allocation5 + $0x30] sm:$0xff]
    %v87 = vld [vmem:[#allocation5 + $0x38] sm:$0xf]
    %v88 = vld [vmem:[#allocation5 + $0x3c] sm:$0xff]
    %v89 = vld [vmem:[#allocation5 + $0x44] sm:$0xff]
    %v90 = vld [vmem:[#allocation5 + $0x4c] sm:$0xf]
    %v91 = vld [vmem:[#allocation5 + $0x50] sm:$0xff]
    %v92 = vld [vmem:[#allocation5 + $0x58] sm:$0xff]
    %v93 = vld [vmem:[#allocation5 + $0x60] sm:$0xf]
    %v94 = vld [vmem:[#allocation5 + $0x64] sm:$0xff]
    %v95 = vld [vmem:[#allocation5 + $0x6c] sm:$0xff]
    %v96 = vld [vmem:[#allocation5 + $0x74] sm:$0xf]
    %v97 = vld [vmem:[#allocation5 + $0x78] sm:$0xff]
    %v98 = vld [vmem:[#allocation5 + $0x80] sm:$0xff]
    %v99 = vld [vmem:[#allocation5 + $0x88] sm:$0xf]
    %v100 = vld [vmem:[#allocation5 + $0x8c] sm:$0xff]
    %v101 = vld [vmem:[#allocation5 + $0x94] sm:$0xff]
    %v102 = vld [vmem:[#allocation5 + $0x9c] sm:$0xf]
    %v103 = vld [vmem:[#allocation5 + $0xa0] sm:$0xff]
    %v104 = vld [vmem:[#allocation5 + $0xa8] sm:$0xff]
    %v105 = vld [vmem:[#allocation5 + $0xb0] sm:$0xf]
    %v106 = vld [vmem:[#allocation5 + $0xb4] sm:$0xff]
    %v107 = vld [vmem:[#allocation5 + $0xbc] sm:$0xff]
    %v108 = vld [vmem:[#allocation5 + $0xc4] sm:$0xf]
    %v109 = vld [vmem:[#allocation5 + $0xc8] sm:$0xff]
    %v110 = vld [vmem:[#allocation5 + $0xd0] sm:$0xff]
    %v111 = vld [vmem:[#allocation5 + $0xd8] sm:$0xf]
    %v112 = vld [vmem:[#allocation5 + $0xdc] sm:$0xff]
    %v113 = vld [vmem:[#allocation5 + $0xe4] sm:$0xff]
    %v114 = vld [vmem:[#allocation5 + $0xec] sm:$0xf]
    %v115 = vld [vmem:[#allocation5 + $0xf0] sm:$0xff]
    %v116 = vld [vmem:[#allocation5 + $0xf8] sm:$0xff]
    %v117 = vld [vmem:[#allocation5 + $0x100] sm:$0xf]
    %v118 = vld [vmem:[#allocation5 + $0x104] sm:$0xff]
    %v119 = vld [vmem:[#allocation5 + $0x10c] sm:$0xff]
    %v120 = vld [vmem:[#allocation5 + $0x114] sm:$0xf]
    %v121 = vld [vmem:[#allocation5 + $0x118] sm:$0xff]
    %v122 = vld [vmem:[#allocation5 + $0x120] sm:$0xff]
    %v123 = vld [vmem:[#allocation5 + $0x128] sm:$0xf]
    %v124 = vld [vmem:[#allocation5 + $0x12c] sm:$0xff]
    %v125 = vld [vmem:[#allocation5 + $0x134] sm:$0xff]
    %v126 = vld [vmem:[#allocation5 + $0x13c] sm:$0xf]
    %v127 = vld [vmem:[#allocation5 + $0x140] sm:$0xff]
    %v128 = vld [vmem:[#allocation5 + $0x148] sm:$0xff]
    %v129 = vld [vmem:[#allocation5 + $0x150] sm:$0xf]
    %v130 = vld [vmem:[#allocation5 + $0x154] sm:$0xff]
    %v131 = vld [vmem:[#allocation5 + $0x15c] sm:$0xff]
    %v132 = vld [vmem:[#allocation5 + $0x164] sm:$0xf]
    %v133 = vld [vmem:[#allocation5 + $0x168] sm:$0xff]
    %v134 = vld [vmem:[#allocation5 + $0x170] sm:$0xff]
    %v135 = vld [vmem:[#allocation5 + $0x178] sm:$0xf]
    %v136 = vld [vmem:[#allocation5 + $0x17c] sm:$0xff]
    %v137 = vld [vmem:[#allocation5 + $0x184] sm:$0xff]
    %v138 = vld [vmem:[#allocation5 + $0x18c] sm:$0xf]
    %v139 = vld [vmem:[#allocation5 + $0x190] sm:$0xff]
    %v140 = vld [vmem:[#allocation5 + $0x198] sm:$0xff]
    %v141 = vld [vmem:[#allocation5 + $0x1a0] sm:$0xf]
    %v142 = vld [vmem:[#allocation5 + $0x1a4] sm:$0xff]
    %v143 = vld [vmem:[#allocation5 + $0x1ac] sm:$0xff]
    %v144 = vld [vmem:[#allocation5 + $0x1b4] sm:$0xf]
    %v145 = vld [vmem:[#allocation5 + $0x1b8] sm:$0xff]
    %v146 = vld [vmem:[#allocation5 + $0x1c0] sm:$0xff]
    %v147 = vld [vmem:[#allocation5 + $0x1c8] sm:$0xf]
    %v148 = vld [vmem:[#allocation5 + $0x1cc] sm:$0xff]
    %v149 = vld [vmem:[#allocation5 + $0x1d4] sm:$0xff]
    %v150 = vld [vmem:[#allocation5 + $0x1dc] sm:$0xf]
    %v151 = vld [vmem:[#allocation5 + $0x1e0] sm:$0xff]
    %v152 = vld [vmem:[#allocation5 + $0x1e8] sm:$0xff]
    %v153 = vld [vmem:[#allocation5 + $0x1f0] sm:$0xf]
    %v154 = vld [vmem:[#allocation5 + $0x1f4] sm:$0xff]
    %v155 = vld [vmem:[#allocation5 + $0x1fc] sm:$0xff]
    %v156 = vld [vmem:[#allocation5 + $0x204] sm:$0xf]
    %v157 = vld [vmem:[#allocation5 + $0x208] sm:$0xff]
    %v158 = vld [vmem:[#allocation5 + $0x210] sm:$0xff]
    %v159 = vld [vmem:[#allocation5 + $0x218] sm:$0xf]
    %v160 = vld [vmem:[#allocation5 + $0x21c] sm:$0xff]
    %v161 = vld [vmem:[#allocation5 + $0x224] sm:$0xff]
    %v162 = vld [vmem:[#allocation5 + $0x22c] sm:$0xf]
    %v163 = vld [vmem:[#allocation5 + $0x230] sm:$0xff]
    %v164 = vld [vmem:[#allocation5 + $0x238] sm:$0xff]
    %v165 = vld [vmem:[#allocation5 + $0x240] sm:$0xf]
    %v166 = vld [vmem:[#allocation5 + $0x244] sm:$0xff]
    %v167 = vld [vmem:[#allocation5 + $0x24c] sm:$0xff]
    %v168 = vld [vmem:[#allocation5 + $0x254] sm:$0xf]
    %v169 = vld [vmem:[#allocation5 + $0x258] sm:$0xff]
    %v170 = vld [vmem:[#allocation5 + $0x260] sm:$0xff]
    %v171 = vld [vmem:[#allocation5 + $0x268] sm:$0xf]
    %v172 = vld [vmem:[#allocation5 + $0x26c] sm:$0xff]
    %v173 = vld [vmem:[#allocation5 + $0x274] sm:$0xff]
    %v174 = vld [vmem:[#allocation5 + $0x27c] sm:$0xf]
    %v175 = vld [vmem:[#allocation5 + $0x280] sm:$0xff]
    %v176 = vld [vmem:[#allocation5 + $0x288] sm:$0xff]
    %v177 = vld [vmem:[#allocation5 + $0x290] sm:$0xf]
    %v178 = vld [vmem:[#allocation5 + $0x294] sm:$0xff]
    %v179 = vld [vmem:[#allocation5 + $0x29c] sm:$0xff]
    %v180 = vld [vmem:[#allocation5 + $0x2a4] sm:$0xf]
    %v181 = vld [vmem:[#allocation5 + $0x2a8] sm:$0xff]
    %v182 = vld [vmem:[#allocation5 + $0x2b0] sm:$0xff]
    %v183 = vld [vmem:[#allocation5 + $0x2b8] sm:$0xf]
    %v184 = vld [vmem:[#allocation5 + $0x2bc] sm:$0xff]
    %v185 = vld [vmem:[#allocation5 + $0x2c4] sm:$0xff]
    %v186 = vld [vmem:[#allocation5 + $0x2cc] sm:$0xf]
    %v187 = vld [vmem:[#allocation5 + $0x2d0] sm:$0xff]
    %v188 = vld [vmem:[#allocation5 + $0x2d8] sm:$0xff]
    %v189 = vld [vmem:[#allocation5 + $0x2e0] sm:$0xf]
    %v190 = vld [vmem:[#allocation5 + $0x2e4] sm:$0xff]
    %v191 = vld [vmem:[#allocation5 + $0x2ec] sm:$0xff]
    %v192 = vld [vmem:[#allocation5 + $0x2f4] sm:$0xf]
    %v193 = vld [vmem:[#allocation5 + $0x2f8] sm:$0xff]
    %v194 = vld [vmem:[#allocation5 + $0x300] sm:$0xff]
    %v195 = vld [vmem:[#allocation5 + $0x308] sm:$0xf]
    %v196 = vld [vmem:[#allocation5 + $0x30c] sm:$0xff]
    %v197 = vld [vmem:[#allocation5 + $0x314] sm:$0xff]
    %v198 = vld [vmem:[#allocation5 + $0x31c] sm:$0xf]
    %v199 = vld [vmem:[#allocation5 + $0x320] sm:$0xff]
    %v200 = vld [vmem:[#allocation5 + $0x328] sm:$0xff]
    %v201 = vld [vmem:[#allocation5 + $0x330] sm:$0xf]
    %v202 = vld [vmem:[#allocation5 + $0x334] sm:$0xff]
    %v203 = vld [vmem:[#allocation5 + $0x33c] sm:$0xff]
    %v204 = vld [vmem:[#allocation5 + $0x344] sm:$0xf]
    %v205 = vld [vmem:[#allocation5 + $0x348] sm:$0xff]
    %v206 = vld [vmem:[#allocation5 + $0x350] sm:$0xff]
    %v207 = vld [vmem:[#allocation5 + $0x358] sm:$0xf]
    %v208 = vld [vmem:[#allocation5 + $0x35c] sm:$0xff]
    %v209 = vld [vmem:[#allocation5 + $0x364] sm:$0xff]
    %v210 = vld [vmem:[#allocation5 + $0x36c] sm:$0xf]
    %v211 = vld [vmem:[#allocation5 + $0x370] sm:$0xff]
    %v212 = vld [vmem:[#allocation5 + $0x378] sm:$0xff]
    %v213 = vld [vmem:[#allocation5 + $0x380] sm:$0xf]
    %v214 = vld [vmem:[#allocation5 + $0x384] sm:$0xff]
    %v215 = vld [vmem:[#allocation5 + $0x38c] sm:$0xff]
    %v216 = vld [vmem:[#allocation5 + $0x394] sm:$0xf]
    %v217 = vld [vmem:[#allocation5 + $0x398] sm:$0xff]
    %v218 = vld [vmem:[#allocation5 + $0x3a0] sm:$0xff]
    %v219 = vld [vmem:[#allocation5 + $0x3a8] sm:$0xf]
    %v220 = vld [vmem:[#allocation5 + $0x3ac] sm:$0xff]
    %v221 = vld [vmem:[#allocation5 + $0x3b4] sm:$0xff]
    %v222 = vld [vmem:[#allocation5 + $0x3bc] sm:$0xf]
    %v223 = vld [vmem:[#allocation5 + $0x3c0] sm:$0xff]
    %v224 = vld [vmem:[#allocation5 + $0x3c8] sm:$0xff]
    %v225 = vld [vmem:[#allocation5 + $0x3d0] sm:$0xf]
    %v226 = vld [vmem:[#allocation5 + $0x3d4] sm:$0xff]
    %v227 = vld [vmem:[#allocation5 + $0x3dc] sm:$0xff]
    %v228 = vld [vmem:[#allocation5 + $0x3e4] sm:$0xf]
    %v229 = vld [vmem:[#allocation5 + $0x3e8] sm:$0xff]
    %v230 = vld [vmem:[#allocation5 + $0x3f0] sm:$0xff]
    %v231 = vld [vmem:[#allocation5 + $0x3f8] sm:$0xf]
    %v232 = vld [vmem:[#allocation5 + $0x3fc] sm:$0xff]
    %v233 = vld [vmem:[#allocation5 + $0x404] sm:$0xff]
    %v234 = vld [vmem:[#allocation5 + $0x40c] sm:$0xf]
    %v235 = vld [vmem:[#allocation5 + $0x410] sm:$0xff]
    %v236 = vld [vmem:[#allocation5 + $0x418] sm:$0xff]
    %v237 = vld [vmem:[#allocation5 + $0x420] sm:$0xf]
    %v238 = vld [vmem:[#allocation5 + $0x424] sm:$0xff]
    %v239 = vld [vmem:[#allocation5 + $0x42c] sm:$0xff]
    %v240 = vld [vmem:[#allocation5 + $0x434] sm:$0xf]
    %v241 = vld [vmem:[#allocation5 + $0x438] sm:$0xff]
    %v242 = vld [vmem:[#allocation5 + $0x440] sm:$0xff]
    %v243 = vld [vmem:[#allocation5 + $0x448] sm:$0xf]
    %v244 = vld [vmem:[#allocation5 + $0x44c] sm:$0xff]
    %v245 = vld [vmem:[#allocation5 + $0x454] sm:$0xff]
    %v246 = vld [vmem:[#allocation5 + $0x45c] sm:$0xf]
    %v247 = vld [vmem:[#allocation5 + $0x460] sm:$0xff]
    %v248 = vld [vmem:[#allocation5 + $0x468] sm:$0xff]
    %v249 = vld [vmem:[#allocation5 + $0x470] sm:$0xf]
    %v250 = vld [vmem:[#allocation5 + $0x474] sm:$0xff]
    %v251 = vld [vmem:[#allocation5 + $0x47c] sm:$0xff]
    %v252 = vld [vmem:[#allocation5 + $0x484] sm:$0xf]
    %v253 = vld [vmem:[#allocation5 + $0x488] sm:$0xff]
    %v254 = vld [vmem:[#allocation5 + $0x490] sm:$0xff]
    %v255 = vld [vmem:[#allocation5 + $0x498] sm:$0xf]
    %v256 = vld [vmem:[#allocation5 + $0x49c] sm:$0xff]
    %v257 = vld [vmem:[#allocation5 + $0x4a4] sm:$0xff]
    %v258 = vld [vmem:[#allocation5 + $0x4ac] sm:$0xf]
    %v259 = vld [vmem:[#allocation5 + $0x4b0] sm:$0xff]
    %v260 = vld [vmem:[#allocation5 + $0x4b8] sm:$0xff]
    %v261 = vld [vmem:[#allocation5 + $0x4c0] sm:$0xf]
    %v262 = vld [vmem:[#allocation5 + $0x4c4] sm:$0xff]
    %v263 = vld [vmem:[#allocation5 + $0x4cc] sm:$0xff]
    %v264 = vld [vmem:[#allocation5 + $0x4d4] sm:$0xf]
    %v265 = vld [vmem:[#allocation5 + $0x4d8] sm:$0xff]
    %v266 = vld [vmem:[#allocation5 + $0x4e0] sm:$0xff]
    %v267 = vld [vmem:[#allocation5 + $0x4e8] sm:$0xf]
    %v268 = vld [vmem:[#allocation5 + $0x4ec] sm:$0xff]
    %v269 = vld [vmem:[#allocation5 + $0x4f4] sm:$0xff]
    %v270 = vld [vmem:[#allocation5 + $0x4fc] sm:$0xf]
    %v271 = vld [vmem:[#allocation5 + $0x500] sm:$0xff]
    %v272 = vld [vmem:[#allocation5 + $0x508] sm:$0xff]
    %v273 = vld [vmem:[#allocation5 + $0x510] sm:$0xf]
    %v274 = vld [vmem:[#allocation5 + $0x514] sm:$0xff]
    %v275 = vld [vmem:[#allocation5 + $0x51c] sm:$0xff]
    %v276 = vld [vmem:[#allocation5 + $0x524] sm:$0xf]
    %v277 = vld [vmem:[#allocation5 + $0x528] sm:$0xff]
    %v278 = vld [vmem:[#allocation5 + $0x530] sm:$0xff]
    %v279 = vld [vmem:[#allocation5 + $0x538] sm:$0xf]
    %v280 = vld [vmem:[#allocation5 + $0x53c] sm:$0xff]
    %v281 = vld [vmem:[#allocation5 + $0x544] sm:$0xff]
    %v282 = vld [vmem:[#allocation5 + $0x54c] sm:$0xf]
    %v283 = vld [vmem:[#allocation5 + $0x550] sm:$0xff]
    %v284 = vld [vmem:[#allocation5 + $0x558] sm:$0xff]
    %v285 = vld [vmem:[#allocation5 + $0x560] sm:$0xf]
    %v286 = vld [vmem:[#allocation5 + $0x564] sm:$0xff]
    %v287 = vld [vmem:[#allocation5 + $0x56c] sm:$0xff]
    %v288 = vld [vmem:[#allocation5 + $0x574] sm:$0xf]
    %v289 = vld [vmem:[#allocation5 + $0x578] sm:$0xff]
    %v290 = vld [vmem:[#allocation5 + $0x580] sm:$0xff]
    %v291 = vld [vmem:[#allocation5 + $0x588] sm:$0xf]
    %v292 = vld [vmem:[#allocation5 + $0x58c] sm:$0xff]
    %v293 = vld [vmem:[#allocation5 + $0x594] sm:$0xff]
    %v294 = vld [vmem:[#allocation5 + $0x59c] sm:$0xf]
    %v295 = vld [vmem:[#allocation5 + $0x5a0] sm:$0xff]
    %v296 = vld [vmem:[#allocation5 + $0x5a8] sm:$0xff]
    %v297 = vld [vmem:[#allocation5 + $0x5b0] sm:$0xf]
    %v298 = vld [vmem:[#allocation5 + $0x5b4] sm:$0xff]
    %v299 = vld [vmem:[#allocation5 + $0x5bc] sm:$0xff]
    %v300 = vld [vmem:[#allocation5 + $0x5c4] sm:$0xf]
    %v301 = vld [vmem:[#allocation5 + $0x5c8] sm:$0xff]
    %v302 = vld [vmem:[#allocation5 + $0x5d0] sm:$0xff]
    %v303 = vld [vmem:[#allocation5 + $0x5d8] sm:$0xf]
    %v304 = vld [vmem:[#allocation5 + $0x5dc] sm:$0xff]
    %v305 = vld [vmem:[#allocation5 + $0x5e4] sm:$0xff]
    %v306 = vld [vmem:[#allocation5 + $0x5ec] sm:$0xf]
    %v307 = vld [vmem:[#allocation5 + $0x5f0] sm:$0xff]
    %v308 = vld [vmem:[#allocation5 + $0x5f8] sm:$0xff]
    %v309 = vld [vmem:[#allocation5 + $0x600] sm:$0xf]
    %v310 = vld [vmem:[#allocation5 + $0x604] sm:$0xff]
    %v311 = vld [vmem:[#allocation5 + $0x60c] sm:$0xff]
    %v312 = vld [vmem:[#allocation5 + $0x614] sm:$0xf]
    %v313 = vld [vmem:[#allocation5 + $0x618] sm:$0xff]
    %v314 = vld [vmem:[#allocation5 + $0x620] sm:$0xff]
    %v315 = vld [vmem:[#allocation5 + $0x628] sm:$0xf]
    %v316 = vld [vmem:[#allocation5 + $0x62c] sm:$0xff]
    %v317 = vld [vmem:[#allocation5 + $0x634] sm:$0xff]
    %v318 = vld [vmem:[#allocation5 + $0x63c] sm:$0xf]
    %v319 = vld [vmem:[#allocation5 + $0x640] sm:$0xff]
    %v320 = vld [vmem:[#allocation5 + $0x648] sm:$0xff]
    %v321 = vld [vmem:[#allocation5 + $0x650] sm:$0xf]
    %v322 = vld [vmem:[#allocation5 + $0x654] sm:$0xff]
    %v323 = vld [vmem:[#allocation5 + $0x65c] sm:$0xff]
    %v324 = vld [vmem:[#allocation5 + $0x664] sm:$0xf]
    %v325 = vld [vmem:[#allocation5 + $0x668] sm:$0xff]
    %v326 = vld [vmem:[#allocation5 + $0x670] sm:$0xff]
    %v327 = vld [vmem:[#allocation5 + $0x678] sm:$0xf]
    %v328 = vld [vmem:[#allocation5 + $0x67c] sm:$0xff]
    %v329 = vld [vmem:[#allocation5 + $0x684] sm:$0xff]
    %v330 = vld [vmem:[#allocation5 + $0x68c] sm:$0xf]
    %v331 = vld [vmem:[#allocation5 + $0x690] sm:$0xff]
    %v332 = vld [vmem:[#allocation5 + $0x698] sm:$0xff]
    %v333 = vld [vmem:[#allocation5 + $0x6a0] sm:$0xf]
    %v334 = vld [vmem:[#allocation5 + $0x6a4] sm:$0xff]
    %v335 = vld [vmem:[#allocation5 + $0x6ac] sm:$0xff]
    %v336 = vld [vmem:[#allocation5 + $0x6b4] sm:$0xf]
    %v337 = vld [vmem:[#allocation5 + $0x6b8] sm:$0xff]
    %v338 = vld [vmem:[#allocation5 + $0x6c0] sm:$0xff]
    %v339 = vld [vmem:[#allocation5 + $0x6c8] sm:$0xf]
    %v340 = vld [vmem:[#allocation5 + $0x6cc] sm:$0xff]
    %v341 = vld [vmem:[#allocation5 + $0x6d4] sm:$0xff]
    %v342 = vld [vmem:[#allocation5 + $0x6dc] sm:$0xf]
    %v343 = vld [vmem:[#allocation5 + $0x6e0] sm:$0xff]
    %v344 = vld [vmem:[#allocation5 + $0x6e8] sm:$0xff]
    %v345 = vld [vmem:[#allocation5 + $0x6f0] sm:$0xf]
    %v346 = vld [vmem:[#allocation5 + $0x6f4] sm:$0xff]
    %v347 = vld [vmem:[#allocation5 + $0x6fc] sm:$0xff]
    %v348 = vld [vmem:[#allocation5 + $0x704] sm:$0xf]
    %v349 = vld [vmem:[#allocation5 + $0x708] sm:$0xff]
    %v350 = vld [vmem:[#allocation5 + $0x710] sm:$0xff]
    %v351 = vld [vmem:[#allocation5 + $0x718] sm:$0xf]
    %v352 = vld [vmem:[#allocation5 + $0x71c] sm:$0xff]
    %v353 = vld [vmem:[#allocation5 + $0x724] sm:$0xff]
    %v354 = vld [vmem:[#allocation5 + $0x72c] sm:$0xf]
    %v355 = vld [vmem:[#allocation5 + $0x730] sm:$0xff]
    %v356 = vld [vmem:[#allocation5 + $0x738] sm:$0xff]
    %v357 = vld [vmem:[#allocation5 + $0x740] sm:$0xf]
    %v358 = vld [vmem:[#allocation5 + $0x744] sm:$0xff]
    %v359 = vld [vmem:[#allocation5 + $0x74c] sm:$0xff]
    %v360 = vld [vmem:[#allocation5 + $0x754] sm:$0xf]
    %v361 = vld [vmem:[#allocation5 + $0x758] sm:$0xff]
    %v362 = vld [vmem:[#allocation5 + $0x760] sm:$0xff]
    %v363 = vld [vmem:[#allocation5 + $0x768] sm:$0xf]
    %v364 = vld [vmem:[#allocation5 + $0x76c] sm:$0xff]
    %v365 = vld [vmem:[#allocation5 + $0x774] sm:$0xff]
    %v366 = vld [vmem:[#allocation5 + $0x77c] sm:$0xf]
    %v367 = vld [vmem:[#allocation5 + $0x780] sm:$0xff]
    %v368 = vld [vmem:[#allocation5 + $0x788] sm:$0xff]
    %v369 = vld [vmem:[#allocation5 + $0x790] sm:$0xf]
    %v370 = vld [vmem:[#allocation5 + $0x794] sm:$0xff]
    %v371 = vld [vmem:[#allocation5 + $0x79c] sm:$0xff]
    %v372 = vld [vmem:[#allocation5 + $0x7a4] sm:$0xf]
    %v373 = vld [vmem:[#allocation5 + $0x7a8] sm:$0xff]
    %v374 = vld [vmem:[#allocation5 + $0x7b0] sm:$0xff]
    %v375 = vld [vmem:[#allocation5 + $0x7b8] sm:$0xf]
    %v376 = vld [vmem:[#allocation5 + $0x7bc] sm:$0xff]
    %v377 = vld [vmem:[#allocation5 + $0x7c4] sm:$0xff]
    %v378 = vld [vmem:[#allocation5 + $0x7cc] sm:$0xf]
    %v379 = vld [vmem:[#allocation5 + $0x7d0] sm:$0xff]
    %v380 = vld [vmem:[#allocation5 + $0x7d8] sm:$0xff]
    %v381 = vld [vmem:[#allocation5 + $0x7e0] sm:$0xf]
    %v382 = vld [vmem:[#allocation5 + $0x7e4] sm:$0xff]
    %v383 = vld [vmem:[#allocation5 + $0x7ec] sm:$0xff]
    %v384 = vld [vmem:[#allocation5 + $0x7f4] sm:$0xf]
    %v385 = vld [vmem:[#allocation5 + $0x7f8] sm:$0xff]
    %v386 = vld [vmem:[#allocation5 + $0x800] sm:$0xff]
    %v387 = vld [vmem:[#allocation5 + $0x808] sm:$0xf]
    %v388 = vld [vmem:[#allocation5 + $0x80c] sm:$0xff]
    %v389 = vld [vmem:[#allocation5 + $0x814] sm:$0xff]
    %v390 = vld [vmem:[#allocation5 + $0x81c] sm:$0xf]
    %v391 = vld [vmem:[#allocation5 + $0x820] sm:$0xff]
    %v392 = vld [vmem:[#allocation5 + $0x828] sm:$0xff]
    %v393 = vld [vmem:[#allocation5 + $0x830] sm:$0xf]
    %v394 = vld [vmem:[#allocation5 + $0x834] sm:$0xff]
    %v395 = vld [vmem:[#allocation5 + $0x83c] sm:$0xff]
    %v396 = vld [vmem:[#allocation5 + $0x844] sm:$0xf]
    %v397 = vld [vmem:[#allocation5 + $0x848] sm:$0xff]
    %v398 = vld [vmem:[#allocation5 + $0x850] sm:$0xff]
    %v399 = vld [vmem:[#allocation5 + $0x858] sm:$0xf]
    %v400 = vld [vmem:[#allocation5 + $0x85c] sm:$0xff]
    %v401 = vld [vmem:[#allocation5 + $0x864] sm:$0xff]
    %v402 = vld [vmem:[#allocation5 + $0x86c] sm:$0xf]
    %v403 = vld [vmem:[#allocation5 + $0x870] sm:$0xff]
    %v404 = vld [vmem:[#allocation5 + $0x878] sm:$0xff]
    %v405 = vld [vmem:[#allocation5 + $0x880] sm:$0xf]
    %v406 = vld [vmem:[#allocation5 + $0x884] sm:$0xff]
    %v407 = vld [vmem:[#allocation5 + $0x88c] sm:$0xff]
    %v408 = vld [vmem:[#allocation5 + $0x894] sm:$0xf]
    %v409 = vld [vmem:[#allocation5 + $0x898] sm:$0xff]
    %v410 = vld [vmem:[#allocation5 + $0x8a0] sm:$0xff]
    %v411 = vld [vmem:[#allocation5 + $0x8a8] sm:$0xf]
    %v412 = vld [vmem:[#allocation5 + $0x8ac] sm:$0xff]
    %v413 = vld [vmem:[#allocation5 + $0x8b4] sm:$0xff]
    %v414 = vld [vmem:[#allocation5 + $0x8bc] sm:$0xf]
    %v415 = vld [vmem:[#allocation5 + $0x8c0] sm:$0xff]
    %v416 = vld [vmem:[#allocation5 + $0x8c8] sm:$0xff]
    %v417 = vld [vmem:[#allocation5 + $0x8d0] sm:$0xf]
    %v418 = vld [vmem:[#allocation5 + $0x8d4] sm:$0xff]
    %v419 = vld [vmem:[#allocation5 + $0x8dc] sm:$0xff]
    %v420 = vld [vmem:[#allocation5 + $0x8e4] sm:$0xf]
    %v421 = vld [vmem:[#allocation5 + $0x8e8] sm:$0xff]
    %v422 = vld [vmem:[#allocation5 + $0x8f0] sm:$0xff]
    %v423 = vld [vmem:[#allocation5 + $0x8f8] sm:$0xf]
    %v424 = vld [vmem:[#allocation5 + $0x8fc] sm:$0xff]
    %v425 = vld [vmem:[#allocation5 + $0x904] sm:$0xff]
    %v426 = vld [vmem:[#allocation5 + $0x90c] sm:$0xf]
    %v427 = vld [vmem:[#allocation5 + $0x910] sm:$0xff]
    %v428 = vld [vmem:[#allocation5 + $0x918] sm:$0xff]
    %v429 = vld [vmem:[#allocation5 + $0x920] sm:$0xf]
    %v430 = vld [vmem:[#allocation5 + $0x924] sm:$0xff]
    %v431 = vld [vmem:[#allocation5 + $0x92c] sm:$0xff]
    %v432 = vld [vmem:[#allocation5 + $0x934] sm:$0xf]
    %v433 = vld [vmem:[#allocation5 + $0x938] sm:$0xff]
    %v434 = vld [vmem:[#allocation5 + $0x940] sm:$0xff]
    %v435 = vld [vmem:[#allocation5 + $0x948] sm:$0xf]
    %v436 = vld [vmem:[#allocation5 + $0x94c] sm:$0xff]
    %v437 = vld [vmem:[#allocation5 + $0x954] sm:$0xff]
    %v438 = vld [vmem:[#allocation5 + $0x95c] sm:$0xf]
    %v439 = vld [vmem:[#allocation5 + $0x960] sm:$0xff]
    %v440 = vld [vmem:[#allocation5 + $0x968] sm:$0xff]
    %v441 = vld [vmem:[#allocation5 + $0x970] sm:$0xf]
    %v442 = vld [vmem:[#allocation5 + $0x974] sm:$0xff]
    %v443 = vld [vmem:[#allocation5 + $0x97c] sm:$0xff]
    %v444 = vld [vmem:[#allocation5 + $0x984] sm:$0xf]
    %v445 = vld [vmem:[#allocation5 + $0x988] sm:$0xff]
    %v446 = vld [vmem:[#allocation5 + $0x990] sm:$0xff]
    %v447 = vld [vmem:[#allocation5 + $0x998] sm:$0xf]
    %v448 = vld [vmem:[#allocation5 + $0x99c] sm:$0xff]
    %v449 = vld [vmem:[#allocation5 + $0x9a4] sm:$0xff]
    %v450 = vld [vmem:[#allocation5 + $0x9ac] sm:$0xf]
    %v451 = vld [vmem:[#allocation5 + $0x9b0] sm:$0xff]
    %v452 = vld [vmem:[#allocation5 + $0x9b8] sm:$0xff]
    %v453 = vld [vmem:[#allocation5 + $0x9c0] sm:$0xf]
    %v454 = vld [vmem:[#allocation5 + $0x9c4] sm:$0xff]
    %v455 = vld [vmem:[#allocation5 + $0x9cc] sm:$0xff]
    %v456 = vld [vmem:[#allocation5 + $0x9d4] sm:$0xf]
    %v457 = vld [vmem:[#allocation5 + $0x9d8] sm:$0xff]
    %v458 = vld [vmem:[#allocation5 + $0x9e0] sm:$0xff]
    %v459 = vld [vmem:[#allocation5 + $0x9e8] sm:$0xf]
    %v460 = vld [vmem:[#allocation5 + $0x9ec] sm:$0xff]
    %v461 = vld [vmem:[#allocation5 + $0x9f4] sm:$0xff]
    %v462 = vld [vmem:[#allocation5 + $0x9fc] sm:$0xf]
    %v463 = vld [vmem:[#allocation7] sm:$0x1f]
    %v465 = vlaneseq
    %v466 = vshrl.u32 %v465, 7
    %v467 = vsub.s32 0, %v466
    %v468 = vrot.slane %v463, %v467
    %v469 = vlaneseq
    %v470 = vshrl.u32 %v469, 7
    %v471 = vsub.s32 1, %v470
    %v472 = vrot.slane %v463, %v471
    %v473 = vlaneseq
    %v474 = vshrl.u32 %v473, 7
    %v475 = vsub.s32 2, %v474
    %v476 = vrot.slane %v463, %v475
    %v477 = vlaneseq
    %v478 = vshrl.u32 %v477, 7
    %v479 = vsub.s32 3, %v478
    %v480 = vrot.slane %v463, %v479
    %v481 = vlaneseq
    %v482 = vshrl.u32 %v481, 7
    %v483 = vsub.s32 4, %v482
    %v484 = vrot.slane %v463, %v483
    %v874 = vunpack.c.l.b16 %v79
    %v875 = vunpack.c.h.b16 %v79
    %v876 = vunpack.c.l.b16 %v80
    %v877 = vunpack.c.h.b16 %v80
    %v878 = vunpack.c.l.b16 %v81
    %v879 = vunpack.c.l.b16 %v82
    %v880 = vunpack.c.h.b16 %v82
    %v881 = vunpack.c.l.b16 %v83
    %v882 = vunpack.c.h.b16 %v83
    %v883 = vunpack.c.l.b16 %v84
    %v884 = vunpack.c.l.b16 %v85
    %v885 = vunpack.c.h.b16 %v85
    %v886 = vunpack.c.l.b16 %v86
    %v887 = vunpack.c.h.b16 %v86
    %v888 = vunpack.c.l.b16 %v87
    %v889 = vunpack.c.l.b16 %v88
    %v890 = vunpack.c.h.b16 %v88
    %v891 = vunpack.c.l.b16 %v89
    %v892 = vunpack.c.h.b16 %v89
    %v893 = vunpack.c.l.b16 %v90
    %v894 = vunpack.c.l.b16 %v91
    %v895 = vunpack.c.h.b16 %v91
    %v896 = vunpack.c.l.b16 %v92
    %v897 = vunpack.c.h.b16 %v92
    %v898 = vunpack.c.l.b16 %v93
    %v899 = vunpack.c.l.b16 %v94
    %v900 = vunpack.c.h.b16 %v94
    %v901 = vunpack.c.l.b16 %v95
    %v902 = vunpack.c.h.b16 %v95
    %v903 = vunpack.c.l.b16 %v96
    %v904 = vunpack.c.l.b16 %v97
    %v905 = vunpack.c.h.b16 %v97
    %v906 = vunpack.c.l.b16 %v98
    %v907 = vunpack.c.h.b16 %v98
    %v908 = vunpack.c.l.b16 %v99
    %v909 = vunpack.c.l.b16 %v100
    %v910 = vunpack.c.h.b16 %v100
    %v911 = vunpack.c.l.b16 %v101
    %v912 = vunpack.c.h.b16 %v101
    %v913 = vunpack.c.l.b16 %v102
    %v914 = vunpack.c.l.b16 %v103
    %v915 = vunpack.c.h.b16 %v103
    %v916 = vunpack.c.l.b16 %v104
    %v917 = vunpack.c.h.b16 %v104
    %v918 = vunpack.c.l.b16 %v105
    %v919 = vunpack.c.l.b16 %v106
    %v920 = vunpack.c.h.b16 %v106
    %v921 = vunpack.c.l.b16 %v107
    %v922 = vunpack.c.h.b16 %v107
    %v923 = vunpack.c.l.b16 %v108
    %v924 = vunpack.c.l.b16 %v109
    %v925 = vunpack.c.h.b16 %v109
    %v926 = vunpack.c.l.b16 %v110
    %v927 = vunpack.c.h.b16 %v110
    %v928 = vunpack.c.l.b16 %v111
    %v929 = vunpack.c.l.b16 %v112
    %v930 = vunpack.c.h.b16 %v112
    %v931 = vunpack.c.l.b16 %v113
    %v932 = vunpack.c.h.b16 %v113
    %v933 = vunpack.c.l.b16 %v114
    %v934 = vunpack.c.l.b16 %v115
    %v935 = vunpack.c.h.b16 %v115
    %v936 = vunpack.c.l.b16 %v116
    %v937 = vunpack.c.h.b16 %v116
    %v938 = vunpack.c.l.b16 %v117
    %v939 = vunpack.c.l.b16 %v118
    %v940 = vunpack.c.h.b16 %v118
    %v941 = vunpack.c.l.b16 %v119
    %v942 = vunpack.c.h.b16 %v119
    %v943 = vunpack.c.l.b16 %v120
    %v944 = vunpack.c.l.b16 %v121
    %v945 = vunpack.c.h.b16 %v121
    %v946 = vunpack.c.l.b16 %v122
    %v947 = vunpack.c.h.b16 %v122
    %v948 = vunpack.c.l.b16 %v123
    %v949 = vunpack.c.l.b16 %v124
    %v950 = vunpack.c.h.b16 %v124
    %v951 = vunpack.c.l.b16 %v125
    %v952 = vunpack.c.h.b16 %v125
    %v953 = vunpack.c.l.b16 %v126
    %v954 = vunpack.c.l.b16 %v127
    %v955 = vunpack.c.h.b16 %v127
    %v956 = vunpack.c.l.b16 %v128
    %v957 = vunpack.c.h.b16 %v128
    %v958 = vunpack.c.l.b16 %v129
    %v959 = vunpack.c.l.b16 %v130
    %v960 = vunpack.c.h.b16 %v130
    %v961 = vunpack.c.l.b16 %v131
    %v962 = vunpack.c.h.b16 %v131
    %v963 = vunpack.c.l.b16 %v132
    %v964 = vunpack.c.l.b16 %v133
    %v965 = vunpack.c.h.b16 %v133
    %v966 = vunpack.c.l.b16 %v134
    %v967 = vunpack.c.h.b16 %v134
    %v968 = vunpack.c.l.b16 %v135
    %v969 = vunpack.c.l.b16 %v136
    %v970 = vunpack.c.h.b16 %v136
    %v971 = vunpack.c.l.b16 %v137
    %v972 = vunpack.c.h.b16 %v137
    %v973 = vunpack.c.l.b16 %v138
    %v974 = vunpack.c.l.b16 %v139
    %v975 = vunpack.c.h.b16 %v139
    %v976 = vunpack.c.l.b16 %v140
    %v977 = vunpack.c.h.b16 %v140
    %v978 = vunpack.c.l.b16 %v141
    %v979 = vunpack.c.l.b16 %v142
    %v980 = vunpack.c.h.b16 %v142
    %v981 = vunpack.c.l.b16 %v143
    %v982 = vunpack.c.h.b16 %v143
    %v983 = vunpack.c.l.b16 %v144
    %v984 = vunpack.c.l.b16 %v145
    %v985 = vunpack.c.h.b16 %v145
    %v986 = vunpack.c.l.b16 %v146
    %v987 = vunpack.c.h.b16 %v146
    %v988 = vunpack.c.l.b16 %v147
    %v989 = vunpack.c.l.b16 %v148
    %v990 = vunpack.c.h.b16 %v148
    %v991 = vunpack.c.l.b16 %v149
    %v992 = vunpack.c.h.b16 %v149
    %v993 = vunpack.c.l.b16 %v150
    %v994 = vunpack.c.l.b16 %v151
    %v995 = vunpack.c.h.b16 %v151
    %v996 = vunpack.c.l.b16 %v152
    %v997 = vunpack.c.h.b16 %v152
    %v998 = vunpack.c.l.b16 %v153
    %v999 = vunpack.c.l.b16 %v154
    %v1000 = vunpack.c.h.b16 %v154
    %v1001 = vunpack.c.l.b16 %v155
    %v1002 = vunpack.c.h.b16 %v155
    %v1003 = vunpack.c.l.b16 %v156
    %v1004 = vunpack.c.l.b16 %v157
    %v1005 = vunpack.c.h.b16 %v157
    %v1006 = vunpack.c.l.b16 %v158
    %v1007 = vunpack.c.h.b16 %v158
    %v1008 = vunpack.c.l.b16 %v159
    %v1009 = vunpack.c.l.b16 %v160
    %v1010 = vunpack.c.h.b16 %v160
    %v1011 = vunpack.c.l.b16 %v161
    %v1012 = vunpack.c.h.b16 %v161
    %v1013 = vunpack.c.l.b16 %v162
    %v1014 = vunpack.c.l.b16 %v163
    %v1015 = vunpack.c.h.b16 %v163
    %v1016 = vunpack.c.l.b16 %v164
    %v1017 = vunpack.c.h.b16 %v164
    %v1018 = vunpack.c.l.b16 %v165
    %v1019 = vunpack.c.l.b16 %v166
    %v1020 = vunpack.c.h.b16 %v166
    %v1021 = vunpack.c.l.b16 %v167
    %v1022 = vunpack.c.h.b16 %v167
    %v1023 = vunpack.c.l.b16 %v168
    %v1024 = vunpack.c.l.b16 %v169
    %v1025 = vunpack.c.h.b16 %v169
    %v1026 = vunpack.c.l.b16 %v170
    %v1027 = vunpack.c.h.b16 %v170
    %v1028 = vunpack.c.l.b16 %v171
    %v1029 = vunpack.c.l.b16 %v172
    %v1030 = vunpack.c.h.b16 %v172
    %v1031 = vunpack.c.l.b16 %v173
    %v1032 = vunpack.c.h.b16 %v173
    %v1033 = vunpack.c.l.b16 %v174
    %v1034 = vunpack.c.l.b16 %v175
    %v1035 = vunpack.c.h.b16 %v175
    %v1036 = vunpack.c.l.b16 %v176
    %v1037 = vunpack.c.h.b16 %v176
    %v1038 = vunpack.c.l.b16 %v177
    %v1039 = vunpack.c.l.b16 %v178
    %v1040 = vunpack.c.h.b16 %v178
    %v1041 = vunpack.c.l.b16 %v179
    %v1042 = vunpack.c.h.b16 %v179
    %v1043 = vunpack.c.l.b16 %v180
    %v1044 = vunpack.c.l.b16 %v181
    %v1045 = vunpack.c.h.b16 %v181
    %v1046 = vunpack.c.l.b16 %v182
    %v1047 = vunpack.c.h.b16 %v182
    %v1048 = vunpack.c.l.b16 %v183
    %v1049 = vunpack.c.l.b16 %v184
    %v1050 = vunpack.c.h.b16 %v184
    %v1051 = vunpack.c.l.b16 %v185
    %v1052 = vunpack.c.h.b16 %v185
    %v1053 = vunpack.c.l.b16 %v186
    %v1054 = vunpack.c.l.b16 %v187
    %v1055 = vunpack.c.h.b16 %v187
    %v1056 = vunpack.c.l.b16 %v188
    %v1057 = vunpack.c.h.b16 %v188
    %v1058 = vunpack.c.l.b16 %v189
    %v1059 = vunpack.c.l.b16 %v190
    %v1060 = vunpack.c.h.b16 %v190
    %v1061 = vunpack.c.l.b16 %v191
    %v1062 = vunpack.c.h.b16 %v191
    %v1063 = vunpack.c.l.b16 %v192
    %v1064 = vunpack.c.l.b16 %v193
    %v1065 = vunpack.c.h.b16 %v193
    %v1066 = vunpack.c.l.b16 %v194
    %v1067 = vunpack.c.h.b16 %v194
    %v1068 = vunpack.c.l.b16 %v195
    %v1069 = vunpack.c.l.b16 %v196
    %v1070 = vunpack.c.h.b16 %v196
    %v1071 = vunpack.c.l.b16 %v197
    %v1072 = vunpack.c.h.b16 %v197
    %v1073 = vunpack.c.l.b16 %v198
    %v1074 = vunpack.c.l.b16 %v199
    %v1075 = vunpack.c.h.b16 %v199
    %v1076 = vunpack.c.l.b16 %v200
    %v1077 = vunpack.c.h.b16 %v200
    %v1078 = vunpack.c.l.b16 %v201
    %v1079 = vunpack.c.l.b16 %v202
    %v1080 = vunpack.c.h.b16 %v202
    %v1081 = vunpack.c.l.b16 %v203
    %v1082 = vunpack.c.h.b16 %v203
    %v1083 = vunpack.c.l.b16 %v204
    %v1084 = vunpack.c.l.b16 %v205
    %v1085 = vunpack.c.h.b16 %v205
    %v1086 = vunpack.c.l.b16 %v206
    %v1087 = vunpack.c.h.b16 %v206
    %v1088 = vunpack.c.l.b16 %v207
    %v1089 = vunpack.c.l.b16 %v208
    %v1090 = vunpack.c.h.b16 %v208
    %v1091 = vunpack.c.l.b16 %v209
    %v1092 = vunpack.c.h.b16 %v209
    %v1093 = vunpack.c.l.b16 %v210
    %v1094 = vunpack.c.l.b16 %v211
    %v1095 = vunpack.c.h.b16 %v211
    %v1096 = vunpack.c.l.b16 %v212
    %v1097 = vunpack.c.h.b16 %v212
    %v1098 = vunpack.c.l.b16 %v213
    %v1099 = vunpack.c.l.b16 %v214
    %v1100 = vunpack.c.h.b16 %v214
    %v1101 = vunpack.c.l.b16 %v215
    %v1102 = vunpack.c.h.b16 %v215
    %v1103 = vunpack.c.l.b16 %v216
    %v1104 = vunpack.c.l.b16 %v217
    %v1105 = vunpack.c.h.b16 %v217
    %v1106 = vunpack.c.l.b16 %v218
    %v1107 = vunpack.c.h.b16 %v218
    %v1108 = vunpack.c.l.b16 %v219
    %v1109 = vunpack.c.l.b16 %v220
    %v1110 = vunpack.c.h.b16 %v220
    %v1111 = vunpack.c.l.b16 %v221
    %v1112 = vunpack.c.h.b16 %v221
    %v1113 = vunpack.c.l.b16 %v222
    %v1114 = vunpack.c.l.b16 %v223
    %v1115 = vunpack.c.h.b16 %v223
    %v1116 = vunpack.c.l.b16 %v224
    %v1117 = vunpack.c.h.b16 %v224
    %v1118 = vunpack.c.l.b16 %v225
    %v1119 = vunpack.c.l.b16 %v226
    %v1120 = vunpack.c.h.b16 %v226
    %v1121 = vunpack.c.l.b16 %v227
    %v1122 = vunpack.c.h.b16 %v227
    %v1123 = vunpack.c.l.b16 %v228
    %v1124 = vunpack.c.l.b16 %v229
    %v1125 = vunpack.c.h.b16 %v229
    %v1126 = vunpack.c.l.b16 %v230
    %v1127 = vunpack.c.h.b16 %v230
    %v1128 = vunpack.c.l.b16 %v231
    %v1129 = vunpack.c.l.b16 %v232
    %v1130 = vunpack.c.h.b16 %v232
    %v1131 = vunpack.c.l.b16 %v233
    %v1132 = vunpack.c.h.b16 %v233
    %v1133 = vunpack.c.l.b16 %v234
    %v1134 = vunpack.c.l.b16 %v235
    %v1135 = vunpack.c.h.b16 %v235
    %v1136 = vunpack.c.l.b16 %v236
    %v1137 = vunpack.c.h.b16 %v236
    %v1138 = vunpack.c.l.b16 %v237
    %v1139 = vunpack.c.l.b16 %v238
    %v1140 = vunpack.c.h.b16 %v238
    %v1141 = vunpack.c.l.b16 %v239
    %v1142 = vunpack.c.h.b16 %v239
    %v1143 = vunpack.c.l.b16 %v240
    %v1144 = vunpack.c.l.b16 %v241
    %v1145 = vunpack.c.h.b16 %v241
    %v1146 = vunpack.c.l.b16 %v242
    %v1147 = vunpack.c.h.b16 %v242
    %v1148 = vunpack.c.l.b16 %v243
    %v1149 = vunpack.c.l.b16 %v244
    %v1150 = vunpack.c.h.b16 %v244
    %v1151 = vunpack.c.l.b16 %v245
    %v1152 = vunpack.c.h.b16 %v245
    %v1153 = vunpack.c.l.b16 %v246
    %v1154 = vunpack.c.l.b16 %v247
    %v1155 = vunpack.c.h.b16 %v247
    %v1156 = vunpack.c.l.b16 %v248
    %v1157 = vunpack.c.h.b16 %v248
    %v1158 = vunpack.c.l.b16 %v249
    %v1159 = vunpack.c.l.b16 %v250
    %v1160 = vunpack.c.h.b16 %v250
    %v1161 = vunpack.c.l.b16 %v251
    %v1162 = vunpack.c.h.b16 %v251
    %v1163 = vunpack.c.l.b16 %v252
    %v1164 = vunpack.c.l.b16 %v253
    %v1165 = vunpack.c.h.b16 %v253
    %v1166 = vunpack.c.l.b16 %v254
    %v1167 = vunpack.c.h.b16 %v254
    %v1168 = vunpack.c.l.b16 %v255
    %v1169 = vunpack.c.l.b16 %v256
    %v1170 = vunpack.c.h.b16 %v256
    %v1171 = vunpack.c.l.b16 %v257
    %v1172 = vunpack.c.h.b16 %v257
    %v1173 = vunpack.c.l.b16 %v258
    %v1174 = vunpack.c.l.b16 %v259
    %v1175 = vunpack.c.h.b16 %v259
    %v1176 = vunpack.c.l.b16 %v260
    %v1177 = vunpack.c.h.b16 %v260
    %v1178 = vunpack.c.l.b16 %v261
    %v1179 = vunpack.c.l.b16 %v262
    %v1180 = vunpack.c.h.b16 %v262
    %v1181 = vunpack.c.l.b16 %v263
    %v1182 = vunpack.c.h.b16 %v263
    %v1183 = vunpack.c.l.b16 %v264
    %v1184 = vunpack.c.l.b16 %v265
    %v1185 = vunpack.c.h.b16 %v265
    %v1186 = vunpack.c.l.b16 %v266
    %v1187 = vunpack.c.h.b16 %v266
    %v1188 = vunpack.c.l.b16 %v267
    %v1189 = vunpack.c.l.b16 %v268
    %v1190 = vunpack.c.h.b16 %v268
    %v1191 = vunpack.c.l.b16 %v269
    %v1192 = vunpack.c.h.b16 %v269
    %v1193 = vunpack.c.l.b16 %v270
    %v1194 = vunpack.c.l.b16 %v271
    %v1195 = vunpack.c.h.b16 %v271
    %v1196 = vunpack.c.l.b16 %v272
    %v1197 = vunpack.c.h.b16 %v272
    %v1198 = vunpack.c.l.b16 %v273
    %v1199 = vunpack.c.l.b16 %v274
    %v1200 = vunpack.c.h.b16 %v274
    %v1201 = vunpack.c.l.b16 %v275
    %v1202 = vunpack.c.h.b16 %v275
    %v1203 = vunpack.c.l.b16 %v276
    %v1204 = vunpack.c.l.b16 %v277
    %v1205 = vunpack.c.h.b16 %v277
    %v1206 = vunpack.c.l.b16 %v278
    %v1207 = vunpack.c.h.b16 %v278
    %v1208 = vunpack.c.l.b16 %v279
    %v1209 = vunpack.c.l.b16 %v280
    %v1210 = vunpack.c.h.b16 %v280
    %v1211 = vunpack.c.l.b16 %v281
    %v1212 = vunpack.c.h.b16 %v281
    %v1213 = vunpack.c.l.b16 %v282
    %v1214 = vunpack.c.l.b16 %v283
    %v1215 = vunpack.c.h.b16 %v283
    %v1216 = vunpack.c.l.b16 %v284
    %v1217 = vunpack.c.h.b16 %v284
    %v1218 = vunpack.c.l.b16 %v285
    %v1219 = vunpack.c.l.b16 %v286
    %v1220 = vunpack.c.h.b16 %v286
    %v1221 = vunpack.c.l.b16 %v287
    %v1222 = vunpack.c.h.b16 %v287
    %v1223 = vunpack.c.l.b16 %v288
    %v1224 = vunpack.c.l.b16 %v289
    %v1225 = vunpack.c.h.b16 %v289
    %v1226 = vunpack.c.l.b16 %v290
    %v1227 = vunpack.c.h.b16 %v290
    %v1228 = vunpack.c.l.b16 %v291
    %v1229 = vunpack.c.l.b16 %v292
    %v1230 = vunpack.c.h.b16 %v292
    %v1231 = vunpack.c.l.b16 %v293
    %v1232 = vunpack.c.h.b16 %v293
    %v1233 = vunpack.c.l.b16 %v294
    %v1234 = vunpack.c.l.b16 %v295
    %v1235 = vunpack.c.h.b16 %v295
    %v1236 = vunpack.c.l.b16 %v296
    %v1237 = vunpack.c.h.b16 %v296
    %v1238 = vunpack.c.l.b16 %v297
    %v1239 = vunpack.c.l.b16 %v298
    %v1240 = vunpack.c.h.b16 %v298
    %v1241 = vunpack.c.l.b16 %v299
    %v1242 = vunpack.c.h.b16 %v299
    %v1243 = vunpack.c.l.b16 %v300
    %v1244 = vunpack.c.l.b16 %v301
    %v1245 = vunpack.c.h.b16 %v301
    %v1246 = vunpack.c.l.b16 %v302
    %v1247 = vunpack.c.h.b16 %v302
    %v1248 = vunpack.c.l.b16 %v303
    %v1249 = vunpack.c.l.b16 %v304
    %v1250 = vunpack.c.h.b16 %v304
    %v1251 = vunpack.c.l.b16 %v305
    %v1252 = vunpack.c.h.b16 %v305
    %v1253 = vunpack.c.l.b16 %v306
    %v1254 = vunpack.c.l.b16 %v307
    %v1255 = vunpack.c.h.b16 %v307
    %v1256 = vunpack.c.l.b16 %v308
    %v1257 = vunpack.c.h.b16 %v308
    %v1258 = vunpack.c.l.b16 %v309
    %v1259 = vunpack.c.l.b16 %v310
    %v1260 = vunpack.c.h.b16 %v310
    %v1261 = vunpack.c.l.b16 %v311
    %v1262 = vunpack.c.h.b16 %v311
    %v1263 = vunpack.c.l.b16 %v312
    %v1264 = vunpack.c.l.b16 %v313
    %v1265 = vunpack.c.h.b16 %v313
    %v1266 = vunpack.c.l.b16 %v314
    %v1267 = vunpack.c.h.b16 %v314
    %v1268 = vunpack.c.l.b16 %v315
    %v1269 = vunpack.c.l.b16 %v316
    %v1270 = vunpack.c.h.b16 %v316
    %v1271 = vunpack.c.l.b16 %v317
    %v1272 = vunpack.c.h.b16 %v317
    %v1273 = vunpack.c.l.b16 %v318
    %v1274 = vunpack.c.l.b16 %v319
    %v1275 = vunpack.c.h.b16 %v319
    %v1276 = vunpack.c.l.b16 %v320
    %v1277 = vunpack.c.h.b16 %v320
    %v1278 = vunpack.c.l.b16 %v321
    %v1279 = vunpack.c.l.b16 %v322
    %v1280 = vunpack.c.h.b16 %v322
    %v1281 = vunpack.c.l.b16 %v323
    %v1282 = vunpack.c.h.b16 %v323
    %v1283 = vunpack.c.l.b16 %v324
    %v1284 = vunpack.c.l.b16 %v325
    %v1285 = vunpack.c.h.b16 %v325
    %v1286 = vunpack.c.l.b16 %v326
    %v1287 = vunpack.c.h.b16 %v326
    %v1288 = vunpack.c.l.b16 %v327
    %v1289 = vunpack.c.l.b16 %v328
    %v1290 = vunpack.c.h.b16 %v328
    %v1291 = vunpack.c.l.b16 %v329
    %v1292 = vunpack.c.h.b16 %v329
    %v1293 = vunpack.c.l.b16 %v330
    %v1294 = vunpack.c.l.b16 %v331
    %v1295 = vunpack.c.h.b16 %v331
    %v1296 = vunpack.c.l.b16 %v332
    %v1297 = vunpack.c.h.b16 %v332
    %v1298 = vunpack.c.l.b16 %v333
    %v1299 = vunpack.c.l.b16 %v334
    %v1300 = vunpack.c.h.b16 %v334
    %v1301 = vunpack.c.l.b16 %v335
    %v1302 = vunpack.c.h.b16 %v335
    %v1303 = vunpack.c.l.b16 %v336
    %v1304 = vunpack.c.l.b16 %v337
    %v1305 = vunpack.c.h.b16 %v337
    %v1306 = vunpack.c.l.b16 %v338
    %v1307 = vunpack.c.h.b16 %v338
    %v1308 = vunpack.c.l.b16 %v339
    %v1309 = vunpack.c.l.b16 %v340
    %v1310 = vunpack.c.h.b16 %v340
    %v1311 = vunpack.c.l.b16 %v341
    %v1312 = vunpack.c.h.b16 %v341
    %v1313 = vunpack.c.l.b16 %v342
    %v1314 = vunpack.c.l.b16 %v343
    %v1315 = vunpack.c.h.b16 %v343
    %v1316 = vunpack.c.l.b16 %v344
    %v1317 = vunpack.c.h.b16 %v344
    %v1318 = vunpack.c.l.b16 %v345
    %v1319 = vunpack.c.l.b16 %v346
    %v1320 = vunpack.c.h.b16 %v346
    %v1321 = vunpack.c.l.b16 %v347
    %v1322 = vunpack.c.h.b16 %v347
    %v1323 = vunpack.c.l.b16 %v348
    %v1324 = vunpack.c.l.b16 %v349
    %v1325 = vunpack.c.h.b16 %v349
    %v1326 = vunpack.c.l.b16 %v350
    %v1327 = vunpack.c.h.b16 %v350
    %v1328 = vunpack.c.l.b16 %v351
    %v1329 = vunpack.c.l.b16 %v352
    %v1330 = vunpack.c.h.b16 %v352
    %v1331 = vunpack.c.l.b16 %v353
    %v1332 = vunpack.c.h.b16 %v353
    %v1333 = vunpack.c.l.b16 %v354
    %v1334 = vunpack.c.l.b16 %v355
    %v1335 = vunpack.c.h.b16 %v355
    %v1336 = vunpack.c.l.b16 %v356
    %v1337 = vunpack.c.h.b16 %v356
    %v1338 = vunpack.c.l.b16 %v357
    %v1339 = vunpack.c.l.b16 %v358
    %v1340 = vunpack.c.h.b16 %v358
    %v1341 = vunpack.c.l.b16 %v359
    %v1342 = vunpack.c.h.b16 %v359
    %v1343 = vunpack.c.l.b16 %v360
    %v1344 = vunpack.c.l.b16 %v361
    %v1345 = vunpack.c.h.b16 %v361
    %v1346 = vunpack.c.l.b16 %v362
    %v1347 = vunpack.c.h.b16 %v362
    %v1348 = vunpack.c.l.b16 %v363
    %v1349 = vunpack.c.l.b16 %v364
    %v1350 = vunpack.c.h.b16 %v364
    %v1351 = vunpack.c.l.b16 %v365
    %v1352 = vunpack.c.h.b16 %v365
    %v1353 = vunpack.c.l.b16 %v366
    %v1354 = vunpack.c.l.b16 %v367
    %v1355 = vunpack.c.h.b16 %v367
    %v1356 = vunpack.c.l.b16 %v368
    %v1357 = vunpack.c.h.b16 %v368
    %v1358 = vunpack.c.l.b16 %v369
    %v1359 = vunpack.c.l.b16 %v370
    %v1360 = vunpack.c.h.b16 %v370
    %v1361 = vunpack.c.l.b16 %v371
    %v1362 = vunpack.c.h.b16 %v371
    %v1363 = vunpack.c.l.b16 %v372
    %v1364 = vunpack.c.l.b16 %v373
    %v1365 = vunpack.c.h.b16 %v373
    %v1366 = vunpack.c.l.b16 %v374
    %v1367 = vunpack.c.h.b16 %v374
    %v1368 = vunpack.c.l.b16 %v375
    %v1369 = vunpack.c.l.b16 %v376
    %v1370 = vunpack.c.h.b16 %v376
    %v1371 = vunpack.c.l.b16 %v377
    %v1372 = vunpack.c.h.b16 %v377
    %v1373 = vunpack.c.l.b16 %v378
    %v1374 = vunpack.c.l.b16 %v379
    %v1375 = vunpack.c.h.b16 %v379
    %v1376 = vunpack.c.l.b16 %v380
    %v1377 = vunpack.c.h.b16 %v380
    %v1378 = vunpack.c.l.b16 %v381
    %v1379 = vunpack.c.l.b16 %v382
    %v1380 = vunpack.c.h.b16 %v382
    %v1381 = vunpack.c.l.b16 %v383
    %v1382 = vunpack.c.h.b16 %v383
    %v1383 = vunpack.c.l.b16 %v384
    %v1384 = vunpack.c.l.b16 %v385
    %v1385 = vunpack.c.h.b16 %v385
    %v1386 = vunpack.c.l.b16 %v386
    %v1387 = vunpack.c.h.b16 %v386
    %v1388 = vunpack.c.l.b16 %v387
    %v1389 = vunpack.c.l.b16 %v388
    %v1390 = vunpack.c.h.b16 %v388
    %v1391 = vunpack.c.l.b16 %v389
    %v1392 = vunpack.c.h.b16 %v389
    %v1393 = vunpack.c.l.b16 %v390
    %v1394 = vunpack.c.l.b16 %v391
    %v1395 = vunpack.c.h.b16 %v391
    %v1396 = vunpack.c.l.b16 %v392
    %v1397 = vunpack.c.h.b16 %v392
    %v1398 = vunpack.c.l.b16 %v393
    %v1399 = vunpack.c.l.b16 %v394
    %v1400 = vunpack.c.h.b16 %v394
    %v1401 = vunpack.c.l.b16 %v395
    %v1402 = vunpack.c.h.b16 %v395
    %v1403 = vunpack.c.l.b16 %v396
    %v1404 = vunpack.c.l.b16 %v397
    %v1405 = vunpack.c.h.b16 %v397
    %v1406 = vunpack.c.l.b16 %v398
    %v1407 = vunpack.c.h.b16 %v398
    %v1408 = vunpack.c.l.b16 %v399
    %v1409 = vunpack.c.l.b16 %v400
    %v1410 = vunpack.c.h.b16 %v400
    %v1411 = vunpack.c.l.b16 %v401
    %v1412 = vunpack.c.h.b16 %v401
    %v1413 = vunpack.c.l.b16 %v402
    %v1414 = vunpack.c.l.b16 %v403
    %v1415 = vunpack.c.h.b16 %v403
    %v1416 = vunpack.c.l.b16 %v404
    %v1417 = vunpack.c.h.b16 %v404
    %v1418 = vunpack.c.l.b16 %v405
    %v1419 = vunpack.c.l.b16 %v406
    %v1420 = vunpack.c.h.b16 %v406
    %v1421 = vunpack.c.l.b16 %v407
    %v1422 = vunpack.c.h.b16 %v407
    %v1423 = vunpack.c.l.b16 %v408
    %v1424 = vunpack.c.l.b16 %v409
    %v1425 = vunpack.c.h.b16 %v409
    %v1426 = vunpack.c.l.b16 %v410
    %v1427 = vunpack.c.h.b16 %v410
    %v1428 = vunpack.c.l.b16 %v411
    %v1429 = vunpack.c.l.b16 %v412
    %v1430 = vunpack.c.h.b16 %v412
    %v1431 = vunpack.c.l.b16 %v413
    %v1432 = vunpack.c.h.b16 %v413
    %v1433 = vunpack.c.l.b16 %v414
    %v1434 = vunpack.c.l.b16 %v415
    %v1435 = vunpack.c.h.b16 %v415
    %v1436 = vunpack.c.l.b16 %v416
    %v1437 = vunpack.c.h.b16 %v416
    %v1438 = vunpack.c.l.b16 %v417
    %v1439 = vunpack.c.l.b16 %v418
    %v1440 = vunpack.c.h.b16 %v418
    %v1441 = vunpack.c.l.b16 %v419
    %v1442 = vunpack.c.h.b16 %v419
    %v1443 = vunpack.c.l.b16 %v420
    %v1444 = vunpack.c.l.b16 %v421
    %v1445 = vunpack.c.h.b16 %v421
    %v1446 = vunpack.c.l.b16 %v422
    %v1447 = vunpack.c.h.b16 %v422
    %v1448 = vunpack.c.l.b16 %v423
    %v1449 = vunpack.c.l.b16 %v424
    %v1450 = vunpack.c.h.b16 %v424
    %v1451 = vunpack.c.l.b16 %v425
    %v1452 = vunpack.c.h.b16 %v425
    %v1453 = vunpack.c.l.b16 %v426
    %v1454 = vunpack.c.l.b16 %v427
    %v1455 = vunpack.c.h.b16 %v427
    %v1456 = vunpack.c.l.b16 %v428
    %v1457 = vunpack.c.h.b16 %v428
    %v1458 = vunpack.c.l.b16 %v429
    %v1459 = vunpack.c.l.b16 %v430
    %v1460 = vunpack.c.h.b16 %v430
    %v1461 = vunpack.c.l.b16 %v431
    %v1462 = vunpack.c.h.b16 %v431
    %v1463 = vunpack.c.l.b16 %v432
    %v1464 = vunpack.c.l.b16 %v433
    %v1465 = vunpack.c.h.b16 %v433
    %v1466 = vunpack.c.l.b16 %v434
    %v1467 = vunpack.c.h.b16 %v434
    %v1468 = vunpack.c.l.b16 %v435
    %v1469 = vunpack.c.l.b16 %v436
    %v1470 = vunpack.c.h.b16 %v436
    %v1471 = vunpack.c.l.b16 %v437
    %v1472 = vunpack.c.h.b16 %v437
    %v1473 = vunpack.c.l.b16 %v438
    %v1474 = vunpack.c.l.b16 %v439
    %v1475 = vunpack.c.h.b16 %v439
    %v1476 = vunpack.c.l.b16 %v440
    %v1477 = vunpack.c.h.b16 %v440
    %v1478 = vunpack.c.l.b16 %v441
    %v1479 = vunpack.c.l.b16 %v442
    %v1480 = vunpack.c.h.b16 %v442
    %v1481 = vunpack.c.l.b16 %v443
    %v1482 = vunpack.c.h.b16 %v443
    %v1483 = vunpack.c.l.b16 %v444
    %v1484 = vunpack.c.l.b16 %v445
    %v1485 = vunpack.c.h.b16 %v445
    %v1486 = vunpack.c.l.b16 %v446
    %v1487 = vunpack.c.h.b16 %v446
    %v1488 = vunpack.c.l.b16 %v447
    %v1489 = vunpack.c.l.b16 %v448
    %v1490 = vunpack.c.h.b16 %v448
    %v1491 = vunpack.c.l.b16 %v449
    %v1492 = vunpack.c.h.b16 %v449
    %v1493 = vunpack.c.l.b16 %v450
    %v1494 = vunpack.c.l.b16 %v451
    %v1495 = vunpack.c.h.b16 %v451
    %v1496 = vunpack.c.l.b16 %v452
    %v1497 = vunpack.c.h.b16 %v452
    %v1498 = vunpack.c.l.b16 %v453
    %v1499 = vunpack.c.l.b16 %v454
    %v1500 = vunpack.c.h.b16 %v454
    %v1501 = vunpack.c.l.b16 %v455
    %v1502 = vunpack.c.h.b16 %v455
    %v1503 = vunpack.c.l.b16 %v456
    %v1504 = vunpack.c.l.b16 %v457
    %v1505 = vunpack.c.h.b16 %v457
    %v1506 = vunpack.c.l.b16 %v458
    %v1507 = vunpack.c.h.b16 %v458
    %v1508 = vunpack.c.l.b16 %v459
    %v1509 = vunpack.c.l.b16 %v460
    %v1510 = vunpack.c.h.b16 %v460
    %v1511 = vunpack.c.l.b16 %v461
    %v1512 = vunpack.c.h.b16 %v461
    %v1513 = vunpack.c.l.b16 %v462
    %v1514 = vpack.c.b16 %v879, %v874
    %v1515 = vpack.c.b16 %v880, %v875
    %v1516 = vpack.c.b16 %v881, %v876
    %v1517 = vpack.c.b16 %v882, %v877
    %v1518 = vpack.c.b16 %v883, %v878
    %v1519 = vpack.c.b16 %v889, %v884
    %v1520 = vpack.c.b16 %v890, %v885
    %v1521 = vpack.c.b16 %v891, %v886
    %v1522 = vpack.c.b16 %v892, %v887
    %v1523 = vpack.c.b16 %v893, %v888
    %v1524 = vpack.c.b16 %v899, %v894
    %v1525 = vpack.c.b16 %v900, %v895
    %v1526 = vpack.c.b16 %v901, %v896
    %v1527 = vpack.c.b16 %v902, %v897
    %v1528 = vpack.c.b16 %v903, %v898
    %v1529 = vpack.c.b16 %v909, %v904
    %v1530 = vpack.c.b16 %v910, %v905
    %v1531 = vpack.c.b16 %v911, %v906
    %v1532 = vpack.c.b16 %v912, %v907
    %v1533 = vpack.c.b16 %v913, %v908
    %v1534 = vpack.c.b16 %v919, %v914
    %v1535 = vpack.c.b16 %v920, %v915
    %v1536 = vpack.c.b16 %v921, %v916
    %v1537 = vpack.c.b16 %v922, %v917
    %v1538 = vpack.c.b16 %v923, %v918
    %v1539 = vpack.c.b16 %v929, %v924
    %v1540 = vpack.c.b16 %v930, %v925
    %v1541 = vpack.c.b16 %v931, %v926
    %v1542 = vpack.c.b16 %v932, %v927
    %v1543 = vpack.c.b16 %v933, %v928
    %v1544 = vpack.c.b16 %v939, %v934
    %v1545 = vpack.c.b16 %v940, %v935
    %v1546 = vpack.c.b16 %v941, %v936
    %v1547 = vpack.c.b16 %v942, %v937
    %v1548 = vpack.c.b16 %v943, %v938
    %v1549 = vpack.c.b16 %v949, %v944
    %v1550 = vpack.c.b16 %v950, %v945
    %v1551 = vpack.c.b16 %v951, %v946
    %v1552 = vpack.c.b16 %v952, %v947
    %v1553 = vpack.c.b16 %v953, %v948
    %v1554 = vpack.c.b16 %v959, %v954
    %v1555 = vpack.c.b16 %v960, %v955
    %v1556 = vpack.c.b16 %v961, %v956
    %v1557 = vpack.c.b16 %v962, %v957
    %v1558 = vpack.c.b16 %v963, %v958
    %v1559 = vpack.c.b16 %v969, %v964
    %v1560 = vpack.c.b16 %v970, %v965
    %v1561 = vpack.c.b16 %v971, %v966
    %v1562 = vpack.c.b16 %v972, %v967
    %v1563 = vpack.c.b16 %v973, %v968
    %v1564 = vpack.c.b16 %v979, %v974
    %v1565 = vpack.c.b16 %v980, %v975
    %v1566 = vpack.c.b16 %v981, %v976
    %v1567 = vpack.c.b16 %v982, %v977
    %v1568 = vpack.c.b16 %v983, %v978
    %v1569 = vpack.c.b16 %v989, %v984
    %v1570 = vpack.c.b16 %v990, %v985
    %v1571 = vpack.c.b16 %v991, %v986
    %v1572 = vpack.c.b16 %v992, %v987
    %v1573 = vpack.c.b16 %v993, %v988
    %v1574 = vpack.c.b16 %v999, %v994
    %v1575 = vpack.c.b16 %v1000, %v995
    %v1576 = vpack.c.b16 %v1001, %v996
    %v1577 = vpack.c.b16 %v1002, %v997
    %v1578 = vpack.c.b16 %v1003, %v998
    %v1579 = vpack.c.b16 %v1009, %v1004
    %v1580 = vpack.c.b16 %v1010, %v1005
    %v1581 = vpack.c.b16 %v1011, %v1006
    %v1582 = vpack.c.b16 %v1012, %v1007
    %v1583 = vpack.c.b16 %v1013, %v1008
    %v1584 = vpack.c.b16 %v1019, %v1014
    %v1585 = vpack.c.b16 %v1020, %v1015
    %v1586 = vpack.c.b16 %v1021, %v1016
    %v1587 = vpack.c.b16 %v1022, %v1017
    %v1588 = vpack.c.b16 %v1023, %v1018
    %v1589 = vpack.c.b16 %v1029, %v1024
    %v1590 = vpack.c.b16 %v1030, %v1025
    %v1591 = vpack.c.b16 %v1031, %v1026
    %v1592 = vpack.c.b16 %v1032, %v1027
    %v1593 = vpack.c.b16 %v1033, %v1028
    %v1594 = vpack.c.b16 %v1039, %v1034
    %v1595 = vpack.c.b16 %v1040, %v1035
    %v1596 = vpack.c.b16 %v1041, %v1036
    %v1597 = vpack.c.b16 %v1042, %v1037
    %v1598 = vpack.c.b16 %v1043, %v1038
    %v1599 = vpack.c.b16 %v1049, %v1044
    %v1600 = vpack.c.b16 %v1050, %v1045
    %v1601 = vpack.c.b16 %v1051, %v1046
    %v1602 = vpack.c.b16 %v1052, %v1047
    %v1603 = vpack.c.b16 %v1053, %v1048
    %v1604 = vpack.c.b16 %v1059, %v1054
    %v1605 = vpack.c.b16 %v1060, %v1055
    %v1606 = vpack.c.b16 %v1061, %v1056
    %v1607 = vpack.c.b16 %v1062, %v1057
    %v1608 = vpack.c.b16 %v1063, %v1058
    %v1609 = vpack.c.b16 %v1069, %v1064
    %v1610 = vpack.c.b16 %v1070, %v1065
    %v1611 = vpack.c.b16 %v1071, %v1066
    %v1612 = vpack.c.b16 %v1072, %v1067
    %v1613 = vpack.c.b16 %v1073, %v1068
    %v1614 = vpack.c.b16 %v1079, %v1074
    %v1615 = vpack.c.b16 %v1080, %v1075
    %v1616 = vpack.c.b16 %v1081, %v1076
    %v1617 = vpack.c.b16 %v1082, %v1077
    %v1618 = vpack.c.b16 %v1083, %v1078
    %v1619 = vpack.c.b16 %v1089, %v1084
    %v1620 = vpack.c.b16 %v1090, %v1085
    %v1621 = vpack.c.b16 %v1091, %v1086
    %v1622 = vpack.c.b16 %v1092, %v1087
    %v1623 = vpack.c.b16 %v1093, %v1088
    %v1624 = vpack.c.b16 %v1099, %v1094
    %v1625 = vpack.c.b16 %v1100, %v1095
    %v1626 = vpack.c.b16 %v1101, %v1096
    %v1627 = vpack.c.b16 %v1102, %v1097
    %v1628 = vpack.c.b16 %v1103, %v1098
    %v1629 = vpack.c.b16 %v1109, %v1104
    %v1630 = vpack.c.b16 %v1110, %v1105
    %v1631 = vpack.c.b16 %v1111, %v1106
    %v1632 = vpack.c.b16 %v1112, %v1107
    %v1633 = vpack.c.b16 %v1113, %v1108
    %v1634 = vpack.c.b16 %v1119, %v1114
    %v1635 = vpack.c.b16 %v1120, %v1115
    %v1636 = vpack.c.b16 %v1121, %v1116
    %v1637 = vpack.c.b16 %v1122, %v1117
    %v1638 = vpack.c.b16 %v1123, %v1118
    %v1639 = vpack.c.b16 %v1129, %v1124
    %v1640 = vpack.c.b16 %v1130, %v1125
    %v1641 = vpack.c.b16 %v1131, %v1126
    %v1642 = vpack.c.b16 %v1132, %v1127
    %v1643 = vpack.c.b16 %v1133, %v1128
    %v1644 = vpack.c.b16 %v1139, %v1134
    %v1645 = vpack.c.b16 %v1140, %v1135
    %v1646 = vpack.c.b16 %v1141, %v1136
    %v1647 = vpack.c.b16 %v1142, %v1137
    %v1648 = vpack.c.b16 %v1143, %v1138
    %v1649 = vpack.c.b16 %v1149, %v1144
    %v1650 = vpack.c.b16 %v1150, %v1145
    %v1651 = vpack.c.b16 %v1151, %v1146
    %v1652 = vpack.c.b16 %v1152, %v1147
    %v1653 = vpack.c.b16 %v1153, %v1148
    %v1654 = vpack.c.b16 %v1159, %v1154
    %v1655 = vpack.c.b16 %v1160, %v1155
    %v1656 = vpack.c.b16 %v1161, %v1156
    %v1657 = vpack.c.b16 %v1162, %v1157
    %v1658 = vpack.c.b16 %v1163, %v1158
    %v1659 = vpack.c.b16 %v1169, %v1164
    %v1660 = vpack.c.b16 %v1170, %v1165
    %v1661 = vpack.c.b16 %v1171, %v1166
    %v1662 = vpack.c.b16 %v1172, %v1167
    %v1663 = vpack.c.b16 %v1173, %v1168
    %v1664 = vpack.c.b16 %v1179, %v1174
    %v1665 = vpack.c.b16 %v1180, %v1175
    %v1666 = vpack.c.b16 %v1181, %v1176
    %v1667 = vpack.c.b16 %v1182, %v1177
    %v1668 = vpack.c.b16 %v1183, %v1178
    %v1669 = vpack.c.b16 %v1189, %v1184
    %v1670 = vpack.c.b16 %v1190, %v1185
    %v1671 = vpack.c.b16 %v1191, %v1186
    %v1672 = vpack.c.b16 %v1192, %v1187
    %v1673 = vpack.c.b16 %v1193, %v1188
    %v1674 = vpack.c.b16 %v1199, %v1194
    %v1675 = vpack.c.b16 %v1200, %v1195
    %v1676 = vpack.c.b16 %v1201, %v1196
    %v1677 = vpack.c.b16 %v1202, %v1197
    %v1678 = vpack.c.b16 %v1203, %v1198
    %v1679 = vpack.c.b16 %v1209, %v1204
    %v1680 = vpack.c.b16 %v1210, %v1205
    %v1681 = vpack.c.b16 %v1211, %v1206
    %v1682 = vpack.c.b16 %v1212, %v1207
    %v1683 = vpack.c.b16 %v1213, %v1208
    %v1684 = vpack.c.b16 %v1219, %v1214
    %v1685 = vpack.c.b16 %v1220, %v1215
    %v1686 = vpack.c.b16 %v1221, %v1216
    %v1687 = vpack.c.b16 %v1222, %v1217
    %v1688 = vpack.c.b16 %v1223, %v1218
    %v1689 = vpack.c.b16 %v1229, %v1224
    %v1690 = vpack.c.b16 %v1230, %v1225
    %v1691 = vpack.c.b16 %v1231, %v1226
    %v1692 = vpack.c.b16 %v1232, %v1227
    %v1693 = vpack.c.b16 %v1233, %v1228
    %v1694 = vpack.c.b16 %v1239, %v1234
    %v1695 = vpack.c.b16 %v1240, %v1235
    %v1696 = vpack.c.b16 %v1241, %v1236
    %v1697 = vpack.c.b16 %v1242, %v1237
    %v1698 = vpack.c.b16 %v1243, %v1238
    %v1699 = vpack.c.b16 %v1249, %v1244
    %v1700 = vpack.c.b16 %v1250, %v1245
    %v1701 = vpack.c.b16 %v1251, %v1246
    %v1702 = vpack.c.b16 %v1252, %v1247
    %v1703 = vpack.c.b16 %v1253, %v1248
    %v1704 = vpack.c.b16 %v1259, %v1254
    %v1705 = vpack.c.b16 %v1260, %v1255
    %v1706 = vpack.c.b16 %v1261, %v1256
    %v1707 = vpack.c.b16 %v1262, %v1257
    %v1708 = vpack.c.b16 %v1263, %v1258
    %v1709 = vpack.c.b16 %v1269, %v1264
    %v1710 = vpack.c.b16 %v1270, %v1265
    %v1711 = vpack.c.b16 %v1271, %v1266
    %v1712 = vpack.c.b16 %v1272, %v1267
    %v1713 = vpack.c.b16 %v1273, %v1268
    %v1714 = vpack.c.b16 %v1279, %v1274
    %v1715 = vpack.c.b16 %v1280, %v1275
    %v1716 = vpack.c.b16 %v1281, %v1276
    %v1717 = vpack.c.b16 %v1282, %v1277
    %v1718 = vpack.c.b16 %v1283, %v1278
    %v1719 = vpack.c.b16 %v1289, %v1284
    %v1720 = vpack.c.b16 %v1290, %v1285
    %v1721 = vpack.c.b16 %v1291, %v1286
    %v1722 = vpack.c.b16 %v1292, %v1287
    %v1723 = vpack.c.b16 %v1293, %v1288
    %v1724 = vpack.c.b16 %v1299, %v1294
    %v1725 = vpack.c.b16 %v1300, %v1295
    %v1726 = vpack.c.b16 %v1301, %v1296
    %v1727 = vpack.c.b16 %v1302, %v1297
    %v1728 = vpack.c.b16 %v1303, %v1298
    %v1729 = vpack.c.b16 %v1309, %v1304
    %v1730 = vpack.c.b16 %v1310, %v1305
    %v1731 = vpack.c.b16 %v1311, %v1306
    %v1732 = vpack.c.b16 %v1312, %v1307
    %v1733 = vpack.c.b16 %v1313, %v1308
    %v1734 = vpack.c.b16 %v1319, %v1314
    %v1735 = vpack.c.b16 %v1320, %v1315
    %v1736 = vpack.c.b16 %v1321, %v1316
    %v1737 = vpack.c.b16 %v1322, %v1317
    %v1738 = vpack.c.b16 %v1323, %v1318
    %v1739 = vpack.c.b16 %v1329, %v1324
    %v1740 = vpack.c.b16 %v1330, %v1325
    %v1741 = vpack.c.b16 %v1331, %v1326
    %v1742 = vpack.c.b16 %v1332, %v1327
    %v1743 = vpack.c.b16 %v1333, %v1328
    %v1744 = vpack.c.b16 %v1339, %v1334
    %v1745 = vpack.c.b16 %v1340, %v1335
    %v1746 = vpack.c.b16 %v1341, %v1336
    %v1747 = vpack.c.b16 %v1342, %v1337
    %v1748 = vpack.c.b16 %v1343, %v1338
    %v1749 = vpack.c.b16 %v1349, %v1344
    %v1750 = vpack.c.b16 %v1350, %v1345
    %v1751 = vpack.c.b16 %v1351, %v1346
    %v1752 = vpack.c.b16 %v1352, %v1347
    %v1753 = vpack.c.b16 %v1353, %v1348
    %v1754 = vpack.c.b16 %v1359, %v1354
    %v1755 = vpack.c.b16 %v1360, %v1355
    %v1756 = vpack.c.b16 %v1361, %v1356
    %v1757 = vpack.c.b16 %v1362, %v1357
    %v1758 = vpack.c.b16 %v1363, %v1358
    %v1759 = vpack.c.b16 %v1369, %v1364
    %v1760 = vpack.c.b16 %v1370, %v1365
    %v1761 = vpack.c.b16 %v1371, %v1366
    %v1762 = vpack.c.b16 %v1372, %v1367
    %v1763 = vpack.c.b16 %v1373, %v1368
    %v1764 = vpack.c.b16 %v1379, %v1374
    %v1765 = vpack.c.b16 %v1380, %v1375
    %v1766 = vpack.c.b16 %v1381, %v1376
    %v1767 = vpack.c.b16 %v1382, %v1377
    %v1768 = vpack.c.b16 %v1383, %v1378
    %v1769 = vpack.c.b16 %v1389, %v1384
    %v1770 = vpack.c.b16 %v1390, %v1385
    %v1771 = vpack.c.b16 %v1391, %v1386
    %v1772 = vpack.c.b16 %v1392, %v1387
    %v1773 = vpack.c.b16 %v1393, %v1388
    %v1774 = vpack.c.b16 %v1399, %v1394
    %v1775 = vpack.c.b16 %v1400, %v1395
    %v1776 = vpack.c.b16 %v1401, %v1396
    %v1777 = vpack.c.b16 %v1402, %v1397
    %v1778 = vpack.c.b16 %v1403, %v1398
    %v1779 = vpack.c.b16 %v1409, %v1404
    %v1780 = vpack.c.b16 %v1410, %v1405
    %v1781 = vpack.c.b16 %v1411, %v1406
    %v1782 = vpack.c.b16 %v1412, %v1407
    %v1783 = vpack.c.b16 %v1413, %v1408
    %v1784 = vpack.c.b16 %v1419, %v1414
    %v1785 = vpack.c.b16 %v1420, %v1415
    %v1786 = vpack.c.b16 %v1421, %v1416
    %v1787 = vpack.c.b16 %v1422, %v1417
    %v1788 = vpack.c.b16 %v1423, %v1418
    %v1789 = vpack.c.b16 %v1429, %v1424
    %v1790 = vpack.c.b16 %v1430, %v1425
    %v1791 = vpack.c.b16 %v1431, %v1426
    %v1792 = vpack.c.b16 %v1432, %v1427
    %v1793 = vpack.c.b16 %v1433, %v1428
    %v1794 = vpack.c.b16 %v1439, %v1434
    %v1795 = vpack.c.b16 %v1440, %v1435
    %v1796 = vpack.c.b16 %v1441, %v1436
    %v1797 = vpack.c.b16 %v1442, %v1437
    %v1798 = vpack.c.b16 %v1443, %v1438
    %v1799 = vpack.c.b16 %v1449, %v1444
    %v1800 = vpack.c.b16 %v1450, %v1445
    %v1801 = vpack.c.b16 %v1451, %v1446
    %v1802 = vpack.c.b16 %v1452, %v1447
    %v1803 = vpack.c.b16 %v1453, %v1448
    %v1804 = vpack.c.b16 %v1459, %v1454
    %v1805 = vpack.c.b16 %v1460, %v1455
    %v1806 = vpack.c.b16 %v1461, %v1456
    %v1807 = vpack.c.b16 %v1462, %v1457
    %v1808 = vpack.c.b16 %v1463, %v1458
    %v1809 = vpack.c.b16 %v1469, %v1464
    %v1810 = vpack.c.b16 %v1470, %v1465
    %v1811 = vpack.c.b16 %v1471, %v1466
    %v1812 = vpack.c.b16 %v1472, %v1467
    %v1813 = vpack.c.b16 %v1473, %v1468
    %v1814 = vpack.c.b16 %v1479, %v1474
    %v1815 = vpack.c.b16 %v1480, %v1475
    %v1816 = vpack.c.b16 %v1481, %v1476
    %v1817 = vpack.c.b16 %v1482, %v1477
    %v1818 = vpack.c.b16 %v1483, %v1478
    %v1819 = vpack.c.b16 %v1489, %v1484
    %v1820 = vpack.c.b16 %v1490, %v1485
    %v1821 = vpack.c.b16 %v1491, %v1486
    %v1822 = vpack.c.b16 %v1492, %v1487
    %v1823 = vpack.c.b16 %v1493, %v1488
    %v1824 = vpack.c.b16 %v1499, %v1494
    %v1825 = vpack.c.b16 %v1500, %v1495
    %v1826 = vpack.c.b16 %v1501, %v1496
    %v1827 = vpack.c.b16 %v1502, %v1497
    %v1828 = vpack.c.b16 %v1503, %v1498
    %v1829 = vpack.c.b16 %v1509, %v1504
    %v1830 = vpack.c.b16 %v1510, %v1505
    %v1831 = vpack.c.b16 %v1511, %v1506
    %v1832 = vpack.c.b16 %v1512, %v1507
    %v1833 = vpack.c.b16 %v1513, %v1508
    %2154 = vmatprep.subr.bf16.mxu0 %v1515
    %2155 = vmatpush1.bf16.msra.mxu0 %v1514
    %2156 = vmatprep.subr.bf16.mxu0 %v1520
    %2157 = vmatpush1.bf16.msra.mxu0 %v1519
    %2158 = vmatprep.subr.bf16.mxu0 %v1525
    %2159 = vmatpush1.bf16.msra.mxu0 %v1524
    %2160 = vmatprep.subr.bf16.mxu0 %v1530
    %2161 = vmatpush1.bf16.msra.mxu0 %v1529
    %2162 = vmatprep.subr.bf16.mxu0 %v1535
    %2163 = vmatpush1.bf16.msra.mxu0 %v1534
    %2164 = vmatprep.subr.bf16.mxu0 %v1540
    %2165 = vmatpush1.bf16.msra.mxu0 %v1539
    %2166 = vmatprep.subr.bf16.mxu0 %v1545
    %2167 = vmatpush1.bf16.msra.mxu0 %v1544
    %2168 = vmatprep.subr.bf16.mxu0 %v1550
    %2169 = vmatpush1.bf16.msra.mxu0 %v1549
    %2170 = vmatprep.subr.bf16.mxu0 %v1555
    %2171 = vmatpush1.bf16.msra.mxu0 %v1554
    %2172 = vmatprep.subr.bf16.mxu0 %v1560
    %2173 = vmatpush1.bf16.msra.mxu0 %v1559
    %2174 = vmatprep.subr.bf16.mxu0 %v1565
    %2175 = vmatpush1.bf16.msra.mxu0 %v1564
    %2176 = vmatprep.subr.bf16.mxu0 %v1570
    %2177 = vmatpush1.bf16.msra.mxu0 %v1569
    %2178 = vmatprep.subr.bf16.mxu0 %v1575
    %2179 = vmatpush1.bf16.msra.mxu0 %v1574
    %2180 = vmatprep.subr.bf16.mxu0 %v1580
    %2181 = vmatpush1.bf16.msra.mxu0 %v1579
    %2182 = vmatprep.subr.bf16.mxu0 %v1585
    %2183 = vmatpush1.bf16.msra.mxu0 %v1584
    %2184 = vmatprep.subr.bf16.mxu0 %v1590
    %2185 = vmatpush1.bf16.msra.mxu0 %v1589
    %2186 = vmatprep.mubr.bf16.mxu0 %v72
    %2187 = vmatmul.mubr.bf16.gmra.mrb[0].mxu0 %v71
    %v2188 = vpop.f32.mrb[0].mxu0
    %v2189 = vadd.f32 %v468, %v2188
    %v2190 = vpop.f32.mrb[0].mxu0
    %v2191 = vadd.f32 %v472, %v2190
    %v2192 = vpop.f32.mrb[0].mxu0
    %v2193 = vadd.f32 %v468, %v2192
    %v2194 = vpop.f32.mrb[0].mxu0
    %v2195 = vadd.f32 %v472, %v2194
    %2196 = vdwg.mxu0
    %2197 = vmatprep.subr.bf16.mxu0 %v1595
    %2198 = vmatpush1.bf16.msra.mxu0 %v1594
    %2199 = vmatprep.subr.bf16.mxu0 %v1600
    %2200 = vmatpush1.bf16.msra.mxu0 %v1599
    %2201 = vmatprep.subr.bf16.mxu0 %v1605
    %2202 = vmatpush1.bf16.msra.mxu0 %v1604
    %2203 = vmatprep.subr.bf16.mxu0 %v1610
    %2204 = vmatpush1.bf16.msra.mxu0 %v1609
    %2205 = vmatprep.subr.bf16.mxu0 %v1615
    %2206 = vmatpush1.bf16.msra.mxu0 %v1614
    %2207 = vmatprep.subr.bf16.mxu0 %v1620
    %2208 = vmatpush1.bf16.msra.mxu0 %v1619
    %2209 = vmatprep.subr.bf16.mxu0 %v1625
    %2210 = vmatpush1.bf16.msra.mxu0 %v1624
    %2211 = vmatprep.subr.bf16.mxu0 %v1630
    %2212 = vmatpush1.bf16.msra.mxu0 %v1629
    %2213 = vmatprep.subr.bf16.mxu0 %v1635
    %2214 = vmatpush1.bf16.msra.mxu0 %v1634
    %2215 = vmatprep.subr.bf16.mxu0 %v1640
    %2216 = vmatpush1.bf16.msra.mxu0 %v1639
    %2217 = vmatprep.subr.bf16.mxu0 %v1645
    %2218 = vmatpush1.bf16.msra.mxu0 %v1644
    %2219 = vmatprep.subr.bf16.mxu0 %v1650
    %2220 = vmatpush1.bf16.msra.mxu0 %v1649
    %2221 = vmatprep.subr.bf16.mxu0 %v1655
    %2222 = vmatpush1.bf16.msra.mxu0 %v1654
    %2223 = vmatprep.subr.bf16.mxu0 %v1660
    %2224 = vmatpush1.bf16.msra.mxu0 %v1659
    %2225 = vmatprep.subr.bf16.mxu0 %v1665
    %2226 = vmatpush1.bf16.msra.mxu0 %v1664
    %2227 = vmatprep.subr.bf16.mxu0 %v1670
    %2228 = vmatpush1.bf16.msra.mxu0 %v1669
    %2229 = vmatprep.mubr.bf16.mxu0 %v74
    %2230 = vmatmul.mubr.bf16.gmra.mrb[0].mxu0 %v73
    %v2231 = vpop.f32.mrb[0].mxu0
    %v2232 = vadd.f32 %v2189, %v2231
    %v2233 = vpop.f32.mrb[0].mxu0
    %v2234 = vadd.f32 %v2191, %v2233
    %v2235 = vpop.f32.mrb[0].mxu0
    %v2236 = vadd.f32 %v2193, %v2235
    %v2237 = vpop.f32.mrb[0].mxu0
    %v2238 = vadd.f32 %v2195, %v2237
    %2239 = vdwg.mxu0
    %2240 = vmatprep.subr.bf16.mxu0 %v1675
    %2241 = vmatpush1.bf16.msra.mxu0 %v1674
    %2242 = vmatprep.subr.bf16.mxu0 %v1680
    %2243 = vmatpush1.bf16.msra.mxu0 %v1679
    %2244 = vmatprep.subr.bf16.mxu0 %v1685
    %2245 = vmatpush1.bf16.msra.mxu0 %v1684
    %2246 = vmatprep.subr.bf16.mxu0 %v1690
    %2247 = vmatpush1.bf16.msra.mxu0 %v1689
    %2248 = vmatprep.subr.bf16.mxu0 %v1695
    %2249 = vmatpush1.bf16.msra.mxu0 %v1694
    %2250 = vmatprep.subr.bf16.mxu0 %v1700
    %2251 = vmatpush1.bf16.msra.mxu0 %v1699
    %2252 = vmatprep.subr.bf16.mxu0 %v1705
    %2253 = vmatpush1.bf16.msra.mxu0 %v1704
    %2254 = vmatprep.subr.bf16.mxu0 %v1710
    %2255 = vmatpush1.bf16.msra.mxu0 %v1709
    %2256 = vmatprep.subr.bf16.mxu0 %v1715
    %2257 = vmatpush1.bf16.msra.mxu0 %v1714
    %2258 = vmatprep.subr.bf16.mxu0 %v1720
    %2259 = vmatpush1.bf16.msra.mxu0 %v1719
    %2260 = vmatprep.subr.bf16.mxu0 %v1725
    %2261 = vmatpush1.bf16.msra.mxu0 %v1724
    %2262 = vmatprep.subr.bf16.mxu0 %v1730
    %2263 = vmatpush1.bf16.msra.mxu0 %v1729
    %2264 = vmatprep.subr.bf16.mxu0 %v1735
    %2265 = vmatpush1.bf16.msra.mxu0 %v1734
    %2266 = vmatprep.subr.bf16.mxu0 %v1740
    %2267 = vmatpush1.bf16.msra.mxu0 %v1739
    %2268 = vmatprep.subr.bf16.mxu0 %v1745
    %2269 = vmatpush1.bf16.msra.mxu0 %v1744
    %2270 = vmatprep.subr.bf16.mxu0 %v1750
    %2271 = vmatpush1.bf16.msra.mxu0 %v1749
    %2272 = vmatprep.mubr.bf16.mxu0 %v76
    %2273 = vmatmul.mubr.bf16.gmra.mrb[0].mxu0 %v75
    %v2274 = vpop.f32.mrb[0].mxu0
    %v2275 = vadd.f32 %v2232, %v2274
    %v2276 = vpop.f32.mrb[0].mxu0
    %v2277 = vadd.f32 %v2234, %v2276
    %v2278 = vpop.f32.mrb[0].mxu0
    %v2279 = vadd.f32 %v2236, %v2278
    %v2280 = vpop.f32.mrb[0].mxu0
    %v2281 = vadd.f32 %v2238, %v2280
    %2282 = vdwg.mxu0
    %2283 = vmatprep.subr.bf16.mxu0 %v1755
    %2284 = vmatpush1.bf16.msra.mxu0 %v1754
    %2285 = vmatprep.subr.bf16.mxu0 %v1760
    %2286 = vmatpush1.bf16.msra.mxu0 %v1759
    %2287 = vmatprep.subr.bf16.mxu0 %v1765
    %2288 = vmatpush1.bf16.msra.mxu0 %v1764
    %2289 = vmatprep.subr.bf16.mxu0 %v1770
    %2290 = vmatpush1.bf16.msra.mxu0 %v1769
    %2291 = vmatprep.subr.bf16.mxu0 %v1775
    %2292 = vmatpush1.bf16.msra.mxu0 %v1774
    %2293 = vmatprep.subr.bf16.mxu0 %v1780
    %2294 = vmatpush1.bf16.msra.mxu0 %v1779
    %2295 = vmatprep.subr.bf16.mxu0 %v1785
    %2296 = vmatpush1.bf16.msra.mxu0 %v1784
    %2297 = vmatprep.subr.bf16.mxu0 %v1790
    %2298 = vmatpush1.bf16.msra.mxu0 %v1789
    %2299 = vmatprep.subr.bf16.mxu0 %v1795
    %2300 = vmatpush1.bf16.msra.mxu0 %v1794
    %2301 = vmatprep.subr.bf16.mxu0 %v1800
    %2302 = vmatpush1.bf16.msra.mxu0 %v1799
    %2303 = vmatprep.subr.bf16.mxu0 %v1805
    %2304 = vmatpush1.bf16.msra.mxu0 %v1804
    %2305 = vmatprep.subr.bf16.mxu0 %v1810
    %2306 = vmatpush1.bf16.msra.mxu0 %v1809
    %2307 = vmatprep.subr.bf16.mxu0 %v1815
    %2308 = vmatpush1.bf16.msra.mxu0 %v1814
    %2309 = vmatprep.subr.bf16.mxu0 %v1820
    %2310 = vmatpush1.bf16.msra.mxu0 %v1819
    %2311 = vmatprep.subr.bf16.mxu0 %v1825
    %2312 = vmatpush1.bf16.msra.mxu0 %v1824
    %2313 = vmatprep.subr.bf16.mxu0 %v1830
    %2314 = vmatpush1.bf16.msra.mxu0 %v1829
    %2315 = vmatprep.mubr.bf16.mxu0 %v78
    %2316 = vmatmul.mubr.bf16.gmra.mrb[0].mxu0 %v77
    %v2317 = vpop.f32.mrb[0].mxu0
    %v2318 = vadd.f32 %v2275, %v2317
    %v2319 = vpop.f32.mrb[0].mxu0
    %v2320 = vadd.f32 %v2277, %v2319
    %v2321 = vpop.f32.mrb[0].mxu0
    %v2322 = vadd.f32 %v2279, %v2321
    %v2323 = vpop.f32.mrb[0].mxu0
    %v2324 = vadd.f32 %v2281, %v2323
    %2325 = vdwg.mxu0
    %2326 = vmatprep.subr.bf16.mxu0 %v1517
    %2327 = vmatpush1.bf16.msra.mxu0 %v1516
    %2328 = vmatprep.subr.bf16.mxu0 %v1522
    %2329 = vmatpush1.bf16.msra.mxu0 %v1521
    %2330 = vmatprep.subr.bf16.mxu0 %v1527
    %2331 = vmatpush1.bf16.msra.mxu0 %v1526
    %2332 = vmatprep.subr.bf16.mxu0 %v1532
    %2333 = vmatpush1.bf16.msra.mxu0 %v1531
    %2334 = vmatprep.subr.bf16.mxu0 %v1537
    %2335 = vmatpush1.bf16.msra.mxu0 %v1536
    %2336 = vmatprep.subr.bf16.mxu0 %v1542
    %2337 = vmatpush1.bf16.msra.mxu0 %v1541
    %2338 = vmatprep.subr.bf16.mxu0 %v1547
    %2339 = vmatpush1.bf16.msra.mxu0 %v1546
    %2340 = vmatprep.subr.bf16.mxu0 %v1552
    %2341 = vmatpush1.bf16.msra.mxu0 %v1551
    %2342 = vmatprep.subr.bf16.mxu0 %v1557
    %2343 = vmatpush1.bf16.msra.mxu0 %v1556
    %2344 = vmatprep.subr.bf16.mxu0 %v1562
    %2345 = vmatpush1.bf16.msra.mxu0 %v1561
    %2346 = vmatprep.subr.bf16.mxu0 %v1567
    %2347 = vmatpush1.bf16.msra.mxu0 %v1566
    %2348 = vmatprep.subr.bf16.mxu0 %v1572
    %2349 = vmatpush1.bf16.msra.mxu0 %v1571
    %2350 = vmatprep.subr.bf16.mxu0 %v1577
    %2351 = vmatpush1.bf16.msra.mxu0 %v1576
    %2352 = vmatprep.subr.bf16.mxu0 %v1582
    %2353 = vmatpush1.bf16.msra.mxu0 %v1581
    %2354 = vmatprep.subr.bf16.mxu0 %v1587
    %2355 = vmatpush1.bf16.msra.mxu0 %v1586
    %2356 = vmatprep.subr.bf16.mxu0 %v1592
    %2357 = vmatpush1.bf16.msra.mxu0 %v1591
    %2358 = vmatprep.mubr.bf16.mxu0 %v72
    %2359 = vmatmul.mubr.bf16.gmra.mrb[0].mxu0 %v71
    %v2360 = vpop.f32.mrb[0].mxu0
    %v2361 = vadd.f32 %v476, %v2360
    %v2362 = vpop.f32.mrb[0].mxu0
    %v2363 = vadd.f32 %v480, %v2362
    %v2364 = vpop.f32.mrb[0].mxu0
    %v2365 = vadd.f32 %v476, %v2364
    %v2366 = vpop.f32.mrb[0].mxu0
    %v2367 = vadd.f32 %v480, %v2366
    %2368 = vdwg.mxu0
    %2369 = vmatprep.subr.bf16.mxu0 %v1597
    %2370 = vmatpush1.bf16.msra.mxu0 %v1596
    %2371 = vmatprep.subr.bf16.mxu0 %v1602
    %2372 = vmatpush1.bf16.msra.mxu0 %v1601
    %2373 = vmatprep.subr.bf16.mxu0 %v1607
    %2374 = vmatpush1.bf16.msra.mxu0 %v1606
    %2375 = vmatprep.subr.bf16.mxu0 %v1612
    %2376 = vmatpush1.bf16.msra.mxu0 %v1611
    %2377 = vmatprep.subr.bf16.mxu0 %v1617
    %2378 = vmatpush1.bf16.msra.mxu0 %v1616
    %2379 = vmatprep.subr.bf16.mxu0 %v1622
    %2380 = vmatpush1.bf16.msra.mxu0 %v1621
    %2381 = vmatprep.subr.bf16.mxu0 %v1627
    %2382 = vmatpush1.bf16.msra.mxu0 %v1626
    %2383 = vmatprep.subr.bf16.mxu0 %v1632
    %2384 = vmatpush1.bf16.msra.mxu0 %v1631
    %2385 = vmatprep.subr.bf16.mxu0 %v1637
    %2386 = vmatpush1.bf16.msra.mxu0 %v1636
    %2387 = vmatprep.subr.bf16.mxu0 %v1642
    %2388 = vmatpush1.bf16.msra.mxu0 %v1641
    %2389 = vmatprep.subr.bf16.mxu0 %v1647
    %2390 = vmatpush1.bf16.msra.mxu0 %v1646
    %2391 = vmatprep.subr.bf16.mxu0 %v1652
    %2392 = vmatpush1.bf16.msra.mxu0 %v1651
    %2393 = vmatprep.subr.bf16.mxu0 %v1657
    %2394 = vmatpush1.bf16.msra.mxu0 %v1656
    %2395 = vmatprep.subr.bf16.mxu0 %v1662
    %2396 = vmatpush1.bf16.msra.mxu0 %v1661
    %2397 = vmatprep.subr.bf16.mxu0 %v1667
    %2398 = vmatpush1.bf16.msra.mxu0 %v1666
    %2399 = vmatprep.subr.bf16.mxu0 %v1672
    %2400 = vmatpush1.bf16.msra.mxu0 %v1671
    %2401 = vmatprep.mubr.bf16.mxu0 %v74
    %2402 = vmatmul.mubr.bf16.gmra.mrb[0].mxu0 %v73
    %v2403 = vpop.f32.mrb[0].mxu0
    %v2404 = vadd.f32 %v2361, %v2403
    %v2405 = vpop.f32.mrb[0].mxu0
    %v2406 = vadd.f32 %v2363, %v2405
    %v2407 = vpop.f32.mrb[0].mxu0
    %v2408 = vadd.f32 %v2365, %v2407
    %v2409 = vpop.f32.mrb[0].mxu0
    %v2410 = vadd.f32 %v2367, %v2409
    %2411 = vdwg.mxu0
    %2412 = vmatprep.subr.bf16.mxu0 %v1677
    %2413 = vmatpush1.bf16.msra.mxu0 %v1676
    %2414 = vmatprep.subr.bf16.mxu0 %v1682
    %2415 = vmatpush1.bf16.msra.mxu0 %v1681
    %2416 = vmatprep.subr.bf16.mxu0 %v1687
    %2417 = vmatpush1.bf16.msra.mxu0 %v1686
    %2418 = vmatprep.subr.bf16.mxu0 %v1692
    %2419 = vmatpush1.bf16.msra.mxu0 %v1691
    %2420 = vmatprep.subr.bf16.mxu0 %v1697
    %2421 = vmatpush1.bf16.msra.mxu0 %v1696
    %2422 = vmatprep.subr.bf16.mxu0 %v1702
    %2423 = vmatpush1.bf16.msra.mxu0 %v1701
    %2424 = vmatprep.subr.bf16.mxu0 %v1707
    %2425 = vmatpush1.bf16.msra.mxu0 %v1706
    %2426 = vmatprep.subr.bf16.mxu0 %v1712
    %2427 = vmatpush1.bf16.msra.mxu0 %v1711
    %2428 = vmatprep.subr.bf16.mxu0 %v1717
    %2429 = vmatpush1.bf16.msra.mxu0 %v1716
    %2430 = vmatprep.subr.bf16.mxu0 %v1722
    %2431 = vmatpush1.bf16.msra.mxu0 %v1721
    %2432 = vmatprep.subr.bf16.mxu0 %v1727
    %2433 = vmatpush1.bf16.msra.mxu0 %v1726
    %2434 = vmatprep.subr.bf16.mxu0 %v1732
    %2435 = vmatpush1.bf16.msra.mxu0 %v1731
    %2436 = vmatprep.subr.bf16.mxu0 %v1737
    %2437 = vmatpush1.bf16.msra.mxu0 %v1736
    %2438 = vmatprep.subr.bf16.mxu0 %v1742
    %2439 = vmatpush1.bf16.msra.mxu0 %v1741
    %2440 = vmatprep.subr.bf16.mxu0 %v1747
    %2441 = vmatpush1.bf16.msra.mxu0 %v1746
    %2442 = vmatprep.subr.bf16.mxu0 %v1752
    %2443 = vmatpush1.bf16.msra.mxu0 %v1751
    %2444 = vmatprep.mubr.bf16.mxu0 %v76
    %2445 = vmatmul.mubr.bf16.gmra.mrb[0].mxu0 %v75
    %v2446 = vpop.f32.mrb[0].mxu0
    %v2447 = vadd.f32 %v2404, %v2446
    %v2448 = vpop.f32.mrb[0].mxu0
    %v2449 = vadd.f32 %v2406, %v2448
    %v2450 = vpop.f32.mrb[0].mxu0
    %v2451 = vadd.f32 %v2408, %v2450
    %v2452 = vpop.f32.mrb[0].mxu0
    %v2453 = vadd.f32 %v2410, %v2452
    %2454 = vdwg.mxu0
    %2455 = vmatprep.subr.bf16.mxu0 %v1757
    %2456 = vmatpush1.bf16.msra.mxu0 %v1756
    %2457 = vmatprep.subr.bf16.mxu0 %v1762
    %2458 = vmatpush1.bf16.msra.mxu0 %v1761
    %2459 = vmatprep.subr.bf16.mxu0 %v1767
    %2460 = vmatpush1.bf16.msra.mxu0 %v1766
    %2461 = vmatprep.subr.bf16.mxu0 %v1772
    %2462 = vmatpush1.bf16.msra.mxu0 %v1771
    %2463 = vmatprep.subr.bf16.mxu0 %v1777
    %2464 = vmatpush1.bf16.msra.mxu0 %v1776
    %2465 = vmatprep.subr.bf16.mxu0 %v1782
    %2466 = vmatpush1.bf16.msra.mxu0 %v1781
    %2467 = vmatprep.subr.bf16.mxu0 %v1787
    %2468 = vmatpush1.bf16.msra.mxu0 %v1786
    %2469 = vmatprep.subr.bf16.mxu0 %v1792
    %2470 = vmatpush1.bf16.msra.mxu0 %v1791
    %2471 = vmatprep.subr.bf16.mxu0 %v1797
    %2472 = vmatpush1.bf16.msra.mxu0 %v1796
    %2473 = vmatprep.subr.bf16.mxu0 %v1802
    %2474 = vmatpush1.bf16.msra.mxu0 %v1801
    %2475 = vmatprep.subr.bf16.mxu0 %v1807
    %2476 = vmatpush1.bf16.msra.mxu0 %v1806
    %2477 = vmatprep.subr.bf16.mxu0 %v1812
    %2478 = vmatpush1.bf16.msra.mxu0 %v1811
    %2479 = vmatprep.subr.bf16.mxu0 %v1817
    %2480 = vmatpush1.bf16.msra.mxu0 %v1816
    %2481 = vmatprep.subr.bf16.mxu0 %v1822
    %2482 = vmatpush1.bf16.msra.mxu0 %v1821
    %2483 = vmatprep.subr.bf16.mxu0 %v1827
    %2484 = vmatpush1.bf16.msra.mxu0 %v1826
    %2485 = vmatprep.subr.bf16.mxu0 %v1832
    %2486 = vmatpush1.bf16.msra.mxu0 %v1831
    %2487 = vmatprep.mubr.bf16.mxu0 %v78
    %2488 = vmatmul.mubr.bf16.gmra.mrb[0].mxu0 %v77
    %v2489 = vpop.f32.mrb[0].mxu0
    %v2490 = vadd.f32 %v2447, %v2489
    %v2491 = vpop.f32.mrb[0].mxu0
    %v2492 = vadd.f32 %v2449, %v2491
    %v2493 = vpop.f32.mrb[0].mxu0
    %v2494 = vadd.f32 %v2451, %v2493
    %v2495 = vpop.f32.mrb[0].mxu0
    %v2496 = vadd.f32 %v2453, %v2495
    %2497 = vdwg.mxu0
    %2498 = vmatprep.subr.bf16.mxu0 0
    %2499 = vmatpush1.bf16.msra.mxu0 %v1518
    %2500 = vmatprep.subr.bf16.mxu0 0
    %2501 = vmatpush1.bf16.msra.mxu0 %v1523
    %2502 = vmatprep.subr.bf16.mxu0 0
    %2503 = vmatpush1.bf16.msra.mxu0 %v1528
    %2504 = vmatprep.subr.bf16.mxu0 0
    %2505 = vmatpush1.bf16.msra.mxu0 %v1533
    %2506 = vmatprep.subr.bf16.mxu0 0
    %2507 = vmatpush1.bf16.msra.mxu0 %v1538
    %2508 = vmatprep.subr.bf16.mxu0 0
    %2509 = vmatpush1.bf16.msra.mxu0 %v1543
    %2510 = vmatprep.subr.bf16.mxu0 0
    %2511 = vmatpush1.bf16.msra.mxu0 %v1548
    %2512 = vmatprep.subr.bf16.mxu0 0
    %2513 = vmatpush1.bf16.msra.mxu0 %v1553
    %2514 = vmatprep.subr.bf16.mxu0 0
    %2515 = vmatpush1.bf16.msra.mxu0 %v1558
    %2516 = vmatprep.subr.bf16.mxu0 0
    %2517 = vmatpush1.bf16.msra.mxu0 %v1563
    %2518 = vmatprep.subr.bf16.mxu0 0
    %2519 = vmatpush1.bf16.msra.mxu0 %v1568
    %2520 = vmatprep.subr.bf16.mxu0 0
    %2521 = vmatpush1.bf16.msra.mxu0 %v1573
    %2522 = vmatprep.subr.bf16.mxu0 0
    %2523 = vmatpush1.bf16.msra.mxu0 %v1578
    %2524 = vmatprep.subr.bf16.mxu0 0
    %2525 = vmatpush1.bf16.msra.mxu0 %v1583
    %2526 = vmatprep.subr.bf16.mxu0 0
    %2527 = vmatpush1.bf16.msra.mxu0 %v1588
    %2528 = vmatprep.subr.bf16.mxu0 0
    %2529 = vmatpush1.bf16.msra.mxu0 %v1593
    %2530 = vmatprep.mubr.bf16.mxu0 %v72
    %2531 = vmatmul.mubr.bf16.gmra.mrb[0].mxu0 %v71
    %v2532 = vpop.f32.mrb[0].mxu0
    %v2533 = vadd.f32 %v484, %v2532
    %v2534 = vpop.f32.mrb[0].mxu0
    %v2535 = vpop.f32.mrb[0].mxu0
    %v2536 = vadd.f32 %v484, %v2535
    %v2537 = vpop.f32.mrb[0].mxu0
    %2538 = vdwg.mxu0
    %2539 = vmatprep.subr.bf16.mxu0 0
    %2540 = vmatpush1.bf16.msra.mxu0 %v1598
    %2541 = vmatprep.subr.bf16.mxu0 0
    %2542 = vmatpush1.bf16.msra.mxu0 %v1603
    %2543 = vmatprep.subr.bf16.mxu0 0
    %2544 = vmatpush1.bf16.msra.mxu0 %v1608
    %2545 = vmatprep.subr.bf16.mxu0 0
    %2546 = vmatpush1.bf16.msra.mxu0 %v1613
    %2547 = vmatprep.subr.bf16.mxu0 0
    %2548 = vmatpush1.bf16.msra.mxu0 %v1618
    %2549 = vmatprep.subr.bf16.mxu0 0
    %2550 = vmatpush1.bf16.msra.mxu0 %v1623
    %2551 = vmatprep.subr.bf16.mxu0 0
    %2552 = vmatpush1.bf16.msra.mxu0 %v1628
    %2553 = vmatprep.subr.bf16.mxu0 0
    %2554 = vmatpush1.bf16.msra.mxu0 %v1633
    %2555 = vmatprep.subr.bf16.mxu0 0
    %2556 = vmatpush1.bf16.msra.mxu0 %v1638
    %2557 = vmatprep.subr.bf16.mxu0 0
    %2558 = vmatpush1.bf16.msra.mxu0 %v1643
    %2559 = vmatprep.subr.bf16.mxu0 0
    %2560 = vmatpush1.bf16.msra.mxu0 %v1648
    %2561 = vmatprep.subr.bf16.mxu0 0
    %2562 = vmatpush1.bf16.msra.mxu0 %v1653
    %2563 = vmatprep.subr.bf16.mxu0 0
    %2564 = vmatpush1.bf16.msra.mxu0 %v1658
    %2565 = vmatprep.subr.bf16.mxu0 0
    %2566 = vmatpush1.bf16.msra.mxu0 %v1663
    %2567 = vmatprep.subr.bf16.mxu0 0
    %2568 = vmatpush1.bf16.msra.mxu0 %v1668
    %2569 = vmatprep.subr.bf16.mxu0 0
    %2570 = vmatpush1.bf16.msra.mxu0 %v1673
    %2571 = vmatprep.mubr.bf16.mxu0 %v74
    %2572 = vmatmul.mubr.bf16.gmra.mrb[0].mxu0 %v73
    %v2573 = vpop.f32.mrb[0].mxu0
    %v2574 = vadd.f32 %v2533, %v2573
    %v2575 = vpop.f32.mrb[0].mxu0
    %v2576 = vpop.f32.mrb[0].mxu0
    %v2577 = vadd.f32 %v2536, %v2576
    %v2578 = vpop.f32.mrb[0].mxu0
    %2579 = vdwg.mxu0
    %2580 = vmatprep.subr.bf16.mxu0 0
    %2581 = vmatpush1.bf16.msra.mxu0 %v1678
    %2582 = vmatprep.subr.bf16.mxu0 0
    %2583 = vmatpush1.bf16.msra.mxu0 %v1683
    %2584 = vmatprep.subr.bf16.mxu0 0
    %2585 = vmatpush1.bf16.msra.mxu0 %v1688
    %2586 = vmatprep.subr.bf16.mxu0 0
    %2587 = vmatpush1.bf16.msra.mxu0 %v1693
    %2588 = vmatprep.subr.bf16.mxu0 0
    %2589 = vmatpush1.bf16.msra.mxu0 %v1698
    %2590 = vmatprep.subr.bf16.mxu0 0
    %2591 = vmatpush1.bf16.msra.mxu0 %v1703
    %2592 = vmatprep.subr.bf16.mxu0 0
    %2593 = vmatpush1.bf16.msra.mxu0 %v1708
    %2594 = vmatprep.subr.bf16.mxu0 0
    %2595 = vmatpush1.bf16.msra.mxu0 %v1713
    %2596 = vmatprep.subr.bf16.mxu0 0
    %2597 = vmatpush1.bf16.msra.mxu0 %v1718
    %2598 = vmatprep.subr.bf16.mxu0 0
    %2599 = vmatpush1.bf16.msra.mxu0 %v1723
    %2600 = vmatprep.subr.bf16.mxu0 0
    %2601 = vmatpush1.bf16.msra.mxu0 %v1728
    %2602 = vmatprep.subr.bf16.mxu0 0
    %2603 = vmatpush1.bf16.msra.mxu0 %v1733
    %2604 = vmatprep.subr.bf16.mxu0 0
    %2605 = vmatpush1.bf16.msra.mxu0 %v1738
    %2606 = vmatprep.subr.bf16.mxu0 0
    %2607 = vmatpush1.bf16.msra.mxu0 %v1743
    %2608 = vmatprep.subr.bf16.mxu0 0
    %2609 = vmatpush1.bf16.msra.mxu0 %v1748
    %2610 = vmatprep.subr.bf16.mxu0 0
    %2611 = vmatpush1.bf16.msra.mxu0 %v1753
    %2612 = vmatprep.mubr.bf16.mxu0 %v76
    %2613 = vmatmul.mubr.bf16.gmra.mrb[0].mxu0 %v75
    %v2614 = vpop.f32.mrb[0].mxu0
    %v2615 = vadd.f32 %v2574, %v2614
    %v2616 = vpop.f32.mrb[0].mxu0
    %v2617 = vpop.f32.mrb[0].mxu0
    %v2618 = vadd.f32 %v2577, %v2617
    %v2619 = vpop.f32.mrb[0].mxu0
    %2620 = vdwg.mxu0
    %2621 = vmatprep.subr.bf16.mxu0 0
    %2622 = vmatpush1.bf16.msra.mxu0 %v1758
    %2623 = vmatprep.subr.bf16.mxu0 0
    %2624 = vmatpush1.bf16.msra.mxu0 %v1763
    %2625 = vmatprep.subr.bf16.mxu0 0
    %2626 = vmatpush1.bf16.msra.mxu0 %v1768
    %2627 = vmatprep.subr.bf16.mxu0 0
    %2628 = vmatpush1.bf16.msra.mxu0 %v1773
    %2629 = vmatprep.subr.bf16.mxu0 0
    %2630 = vmatpush1.bf16.msra.mxu0 %v1778
    %2631 = vmatprep.subr.bf16.mxu0 0
    %2632 = vmatpush1.bf16.msra.mxu0 %v1783
    %2633 = vmatprep.subr.bf16.mxu0 0
    %2634 = vmatpush1.bf16.msra.mxu0 %v1788
    %2635 = vmatprep.subr.bf16.mxu0 0
    %2636 = vmatpush1.bf16.msra.mxu0 %v1793
    %2637 = vmatprep.subr.bf16.mxu0 0
    %2638 = vmatpush1.bf16.msra.mxu0 %v1798
    %2639 = vmatprep.subr.bf16.mxu0 0
    %2640 = vmatpush1.bf16.msra.mxu0 %v1803
    %2641 = vmatprep.subr.bf16.mxu0 0
    %2642 = vmatpush1.bf16.msra.mxu0 %v1808
    %2643 = vmatprep.subr.bf16.mxu0 0
    %2644 = vmatpush1.bf16.msra.mxu0 %v1813
    %2645 = vmatprep.subr.bf16.mxu0 0
    %2646 = vmatpush1.bf16.msra.mxu0 %v1818
    %2647 = vmatprep.subr.bf16.mxu0 0
    %2648 = vmatpush1.bf16.msra.mxu0 %v1823
    %2649 = vmatprep.subr.bf16.mxu0 0
    %2650 = vmatpush1.bf16.msra.mxu0 %v1828
    %2651 = vmatprep.subr.bf16.mxu0 0
    %2652 = vmatpush1.bf16.msra.mxu0 %v1833
    %2653 = vmatprep.mubr.bf16.mxu0 %v78
    %2654 = vmatmul.mubr.bf16.gmra.mrb[0].mxu0 %v77
    %v2655 = vpop.f32.mrb[0].mxu0
    %v2656 = vadd.f32 %v2615, %v2655
    %v2657 = vpop.f32.mrb[0].mxu0
    %v2658 = vpop.f32.mrb[0].mxu0
    %v2659 = vadd.f32 %v2618, %v2658
    %v2660 = vpop.f32.mrb[0].mxu0
    %2661 = vdwg.mxu0
    %2662 = vst [vmem:[#allocation8] sm:$0xff] %v2318
    %2663 = vst [vmem:[#allocation8 + $0x8] sm:$0xff] %v2320
    %2664 = vst [vmem:[#allocation8 + $0x10] sm:$0xff] %v2490
    %2665 = vst [vmem:[#allocation8 + $0x18] sm:$0xff] %v2492
    %vm2666 = vcmask 719872
    %2667 = vst.msk [vmem:[#allocation8 + $0x20] sm:$0xff] %vm2666, %v2656
    %2668 = vst [vmem:[#allocation8 + $0x28] sm:$0xff] %v2322
    %2669 = vst [vmem:[#allocation8 + $0x30] sm:$0xff] %v2324
    %2670 = vst [vmem:[#allocation8 + $0x38] sm:$0xff] %v2494
    %2671 = vst [vmem:[#allocation8 + $0x40] sm:$0xff] %v2496
    %2672 = vst.msk [vmem:[#allocation8 + $0x48] sm:$0xff] %vm2666, %v2659
    // Predicated region
    $region26: #{tpu_custom_call.1} parent=1 // pred_check
      _
    $region27: #{tpu_custom_call.1} parent=1 // pred_check_branch
      %2674 = sbr.rel (0) target = $region29
    $region28: #{tpu_custom_call.1} parent=1 // pred_region
      %s2676 = ssub.s32 1280, 1280
      %2677 = vsyncadd [#allocation4], %s2676
      %s2678 = sshll.u32 [#allocation8], 4
      %s2679 = int_to_ptr.vmem [resolvable:$true] %s2678
      %2684 = dma.vmem_to_hbm [thread:$0]  %s2679, 1280, %s3, [#allocation4], 640, 640, 40
    $region29: #{tpu_custom_call.1} parent=1 // pred_fallthru
      _
    // Predicated region
    $region30: #{tpu_custom_call.1} parent=1 // pred_check
      _
    $region31: #{tpu_custom_call.1} parent=1 // pred_check_branch
      %2686 = sbr.rel (0) target = $region33
    $region32: #{tpu_custom_call.1} parent=1 // pred_region
      %2687 = dma.done [#allocation4], 1280
    $region33: #{tpu_custom_call.1} parent=1 // pred_fallthru
      _
    %2688 = vsyncpa [#allocation3], 1
    %2689 = vsyncpa [#allocation6], 1
    %2690 = vsyncpa [#allocation4], 1

</llo_original>
